<compile_context>
chip_gen: v7x
topology: tpu7x:2x2x1
jax: 0.10.0
libtpu: 0.0.40
codegen_flags: <defaults>
</compile_context>

<pallas_src>
import functools

import jax
import jax.numpy as jnp
from jax import lax
from jax.experimental import pallas as pl
from jax.experimental.pallas import tpu as pltpu


def _round_up(x: int, m: int) -> int:
    return (x + m - 1) // m * m


def _vmem_tile_bytes(rows: int, cols: int, itemsize: int) -> int:
    """Approximate VMEM footprint of a (rows, cols) tile with native (sublane, lane) padding."""
    sublane = {4: 8, 2: 16, 1: 32}[itemsize]
    return _round_up(max(rows, 1), sublane) * _round_up(max(cols, 1), 128) * itemsize


# ----------------------------------------------------------------------------- fused kernel
def _fused_conv_quant_stats_kernel(x_ref, w_ref, fb_ref, mask_ref, q_ref, stats_ref, *,
                                   tap_offsets, mi, q_inv_fl, qlb, qub, unsigned):
    """Per-image fused conv (implicit im2col) + MulQuant + BatchNorm partial sums.

    x_ref:     (1, Hp*Wp, Cin)   bf16   zero-padded image, spatially flattened
    w_ref:     (KH*KW, Cin, Cp)  bf16   per-tap weights (MulQuant scale folded in)
    fb_ref:    (1, Cp)           f32    conv_bias*q_scale + q_bias
    mask_ref:  (Mi, 1)           f32    1.0 for rows mapping to a real output position
    q_ref:     (1, Mi, Cp)       bf16   quantized conv output (pre zero-point; see wrapper)
    stats_ref: (1, 2, Cp)        f32    per-image [sum, sum-of-squares] over valid rows
    """
    # Implicit GEMM: one MXU matmul per filter tap on a statically shifted row-window of the
    # flattened image; bf16 operands, f32 accumulation.
    acc = None
    for t, off in enumerate(tap_offsets):
        lhs = x_ref[0, off:off + mi, :]                                   # (Mi, Cin) bf16
        part = jnp.dot(lhs, w_ref[t], preferred_element_type=jnp.float32)
        acc = part if acc is None else acc + part

    # MulQuant: scalar scale folded into the weights, conv_bias*scale + q_bias folded into fb.
    z = acc + fb_ref[...]
    if unsigned:
        z = jnp.maximum(z, 0.0)              # F.relu for unsigned quant
    z = jnp.round(z * q_inv_fl)              # reference's second .round() is a no-op -> dropped
    z = jnp.clip(z, qlb, qub)
    # NOTE: the reference subtracts a scalar zero-point here; that constant shift cancels exactly
    #       in training-mode BatchNorm (batch-mean subtraction), so it is dropped entirely.
    q_ref[...] = z[None].astype(q_ref.dtype)

    # BN partial sums over valid rows only (garbage rows = implicit-GEMM wrap-around columns).
    # Single unmasked full-block store.
    zm = z * mask_ref[...]
    s = jnp.sum(zm, axis=0, keepdims=True)                                # (1, Cp)
    ss = jnp.sum(zm * zm, axis=0, keepdims=True)                          # (1, Cp)
    stats_ref[...] = jnp.concatenate([s, ss], axis=0)[None]               # (1, 2, Cp)


# ----------------------------------------------------------------------------- wrapper
def qconv_bn_relu(x_nchw, weight, conv_bias, gamma, beta, *,
                  stride=1, padding=0, abit=8, unsigned=False,
                  q_scale=1.0, q_bias=0.0, zp=0.0, fl=0.0, eps=1e-5):
    """Fused forward of QConvBNReLU.  `zp` is accepted for interface parity but cancels in BN."""
    del zp
    N, Cin, H, W = x_nchw.shape
    Cout, Cin_w, KH, KW = weight.shape
    assert Cin == Cin_w, "grouped conv not supported"   # TODO(synk): groups / dilation > 1
    assert stride >= 1

    if not unsigned:
        qlb, qub = -2.0 ** (abit - 1), 2.0 ** (abit - 1) - 1
    else:
        qlb, qub = 0.0, 2.0 ** abit - 1

    Hp, Wp = H + 2 * padding, W + 2 * padding
    Ho = (Hp - KH) // stride + 1
    Wo = (Wp - KW) // stride + 1
    Hd, Wd = Hp - KH + 1, Wp - KW + 1          # dense (stride-1) output extent
    Mi = (Hd - 1) * Wp + Wd                    # implicit-GEMM rows per image
    M = N * Ho * Wo                            # valid elements per channel (BN count)
    Cp = _round_up(Cout, 128)                  # lane-dense output / weight padding
    # TODO(synk): pad/tile Cout (and large Cin) in multiples of 256 on v6e/v7x once shapes are
    #             large enough to be compute-bound (2x256^2 MXU).

    # Quantized values are integers in [qlb, qub]; exactly representable in bf16 for abit <= 8.
    q_dtype = jnp.bfloat16 if abit <= 8 else jnp.float32
    q_itemsize = jnp.dtype(q_dtype).itemsize

    # ---------- wrapper-side prep (all ~1x input bytes; no im2col patches materialised) ----------
    x_pad = jnp.pad(x_nchw.transpose(0, 2, 3, 1),
                    ((0, 0), (padding, padding), (padding, padding), (0, 0)))
    x_flat = x_pad.reshape(N, Hp * Wp, Cin).astype(jnp.bfloat16)

    # Per-tap weights (Cin, Cp) with MulQuant's scalar scale folded in; taps ordered (kh, kw).
    w_taps = jnp.transpose(weight.astype(jnp.float32), (2, 3, 1, 0)) * q_scale    # (KH,KW,Cin,Cout)
    w_p = jnp.zeros((KH * KW, Cin, Cp), jnp.float32)
    w_p = w_p.at[:, :, :Cout].set(w_taps.reshape(KH * KW, Cin, Cout)).astype(jnp.bfloat16)
    fb = conv_bias.astype(jnp.float32) * q_scale + q_bias
    fb_p = jnp.zeros((1, Cp), jnp.float32).at[0, :Cout].set(fb)

    # Row-validity mask: rows whose (hi, wi) is a real (strided) window origin.
    p = jnp.arange(Mi, dtype=jnp.int32)
    hi, wi = p // Wp, p % Wp
    valid = wi < Wd
    if stride > 1:
        # TODO(synk): stride > 1 computes the dense conv and subsamples (~stride^2 wasted MXU
        #             work); a strided-slice variant would remove the waste.
        valid = valid & (hi % stride == 0) & (wi % stride == 0)
    mask = valid.astype(jnp.float32)[:, None]                                      # (Mi, 1)

    tap_offsets = tuple(kh * Wp + kw for kh in range(KH) for kw in range(KW))

    # ---------- generation-aware VMEM budget ----------
    try:
        vmem_cap = int(pltpu.get_tpu_info().vmem_capacity_bytes)
    except Exception:
        vmem_cap = 64 * 2 ** 20                       # conservative v7x default
    need = (2 * _vmem_tile_bytes(Hp * Wp, Cin, 2)          # image block, double-buffered
            + 2 * _vmem_tile_bytes(Mi, Cp, q_itemsize)     # q output block, double-buffered
            + 2 * KH * KW * _vmem_tile_bytes(Cin, Cp, 2)   # weights (invariant, 2 bufs by default)
            + 3 * _vmem_tile_bytes(Mi, Cp, 4)              # f32 accumulator / temporaries
            + _vmem_tile_bytes(Mi, 1, 4) + 4 * _vmem_tile_bytes(8, Cp, 4))
    vmem_limit = int(min(vmem_cap * 3 // 4, max(32 * 2 ** 20, need * 2)))
    # TODO(synk): if `need` ever exceeds the cap (very large feature maps), tile Ho with a manual
    #             halo DMA (memory_space=pl.ANY + make_async_copy) instead of one image per step.
    # TODO(synk): weights/bias could use pipeline_mode=pl.Buffered(1) to drop their second buffer;
    #             left at the default here since they are tiny relative to the budget.

    kernel = functools.partial(
        _fused_conv_quant_stats_kernel,
        tap_offsets=tap_offsets, mi=Mi,
        q_inv_fl=float(2.0 ** (-fl)),
        qlb=float(qlb), qub=float(qub), unsigned=bool(unsigned))

    q_flat, stats = pl.pallas_call(
        kernel,
        out_shape=(jax.ShapeDtypeStruct((N, Mi, Cp), q_dtype),
                   jax.ShapeDtypeStruct((N, 2, Cp), jnp.float32)),
        grid=(N,),
        in_specs=[pl.BlockSpec((1, Hp * Wp, Cin), lambda n: (n, 0, 0)),
                  pl.BlockSpec((KH * KW, Cin, Cp), lambda n: (0, 0, 0)),
                  pl.BlockSpec((1, Cp), lambda n: (0, 0)),
                  pl.BlockSpec((Mi, 1), lambda n: (0, 0))],
        out_specs=(pl.BlockSpec((1, Mi, Cp), lambda n: (n, 0, 0)),
                   pl.BlockSpec((1, 2, Cp), lambda n: (n, 0, 0))),
        compiler_params=pltpu.CompilerParams(
            dimension_semantics=("parallel",),
            vmem_limit_bytes=vmem_limit),
        cost_estimate=pl.CostEstimate(
            flops=2 * N * Mi * Cin * KH * KW * Cp,
            transcendentals=0,
            bytes_accessed=(N * Hp * Wp * Cin * 2 + KH * KW * Cin * Cp * 2
                            + N * Mi * Cp * q_itemsize + N * 2 * Cp * 4 + Mi * 4)),
    )(x_flat, w_p, fb_p, mask)

    # ---------- BatchNorm (training-mode batch statistics) folded into the XLA epilogue ----------
    # TODO(synk): running_mean/running_var are neither updated nor returned (fused forward only).
    mean = jnp.sum(stats[:, 0, :Cout], axis=0) / M
    var = jnp.maximum(jnp.sum(stats[:, 1, :Cout], axis=0) / M - mean * mean, 0.0)
    # NOTE: E[x^2]-E[x]^2 with f32 tree-reduced sums is fine for 8-bit integer activations at
    #       these sizes; switch to centered per-tile sums if abit or M grow enough to matter.
    rstd = lax.rsqrt(var + eps)
    bn_scale = gamma.astype(jnp.float32) * rstd
    bn_shift = beta.astype(jnp.float32) - mean * bn_scale

    # BN FMA + row unpacking + NHWC->NCHW fuse into one XLA copy (no second pallas_call).
    y = q_flat[:, :, :Cout].astype(jnp.float32) * bn_scale + bn_shift              # (N, Mi, Cout)
    y = jnp.pad(y, ((0, 0), (0, Hd * Wp - Mi), (0, 0))).reshape(N, Hd, Wp, Cout)
    y = y[:, :(Ho - 1) * stride + 1:stride, :(Wo - 1) * stride + 1:stride, :]      # (N, Ho, Wo, Cout)
    # self.relu = nn.Identity()  -> no-op
    return y.transpose(0, 3, 1, 2)


if __name__ == "__main__":
    key = jax.random.PRNGKey(0)
    k_x, k_w, k_b, k_g, k_beta = jax.random.split(key, 5)

    N, Cin, H, W = 2, 4, 16, 16
    Cout, K = 8, 3

    x = jax.random.normal(k_x, (N, Cin, H, W), dtype=jnp.float32)
    weight = 0.1 * jax.random.normal(k_w, (Cout, Cin, K, K), dtype=jnp.float32)
    conv_bias = 0.05 * jax.random.normal(k_b, (Cout,), dtype=jnp.float32)
    gamma = 1.0 + 0.1 * jax.random.normal(k_g, (Cout,), dtype=jnp.float32)
    beta = 0.1 * jax.random.normal(k_beta, (Cout,), dtype=jnp.float32)

    fn = jax.jit(functools.partial(
        qconv_bn_relu,
        stride=1, padding=1, abit=8, unsigned=False,
        q_scale=0.1, q_bias=0.5, zp=2.0, fl=0.0, eps=1e-5))

    out = fn(x, weight, conv_bias, gamma, beta)
    jax.block_until_ready(out)
    assert out.shape == (N, Cout, H, W)
    assert bool(jnp.isfinite(out).all())
    print("KERNEL_OK")
</pallas_src>

<mosaic_0001>
module attributes {stable_mosaic.version = 11 : i64} {
  func.func @_fused_conv_quant_stats_kernel(%arg0: i32, %arg1: memref<1x324x4xbf16, #tpu.memory_space<vmem>>, %arg2: memref<9x4x128xbf16, #tpu.memory_space<vmem>>, %arg3: memref<1x128xf32, #tpu.memory_space<vmem>>, %arg4: memref<286x1xf32, #tpu.memory_space<vmem>>, %arg5: memref<1x286x128xbf16, #tpu.memory_space<vmem>>, %arg6: memref<1x2x128xf32, #tpu.memory_space<vmem>>) attributes {dimension_semantics = [#tpu.dimension_semantics<parallel>], iteration_bounds = array<i64: 2>, scalar_prefetch = 0 : i64, scratch_operands = 0 : i64, tpu.core_type = #tpu.core_type<tc>, window_params = [{transform_indices = @transform_0, window_bounds = array<i64: 1, 324, 4>}, {pipeline_mode = #tpu.pipeline_mode<synchronous>, transform_indices = @transform_1, window_bounds = array<i64: 9, 4, 128>}, {pipeline_mode = #tpu.pipeline_mode<synchronous>, transform_indices = @transform_2, window_bounds = array<i64: 1, 128>}, {pipeline_mode = #tpu.pipeline_mode<synchronous>, transform_indices = @transform_3, window_bounds = array<i64: 286, 1>}, {transform_indices = @transform_4, window_bounds = array<i64: 1, 286, 128>}, {transform_indices = @transform_5, window_bounds = array<i64: 1, 2, 128>}]} {
    %c0 = arith.constant 0 : index
    %c0_0 = arith.constant 0 : index
    %c0_1 = arith.constant 0 : index
    %0 = vector.load %arg1[%c0, %c0_0, %c0_1] : memref<1x324x4xbf16, #tpu.memory_space<vmem>>, vector<1x286x4xbf16>
    %1 = vector.shape_cast %0 : vector<1x286x4xbf16> to vector<286x4xbf16>
    %c0_2 = arith.constant 0 : index
    %c0_3 = arith.constant 0 : index
    %c0_4 = arith.constant 0 : index
    %2 = vector.load %arg2[%c0_2, %c0_3, %c0_4] : memref<9x4x128xbf16, #tpu.memory_space<vmem>>, vector<1x4x128xbf16>
    %3 = vector.shape_cast %2 : vector<1x4x128xbf16> to vector<4x128xbf16>
    %cst = arith.constant dense<0.000000e+00> : vector<286x128xf32>
    %4 = tpu.matmul %1, %3, %cst {dimension_numbers = #tpu.dot_dimension_numbers<[1], [0], [0], [1], [0, 0, 1, 1], [], []>} : vector<286x4xbf16>, vector<4x128xbf16>, vector<286x128xf32> -> vector<286x128xf32>
    %c0_5 = arith.constant 0 : index
    %c1 = arith.constant 1 : index
    %c0_6 = arith.constant 0 : index
    %5 = vector.load %arg1[%c0_5, %c1, %c0_6] : memref<1x324x4xbf16, #tpu.memory_space<vmem>>, vector<1x286x4xbf16>
    %6 = vector.shape_cast %5 : vector<1x286x4xbf16> to vector<286x4xbf16>
    %c1_7 = arith.constant 1 : index
    %c0_8 = arith.constant 0 : index
    %c0_9 = arith.constant 0 : index
    %7 = vector.load %arg2[%c1_7, %c0_8, %c0_9] : memref<9x4x128xbf16, #tpu.memory_space<vmem>>, vector<1x4x128xbf16>
    %8 = vector.shape_cast %7 : vector<1x4x128xbf16> to vector<4x128xbf16>
    %cst_10 = arith.constant dense<0.000000e+00> : vector<286x128xf32>
    %9 = tpu.matmul %6, %8, %cst_10 {dimension_numbers = #tpu.dot_dimension_numbers<[1], [0], [0], [1], [0, 0, 1, 1], [], []>} : vector<286x4xbf16>, vector<4x128xbf16>, vector<286x128xf32> -> vector<286x128xf32>
    %10 = arith.addf %4, %9 : vector<286x128xf32>
    %c0_11 = arith.constant 0 : index
    %c2 = arith.constant 2 : index
    %c0_12 = arith.constant 0 : index
    %11 = vector.load %arg1[%c0_11, %c2, %c0_12] : memref<1x324x4xbf16, #tpu.memory_space<vmem>>, vector<1x286x4xbf16>
    %12 = vector.shape_cast %11 : vector<1x286x4xbf16> to vector<286x4xbf16>
    %c2_13 = arith.constant 2 : index
    %c0_14 = arith.constant 0 : index
    %c0_15 = arith.constant 0 : index
    %13 = vector.load %arg2[%c2_13, %c0_14, %c0_15] : memref<9x4x128xbf16, #tpu.memory_space<vmem>>, vector<1x4x128xbf16>
    %14 = vector.shape_cast %13 : vector<1x4x128xbf16> to vector<4x128xbf16>
    %cst_16 = arith.constant dense<0.000000e+00> : vector<286x128xf32>
    %15 = tpu.matmul %12, %14, %cst_16 {dimension_numbers = #tpu.dot_dimension_numbers<[1], [0], [0], [1], [0, 0, 1, 1], [], []>} : vector<286x4xbf16>, vector<4x128xbf16>, vector<286x128xf32> -> vector<286x128xf32>
    %16 = arith.addf %10, %15 : vector<286x128xf32>
    %c0_17 = arith.constant 0 : index
    %c18 = arith.constant 18 : index
    %c0_18 = arith.constant 0 : index
    %17 = vector.load %arg1[%c0_17, %c18, %c0_18] : memref<1x324x4xbf16, #tpu.memory_space<vmem>>, vector<1x286x4xbf16>
    %18 = vector.shape_cast %17 : vector<1x286x4xbf16> to vector<286x4xbf16>
    %c3 = arith.constant 3 : index
    %c0_19 = arith.constant 0 : index
    %c0_20 = arith.constant 0 : index
    %19 = vector.load %arg2[%c3, %c0_19, %c0_20] : memref<9x4x128xbf16, #tpu.memory_space<vmem>>, vector<1x4x128xbf16>
    %20 = vector.shape_cast %19 : vector<1x4x128xbf16> to vector<4x128xbf16>
    %cst_21 = arith.constant dense<0.000000e+00> : vector<286x128xf32>
    %21 = tpu.matmul %18, %20, %cst_21 {dimension_numbers = #tpu.dot_dimension_numbers<[1], [0], [0], [1], [0, 0, 1, 1], [], []>} : vector<286x4xbf16>, vector<4x128xbf16>, vector<286x128xf32> -> vector<286x128xf32>
    %22 = arith.addf %16, %21 : vector<286x128xf32>
    %c0_22 = arith.constant 0 : index
    %c19 = arith.constant 19 : index
    %c0_23 = arith.constant 0 : index
    %23 = vector.load %arg1[%c0_22, %c19, %c0_23] : memref<1x324x4xbf16, #tpu.memory_space<vmem>>, vector<1x286x4xbf16>
    %24 = vector.shape_cast %23 : vector<1x286x4xbf16> to vector<286x4xbf16>
    %c4 = arith.constant 4 : index
    %c0_24 = arith.constant 0 : index
    %c0_25 = arith.constant 0 : index
    %25 = vector.load %arg2[%c4, %c0_24, %c0_25] : memref<9x4x128xbf16, #tpu.memory_space<vmem>>, vector<1x4x128xbf16>
    %26 = vector.shape_cast %25 : vector<1x4x128xbf16> to vector<4x128xbf16>
    %cst_26 = arith.constant dense<0.000000e+00> : vector<286x128xf32>
    %27 = tpu.matmul %24, %26, %cst_26 {dimension_numbers = #tpu.dot_dimension_numbers<[1], [0], [0], [1], [0, 0, 1, 1], [], []>} : vector<286x4xbf16>, vector<4x128xbf16>, vector<286x128xf32> -> vector<286x128xf32>
    %28 = arith.addf %22, %27 : vector<286x128xf32>
    %c0_27 = arith.constant 0 : index
    %c20 = arith.constant 20 : index
    %c0_28 = arith.constant 0 : index
    %29 = vector.load %arg1[%c0_27, %c20, %c0_28] : memref<1x324x4xbf16, #tpu.memory_space<vmem>>, vector<1x286x4xbf16>
    %30 = vector.shape_cast %29 : vector<1x286x4xbf16> to vector<286x4xbf16>
    %c5 = arith.constant 5 : index
    %c0_29 = arith.constant 0 : index
    %c0_30 = arith.constant 0 : index
    %31 = vector.load %arg2[%c5, %c0_29, %c0_30] : memref<9x4x128xbf16, #tpu.memory_space<vmem>>, vector<1x4x128xbf16>
    %32 = vector.shape_cast %31 : vector<1x4x128xbf16> to vector<4x128xbf16>
    %cst_31 = arith.constant dense<0.000000e+00> : vector<286x128xf32>
    %33 = tpu.matmul %30, %32, %cst_31 {dimension_numbers = #tpu.dot_dimension_numbers<[1], [0], [0], [1], [0, 0, 1, 1], [], []>} : vector<286x4xbf16>, vector<4x128xbf16>, vector<286x128xf32> -> vector<286x128xf32>
    %34 = arith.addf %28, %33 : vector<286x128xf32>
    %c0_32 = arith.constant 0 : index
    %c36 = arith.constant 36 : index
    %c0_33 = arith.constant 0 : index
    %35 = vector.load %arg1[%c0_32, %c36, %c0_33] : memref<1x324x4xbf16, #tpu.memory_space<vmem>>, vector<1x286x4xbf16>
    %36 = vector.shape_cast %35 : vector<1x286x4xbf16> to vector<286x4xbf16>
    %c6 = arith.constant 6 : index
    %c0_34 = arith.constant 0 : index
    %c0_35 = arith.constant 0 : index
    %37 = vector.load %arg2[%c6, %c0_34, %c0_35] : memref<9x4x128xbf16, #tpu.memory_space<vmem>>, vector<1x4x128xbf16>
    %38 = vector.shape_cast %37 : vector<1x4x128xbf16> to vector<4x128xbf16>
    %cst_36 = arith.constant dense<0.000000e+00> : vector<286x128xf32>
    %39 = tpu.matmul %36, %38, %cst_36 {dimension_numbers = #tpu.dot_dimension_numbers<[1], [0], [0], [1], [0, 0, 1, 1], [], []>} : vector<286x4xbf16>, vector<4x128xbf16>, vector<286x128xf32> -> vector<286x128xf32>
    %40 = arith.addf %34, %39 : vector<286x128xf32>
    %c0_37 = arith.constant 0 : index
    %c37 = arith.constant 37 : index
    %c0_38 = arith.constant 0 : index
    %41 = vector.load %arg1[%c0_37, %c37, %c0_38] : memref<1x324x4xbf16, #tpu.memory_space<vmem>>, vector<1x286x4xbf16>
    %42 = vector.shape_cast %41 : vector<1x286x4xbf16> to vector<286x4xbf16>
    %c7 = arith.constant 7 : index
    %c0_39 = arith.constant 0 : index
    %c0_40 = arith.constant 0 : index
    %43 = vector.load %arg2[%c7, %c0_39, %c0_40] : memref<9x4x128xbf16, #tpu.memory_space<vmem>>, vector<1x4x128xbf16>
    %44 = vector.shape_cast %43 : vector<1x4x128xbf16> to vector<4x128xbf16>
    %cst_41 = arith.constant dense<0.000000e+00> : vector<286x128xf32>
    %45 = tpu.matmul %42, %44, %cst_41 {dimension_numbers = #tpu.dot_dimension_numbers<[1], [0], [0], [1], [0, 0, 1, 1], [], []>} : vector<286x4xbf16>, vector<4x128xbf16>, vector<286x128xf32> -> vector<286x128xf32>
    %46 = arith.addf %40, %45 : vector<286x128xf32>
    %c0_42 = arith.constant 0 : index
    %c38 = arith.constant 38 : index
    %c0_43 = arith.constant 0 : index
    %47 = vector.load %arg1[%c0_42, %c38, %c0_43] : memref<1x324x4xbf16, #tpu.memory_space<vmem>>, vector<1x286x4xbf16>
    %48 = vector.shape_cast %47 : vector<1x286x4xbf16> to vector<286x4xbf16>
    %c8 = arith.constant 8 : index
    %c0_44 = arith.constant 0 : index
    %c0_45 = arith.constant 0 : index
    %49 = vector.load %arg2[%c8, %c0_44, %c0_45] : memref<9x4x128xbf16, #tpu.memory_space<vmem>>, vector<1x4x128xbf16>
    %50 = vector.shape_cast %49 : vector<1x4x128xbf16> to vector<4x128xbf16>
    %cst_46 = arith.constant dense<0.000000e+00> : vector<286x128xf32>
    %51 = tpu.matmul %48, %50, %cst_46 {dimension_numbers = #tpu.dot_dimension_numbers<[1], [0], [0], [1], [0, 0, 1, 1], [], []>} : vector<286x4xbf16>, vector<4x128xbf16>, vector<286x128xf32> -> vector<286x128xf32>
    %52 = arith.addf %46, %51 : vector<286x128xf32>
    %c0_47 = arith.constant 0 : index
    %c0_48 = arith.constant 0 : index
    %53 = vector.load %arg3[%c0_47, %c0_48] : memref<1x128xf32, #tpu.memory_space<vmem>>, vector<1x128xf32>
    %54 = vector.broadcast %53 : vector<1x128xf32> to vector<286x128xf32>
    %55 = arith.addf %52, %54 : vector<286x128xf32>
    %cst_49 = arith.constant 1.000000e+00 : f32
    %56 = vector.broadcast %cst_49 : f32 to vector<286x128xf32>
    %57 = arith.mulf %55, %56 : vector<286x128xf32>
    %58 = math.roundeven %57 : vector<286x128xf32>
    %cst_50 = arith.constant -1.280000e+02 : f32
    %cst_51 = arith.constant 1.270000e+02 : f32
    %59 = vector.broadcast %cst_50 : f32 to vector<286x128xf32>
    %60 = arith.maximumf %59, %58 : vector<286x128xf32>
    %61 = vector.broadcast %cst_51 : f32 to vector<286x128xf32>
    %62 = arith.minimumf %61, %60 : vector<286x128xf32>
    %63 = vector.shape_cast %62 : vector<286x128xf32> to vector<1x286x128xf32>
    %64 = arith.truncf %63 : vector<1x286x128xf32> to vector<1x286x128xbf16>
    %c0_52 = arith.constant 0 : index
    %c0_53 = arith.constant 0 : index
    %c0_54 = arith.constant 0 : index
    %65 = vector.load %arg5[%c0_52, %c0_53, %c0_54] : memref<1x286x128xbf16, #tpu.memory_space<vmem>>, vector<1x286x128xbf16>
    tpu.vector_store %arg5[%c0_52, %c0_53, %c0_54], %64 {strides = array<i32>} : memref<1x286x128xbf16, #tpu.memory_space<vmem>>, vector<1x286x128xbf16>,
    %c0_55 = arith.constant 0 : index
    %c0_56 = arith.constant 0 : index
    %66 = vector.load %arg4[%c0_55, %c0_56] : memref<286x1xf32, #tpu.memory_space<vmem>>, vector<286x1xf32>
    %67 = vector.broadcast %66 : vector<286x1xf32> to vector<286x128xf32>
    %68 = arith.mulf %62, %67 : vector<286x128xf32>
    %cst_57 = arith.constant dense<0.000000e+00> : vector<128xf32>
    %69 = vector.multi_reduction <add>, %68, %cst_57 [0] : vector<286x128xf32> to vector<128xf32>
    %70 = vector.shape_cast %69 : vector<128xf32> to vector<1x128xf32>
    %71 = arith.mulf %68, %68 : vector<286x128xf32>
    %cst_58 = arith.constant dense<0.000000e+00> : vector<128xf32>
    %72 = vector.multi_reduction <add>, %71, %cst_58 [0] : vector<286x128xf32> to vector<128xf32>
    %73 = vector.shape_cast %72 : vector<128xf32> to vector<1x128xf32>
    %74 = tpu.concatenate %70, %73 in 0 : vector<1x128xf32>, vector<1x128xf32> -> vector<2x128xf32>
    %75 = vector.shape_cast %74 : vector<2x128xf32> to vector<1x2x128xf32>
    %c0_59 = arith.constant 0 : index
    %c0_60 = arith.constant 0 : index
    %c0_61 = arith.constant 0 : index
    %76 = vector.load %arg6[%c0_59, %c0_60, %c0_61] : memref<1x2x128xf32, #tpu.memory_space<vmem>>, vector<1x2x128xf32>
    tpu.vector_store %arg6[%c0_59, %c0_60, %c0_61], %75 {strides = array<i32>} : memref<1x2x128xf32, #tpu.memory_space<vmem>>, vector<1x2x128xf32>,
    return
  }
  func.func @transform_0(%arg0: i32) -> (i32, i32, i32) {
    %c0_i32 = arith.constant 0 : i32
    %c0_i32_0 = arith.constant 0 : i32
    %c0_i32_1 = arith.constant 0 : i32
    return %arg0, %c0_i32, %c0_i32_0 : i32, i32, i32
  }
  func.func @transform_1(%arg0: i32) -> (i32, i32, i32) {
    %c0_i32 = arith.constant 0 : i32
    %c0_i32_0 = arith.constant 0 : i32
    %c0_i32_1 = arith.constant 0 : i32
    %c0_i32_2 = arith.constant 0 : i32
    return %c0_i32, %c0_i32_0, %c0_i32_1 : i32, i32, i32
  }
  func.func @transform_2(%arg0: i32) -> (i32, i32) {
    %c0_i32 = arith.constant 0 : i32
    %c0_i32_0 = arith.constant 0 : i32
    %c0_i32_1 = arith.constant 0 : i32
    return %c0_i32, %c0_i32_0 : i32, i32
  }
  func.func @transform_3(%arg0: i32) -> (i32, i32) {
    %c0_i32 = arith.constant 0 : i32
    %c0_i32_0 = arith.constant 0 : i32
    %c0_i32_1 = arith.constant 0 : i32
    return %c0_i32, %c0_i32_0 : i32, i32
  }
  func.func @transform_4(%arg0: i32) -> (i32, i32, i32) {
    %c0_i32 = arith.constant 0 : i32
    %c0_i32_0 = arith.constant 0 : i32
    %c0_i32_1 = arith.constant 0 : i32
    return %arg0, %c0_i32, %c0_i32_0 : i32, i32, i32
  }
  func.func @transform_5(%arg0: i32) -> (i32, i32, i32) {
    %c0_i32 = arith.constant 0 : i32
    %c0_i32_0 = arith.constant 0 : i32
    %c0_i32_1 = arith.constant 0 : i32
    return %arg0, %c0_i32, %c0_i32_0 : i32, i32, i32
  }
}

</mosaic_0001>

<llo_original>
// kernel: qconv_bn_relu.1
$region0: #{qconv_bn_relu.1}
  #allocation0 [shape = 'u32[]', space=smem, size = 0x4, offset = 0x4, fixed_abs, tag = 'smem constant byte address 0x4 - core index']
  #allocation1 [shape = 'u32[144,128]{1,0:T(1,128)}', space=vmem, size = 0x12000, scoped, tag = 'internal scratch']
  %s0 = inlined_call_operand.vmem [shape: bf16[2,324,4], index: 0, kind: input, shape index: {}]
  %s1 = inlined_call_operand.vmem [shape: bf16[9,4,128], index: 1, kind: input, shape index: {}]
  %s2 = inlined_call_operand.vmem [shape: f32[1,128], index: 2, kind: input, shape index: {}]
  %s3 = inlined_call_operand.vmem [shape: f32[286,1], index: 3, kind: input, shape index: {}]
  %s4 = inlined_call_operand.vmem [shape: bf16[2,286,128], index: 4, kind: output, shape index: {0}]
  %s5 = inlined_call_operand.vmem [shape: f32[2,2,128], index: 5, kind: output, shape index: {1}]
  %6 = xla_tuple %s4, %s5
  %s7 = sld [smem:[#allocation0]]
  $region57: #{qconv_bn_relu.1} parent=0
    _
  %s9 = ssub.s32 1, %s7
  %s10 = scalar_select 0, %s9, %s7
  loop: start=0, step=1, limit=4
  $region2: #{qconv_bn_relu.1} parent=0 // loop_pre_header
    _
  $region3: #{qconv_bn_relu.1} parent=0 // loop_header
    %s12 = sphi 0, %s16
    %p13 = scmp.ge.s32.totalorder %s12, 4
    %s22 = sphi 0, %s24
    %s25 = sphi 0, %s22
    %s26 = sphi 0, %s25
    %s42 = sphi 0, %s26
    %s46 = sphi 0, %s46
    %s48 = sphi 0, %s46
    %s49 = sphi 0, %s48
    %s63 = sphi 0, %s49
    %s67 = sphi 0, %s67
    %s69 = sphi 0, %s67
    %s70 = sphi 0, %s69
    %s84 = sphi 0, %s70
    %s88 = sphi 0, %s88
    %s90 = sphi 0, %s88
    %s91 = sphi 0, %s90
    %s105 = sphi 0, %s91
    %s111 = sphi 0, %s113
    %s114 = sphi 0, %s111
    %s115 = sphi 0, %s114
    %s131 = sphi 0, %s115
    %s137 = sphi 0, %s139
    %s140 = sphi 0, %s137
    %s141 = sphi 0, %s140
    %s157 = sphi 0, %s141
  $region4: #{qconv_bn_relu.1} parent=0 // loop_header_branch
    %15 = sbr.rel (%p13) target = $region8
  $region5: #{qconv_bn_relu.1} parent=0 // loop_body
    %s17 = ssub.s32 %s12, 1
    %s18 = ssub.s32 %s12, 2
    %s19 = sadd.s32 %s12, 1
    %s20 = ssub.s32 %s12, %s19
    %p21 = scmp.eq.s32.totalorder %s20, 0
    %s23 = sadd.s32 %s22, 1
    %s24 = scalar_select %p21, %s22, %s23
    %p27 = pneg %p21
    %p28 = scmp.eq.s32.totalorder %s12, 1
    %p29 = por %p27, %p28
    %p30 = scmp.ne.s32.totalorder %s22, %s25
    %p31 = scmp.eq.s32.totalorder %s12, 0
    %p32 = por %p30, %p31
    %p33 = scmp.ne.s32.totalorder %s22, %s25
    %p34 = scmp.eq.s32.totalorder %s17, 1
    %p35 = por %p33, %p34
    %p36 = scmp.ne.s32.totalorder %s25, %s26
    %p37 = scmp.eq.s32.totalorder %s17, 0
    %p38 = por %p36, %p37
    %p39 = scmp.ne.s32.totalorder %s25, %s26
    %p40 = scmp.eq.s32.totalorder %s18, 1
    %p41 = por %p39, %p40
    %p43 = scmp.ne.s32.totalorder %s26, %s42
    %p44 = scmp.eq.s32.totalorder %s18, 0
    %p45 = por %p43, %p44
    %s47 = sadd.s32 %s46, 1
    %p50 = scmp.eq.s32.totalorder %s12, 1
    %p51 = scmp.ne.s32.totalorder %s46, %s48
    %p52 = scmp.eq.s32.totalorder %s12, 0
    %p53 = por %p51, %p52
    %p54 = scmp.ne.s32.totalorder %s46, %s48
    %p55 = scmp.eq.s32.totalorder %s17, 1
    %p56 = por %p54, %p55
    %p57 = scmp.ne.s32.totalorder %s48, %s49
    %p58 = scmp.eq.s32.totalorder %s17, 0
    %p59 = por %p57, %p58
    %p60 = scmp.ne.s32.totalorder %s48, %s49
    %p61 = scmp.eq.s32.totalorder %s18, 1
    %p62 = por %p60, %p61
    %p64 = scmp.ne.s32.totalorder %s49, %s63
    %p65 = scmp.eq.s32.totalorder %s18, 0
    %p66 = por %p64, %p65
    %s68 = sadd.s32 %s67, 1
    %p71 = scmp.eq.s32.totalorder %s12, 1
    %p72 = scmp.ne.s32.totalorder %s67, %s69
    %p73 = scmp.eq.s32.totalorder %s12, 0
    %p74 = por %p72, %p73
    %p75 = scmp.ne.s32.totalorder %s67, %s69
    %p76 = scmp.eq.s32.totalorder %s17, 1
    %p77 = por %p75, %p76
    %p78 = scmp.ne.s32.totalorder %s69, %s70
    %p79 = scmp.eq.s32.totalorder %s17, 0
    %p80 = por %p78, %p79
    %p81 = scmp.ne.s32.totalorder %s69, %s70
    %p82 = scmp.eq.s32.totalorder %s18, 1
    %p83 = por %p81, %p82
    %p85 = scmp.ne.s32.totalorder %s70, %s84
    %p86 = scmp.eq.s32.totalorder %s18, 0
    %p87 = por %p85, %p86
    %s89 = sadd.s32 %s88, 1
    %p92 = scmp.eq.s32.totalorder %s12, 1
    %p93 = scmp.ne.s32.totalorder %s88, %s90
    %p94 = scmp.eq.s32.totalorder %s12, 0
    %p95 = por %p93, %p94
    %p96 = scmp.ne.s32.totalorder %s88, %s90
    %p97 = scmp.eq.s32.totalorder %s17, 1
    %p98 = por %p96, %p97
    %p99 = scmp.ne.s32.totalorder %s90, %s91
    %p100 = scmp.eq.s32.totalorder %s17, 0
    %p101 = por %p99, %p100
    %p102 = scmp.ne.s32.totalorder %s90, %s91
    %p103 = scmp.eq.s32.totalorder %s18, 1
    %p104 = por %p102, %p103
    %p106 = scmp.ne.s32.totalorder %s91, %s105
    %p107 = scmp.eq.s32.totalorder %s18, 0
    %p108 = por %p106, %p107
    %s109 = ssub.s32 %s12, %s19
    %p110 = scmp.eq.s32.totalorder %s109, 0
    %s112 = sadd.s32 %s111, 1
    %s113 = scalar_select %p110, %s111, %s112
    %p116 = pneg %p110
    %p117 = scmp.eq.s32.totalorder %s12, 1
    %p118 = por %p116, %p117
    %p119 = scmp.ne.s32.totalorder %s111, %s114
    %p120 = scmp.eq.s32.totalorder %s12, 0
    %p121 = por %p119, %p120
    %p122 = scmp.ne.s32.totalorder %s111, %s114
    %p123 = scmp.eq.s32.totalorder %s17, 1
    %p124 = por %p122, %p123
    %p125 = scmp.ne.s32.totalorder %s114, %s115
    %p126 = scmp.eq.s32.totalorder %s17, 0
    %p127 = por %p125, %p126
    %p128 = scmp.ne.s32.totalorder %s114, %s115
    %p129 = scmp.eq.s32.totalorder %s18, 1
    %p130 = por %p128, %p129
    %p132 = scmp.ne.s32.totalorder %s115, %s131
    %p133 = scmp.eq.s32.totalorder %s18, 0
    %p134 = por %p132, %p133
    %s135 = ssub.s32 %s12, %s19
    %p136 = scmp.eq.s32.totalorder %s135, 0
    %s138 = sadd.s32 %s137, 1
    %s139 = scalar_select %p136, %s137, %s138
    %p142 = pneg %p136
    %p143 = scmp.eq.s32.totalorder %s12, 1
    %p144 = por %p142, %p143
    %p145 = scmp.ne.s32.totalorder %s137, %s140
    %p146 = scmp.eq.s32.totalorder %s12, 0
    %p147 = por %p145, %p146
    %p148 = scmp.ne.s32.totalorder %s137, %s140
    %p149 = scmp.eq.s32.totalorder %s17, 1
    %p150 = por %p148, %p149
    %p151 = scmp.ne.s32.totalorder %s140, %s141
    %p152 = scmp.eq.s32.totalorder %s17, 0
    %p153 = por %p151, %p152
    %p154 = scmp.ne.s32.totalorder %s140, %s141
    %p155 = scmp.eq.s32.totalorder %s18, 1
    %p156 = por %p154, %p155
    %p158 = scmp.ne.s32.totalorder %s141, %s157
    %p159 = scmp.eq.s32.totalorder %s18, 0
    %p160 = por %p158, %p159
    %p161 = scmp.le.s32.totalorder 1, %s12
    %p162 = scmp.lt.s32.totalorder %s12, 3
    %p163 = pnand %p161, %p162
    %p164 = pneg %p163
    // Predicated region
    $region9: #{qconv_bn_relu.1} parent=5 // pred_check
      _
    $region10: #{qconv_bn_relu.1} parent=5 // pred_check_branch
      %166 = sbr.rel (%p163) target = $region12
    $region11: #{qconv_bn_relu.1} parent=5 // pred_region
      %s167 = ssub.s32 %s12, 1
      // Predicated region
      $region13: #{qconv_bn_relu.1} parent=11 // pred_check
        %p168 = pneg %p59
      $region14: #{qconv_bn_relu.1} parent=11 // pred_check_branch
        %170 = sbr.rel (%p168) target = $region16
      $region15: #{qconv_bn_relu.1} parent=11 // pred_region
        _
      $region16: #{qconv_bn_relu.1} parent=11 // pred_fallthru
        _
      // Predicated region
      $region17: #{qconv_bn_relu.1} parent=11 // pred_check
        %p171 = pneg %p80
      $region18: #{qconv_bn_relu.1} parent=11 // pred_check_branch
        %173 = sbr.rel (%p171) target = $region20
      $region19: #{qconv_bn_relu.1} parent=11 // pred_region
        _
      $region20: #{qconv_bn_relu.1} parent=11 // pred_fallthru
        _
      // Predicated region
      $region21: #{qconv_bn_relu.1} parent=11 // pred_check
        %p174 = pneg %p101
      $region22: #{qconv_bn_relu.1} parent=11 // pred_check_branch
        %176 = sbr.rel (%p174) target = $region24
      $region23: #{qconv_bn_relu.1} parent=11 // pred_region
        _
      $region24: #{qconv_bn_relu.1} parent=11 // pred_fallthru
        _
    $region12: #{qconv_bn_relu.1} parent=5 // pred_fallthru
      _
    %p177 = scmp.lt.s32.totalorder %s12, 2
    // Predicated region
    $region25: #{qconv_bn_relu.1} parent=5 // pred_check
      %p178 = pneg %p177
    $region26: #{qconv_bn_relu.1} parent=5 // pred_check_branch
      %180 = sbr.rel (%p178) target = $region28
    $region27: #{qconv_bn_relu.1} parent=5 // pred_region
      // Predicated region
      $region29: #{qconv_bn_relu.1} parent=27 // pred_check
        %p181 = pneg %p32
      $region30: #{qconv_bn_relu.1} parent=27 // pred_check_branch
        %183 = sbr.rel (%p181) target = $region32
      $region31: #{qconv_bn_relu.1} parent=27 // pred_region
        %p184 = scmp.lt.s32.totalorder %s12, 1
        %s185 = scalar_select %p184, %s12, 1
        %s186 = smul.addr %s185, 41
        %s187 = smul.addr %s186, 4
        %s188 = scalar_lea.vmem %s0, %s187
      $region32: #{qconv_bn_relu.1} parent=27 // pred_fallthru
        _
    $region28: #{qconv_bn_relu.1} parent=5 // pred_fallthru
      _
    %p189 = scmp.le.s32.totalorder 1, %s12
    %p190 = scmp.lt.s32.totalorder %s12, 3
    %p191 = pnand %p189, %p190
    %p192 = pneg %p191
    // Predicated region
    $region33: #{qconv_bn_relu.1} parent=5 // pred_check
      _
    $region34: #{qconv_bn_relu.1} parent=5 // pred_check_branch
      %194 = sbr.rel (%p191) target = $region36
    $region35: #{qconv_bn_relu.1} parent=5 // pred_region
      %s195 = ssub.s32 %s12, 1
      %p196 = scmp.lt.s32.totalorder %s17, 1
      %s197 = scalar_select %p196, %s17, 1
      %s198 = smul.addr %s197, 41
      %s199 = smul.addr %s198, 4
      %s200 = scalar_lea.vmem %s0, %s199
      %p201 = pneg %p38
      %p202 = pneg %p35
      %p203 = pneg %p59
      %p204 = pneg %p56
      %p205 = pneg %p80
      %p206 = pneg %p77
      %p207 = pneg %p101
      %p208 = pneg %p98
      %p209 = pneg %p127
      %p210 = pneg %p124
      %p211 = scmp.lt.s32.totalorder %s17, 1
      %s212 = scalar_select %p211, %s17, 1
      %s213 = smul.addr %s212, 36
      %s214 = smul.addr %s213, 4
      %s215 = scalar_lea.vmem %s4, %s214
      %p216 = pneg %p153
      %p217 = pneg %p150
      %p218 = scmp.lt.s32.totalorder %s17, 1
      %s219 = scalar_select %p218, %s17, 1
      %s220 = smul.addr %s219, 2
      %s221 = scalar_lea.vmem %s5, %s220
      %p222 = scmp.lt.s32.totalorder %s17, 1
      %s223 = scalar_select %p222, %s17, 1
      %s224 = smul.addr %s223, 41
      %s225 = smul.addr %s224, 4
      %s226 = scalar_lea.vmem %s0, %s225
      %p227 = scmp.lt.s32.totalorder %s17, 1
      %s228 = scalar_select %p227, %s17, 1
      %s229 = smul.addr %s228, 36
      %s230 = smul.addr %s229, 4
      %s231 = scalar_lea.vmem %s4, %s230
      %p232 = scmp.lt.s32.totalorder %s17, 1
      %s233 = scalar_select %p232, %s17, 1
      %s234 = smul.addr %s233, 2
      %s235 = scalar_lea.vmem %s5, %s234
      %v237 = vld [vmem:[%s226] sm:$0xf]
      %v238 = vld [vmem:[%s226 + $0x4] sm:$0xf]
      %v239 = vld [vmem:[%s226 + $0x8] sm:$0xf]
      %v240 = vld [vmem:[%s226 + $0xc] sm:$0xf]
      %v241 = vld [vmem:[%s226 + $0x10] sm:$0xf]
      %v242 = vld [vmem:[%s226 + $0x14] sm:$0xf]
      %v243 = vld [vmem:[%s226 + $0x18] sm:$0xf]
      %v244 = vld [vmem:[%s226 + $0x1c] sm:$0xf]
      %v245 = vld [vmem:[%s226 + $0x20] sm:$0xf]
      %v246 = vld [vmem:[%s226 + $0x24] sm:$0xf]
      %v247 = vld [vmem:[%s226 + $0x28] sm:$0xf]
      %v248 = vld [vmem:[%s226 + $0x2c] sm:$0xf]
      %v249 = vld [vmem:[%s226 + $0x30] sm:$0xf]
      %v250 = vld [vmem:[%s226 + $0x34] sm:$0xf]
      %v251 = vld [vmem:[%s226 + $0x38] sm:$0xf]
      %v252 = vld [vmem:[%s226 + $0x3c] sm:$0xf]
      %v253 = vld [vmem:[%s226 + $0x40] sm:$0xf]
      %v254 = vld [vmem:[%s226 + $0x44] sm:$0xf]
      %v255 = vld [vmem:[%s226 + $0x48] sm:$0xf]
      %v256 = vld [vmem:[%s226 + $0x4c] sm:$0xf]
      %v257 = vld [vmem:[%s226 + $0x50] sm:$0xf]
      %v258 = vld [vmem:[%s226 + $0x54] sm:$0xf]
      %v259 = vld [vmem:[%s226 + $0x58] sm:$0xf]
      %v260 = vld [vmem:[%s226 + $0x5c] sm:$0xf]
      %v261 = vld [vmem:[%s226 + $0x60] sm:$0xf]
      %v262 = vld [vmem:[%s226 + $0x64] sm:$0xf]
      %v263 = vld [vmem:[%s226 + $0x68] sm:$0xf]
      %v264 = vld [vmem:[%s226 + $0x6c] sm:$0xf]
      %v265 = vld [vmem:[%s226 + $0x70] sm:$0xf]
      %v266 = vld [vmem:[%s226 + $0x74] sm:$0xf]
      %v267 = vld [vmem:[%s226 + $0x78] sm:$0xf]
      %v268 = vld [vmem:[%s226 + $0x7c] sm:$0xf]
      %v269 = vld [vmem:[%s226 + $0x80] sm:$0xf]
      %v270 = vld [vmem:[%s226 + $0x84] sm:$0xf]
      %v271 = vld [vmem:[%s226 + $0x88] sm:$0xf]
      %v272 = vld [vmem:[%s226 + $0x8c] sm:$0x7]
      %v273 = vld [vmem:[%s1] sm:$0x3]
      %v274 = vld [vmem:[%s226 + $0x8c] sm:$0xf]
      %s275 = scalar_lea.vmem %s1, 2
      %v276 = vld [vmem:[%s275] sm:$0x3]
      %v313 = vunpack.c.l.b16 %v237
      %v314 = vunpack.c.l.b16 %v238
      %v315 = vunpack.c.l.b16 %v239
      %v316 = vunpack.c.l.b16 %v240
      %v317 = vunpack.c.l.b16 %v241
      %v318 = vunpack.c.l.b16 %v242
      %v319 = vunpack.c.l.b16 %v243
      %v320 = vunpack.c.l.b16 %v244
      %v321 = vunpack.c.l.b16 %v245
      %v322 = vunpack.c.l.b16 %v246
      %v323 = vunpack.c.l.b16 %v247
      %v324 = vunpack.c.l.b16 %v248
      %v325 = vunpack.c.l.b16 %v249
      %v326 = vunpack.c.l.b16 %v250
      %v327 = vunpack.c.l.b16 %v251
      %v328 = vunpack.c.l.b16 %v252
      %v329 = vunpack.c.l.b16 %v253
      %v330 = vunpack.c.l.b16 %v254
      %v331 = vunpack.c.l.b16 %v255
      %v332 = vunpack.c.l.b16 %v256
      %v333 = vunpack.c.l.b16 %v257
      %v334 = vunpack.c.l.b16 %v258
      %v335 = vunpack.c.l.b16 %v259
      %v336 = vunpack.c.l.b16 %v260
      %v337 = vunpack.c.l.b16 %v261
      %v338 = vunpack.c.l.b16 %v262
      %v339 = vunpack.c.l.b16 %v263
      %v340 = vunpack.c.l.b16 %v264
      %v341 = vunpack.c.l.b16 %v265
      %v342 = vunpack.c.l.b16 %v266
      %v343 = vunpack.c.l.b16 %v267
      %v344 = vunpack.c.l.b16 %v268
      %v345 = vunpack.c.l.b16 %v269
      %v346 = vunpack.c.l.b16 %v270
      %v347 = vunpack.c.l.b16 %v271
      %v348 = vunpack.c.l.b16 %v274
      %v349 = vpack.c.b16 %v314, %v313
      %v350 = vpack.c.b16 %v316, %v315
      %v351 = vpack.c.b16 %v318, %v317
      %v352 = vpack.c.b16 %v320, %v319
      %v353 = vpack.c.b16 %v322, %v321
      %v354 = vpack.c.b16 %v324, %v323
      %v355 = vpack.c.b16 %v326, %v325
      %v356 = vpack.c.b16 %v328, %v327
      %v357 = vpack.c.b16 %v330, %v329
      %v358 = vpack.c.b16 %v332, %v331
      %v359 = vpack.c.b16 %v334, %v333
      %v360 = vpack.c.b16 %v336, %v335
      %v361 = vpack.c.b16 %v338, %v337
      %v362 = vpack.c.b16 %v340, %v339
      %v363 = vpack.c.b16 %v342, %v341
      %v364 = vpack.c.b16 %v344, %v343
      %v365 = vpack.c.b16 %v346, %v345
      %v366 = vpack.c.b16 %v348, %v347
      %vm367 = vsmask.f32 7424
      %v369 = vshrl.u32 %v349, 16
      %v371 = vshll.u32 %v349, 16
      %v373 = vrot.slane %v371, 1
      %v374 = vor.u32 %v369, %v373
      %v376 = vshll.u32 %v350, 16
      %v378 = vrot.slane %v376, 1
      %v379 = vsel %vm367, %v374, %v378
      %v380 = vshrl.u32 %v350, 16
      %v382 = vor.u32 %v380, %v378
      %v384 = vshll.u32 %v351, 16
      %v386 = vrot.slane %v384, 1
      %v387 = vsel %vm367, %v382, %v386
      %v388 = vshrl.u32 %v351, 16
      %v390 = vor.u32 %v388, %v386
      %v392 = vshll.u32 %v352, 16
      %v394 = vrot.slane %v392, 1
      %v395 = vsel %vm367, %v390, %v394
      %v396 = vshrl.u32 %v352, 16
      %v398 = vor.u32 %v396, %v394
      %v400 = vshll.u32 %v353, 16
      %v402 = vrot.slane %v400, 1
      %v403 = vsel %vm367, %v398, %v402
      %v404 = vshrl.u32 %v353, 16
      %v406 = vor.u32 %v404, %v402
      %v408 = vshll.u32 %v354, 16
      %v410 = vrot.slane %v408, 1
      %v411 = vsel %vm367, %v406, %v410
      %v412 = vshrl.u32 %v354, 16
      %v414 = vor.u32 %v412, %v410
      %v416 = vshll.u32 %v355, 16
      %v418 = vrot.slane %v416, 1
      %v419 = vsel %vm367, %v414, %v418
      %v420 = vshrl.u32 %v355, 16
      %v422 = vor.u32 %v420, %v418
      %v424 = vshll.u32 %v356, 16
      %v426 = vrot.slane %v424, 1
      %v427 = vsel %vm367, %v422, %v426
      %v428 = vshrl.u32 %v356, 16
      %v430 = vor.u32 %v428, %v426
      %v432 = vshll.u32 %v357, 16
      %v434 = vrot.slane %v432, 1
      %v435 = vsel %vm367, %v430, %v434
      %v436 = vshrl.u32 %v357, 16
      %v438 = vor.u32 %v436, %v434
      %v440 = vshll.u32 %v358, 16
      %v442 = vrot.slane %v440, 1
      %v443 = vsel %vm367, %v438, %v442
      %v444 = vshrl.u32 %v358, 16
      %v446 = vor.u32 %v444, %v442
      %v448 = vshll.u32 %v359, 16
      %v450 = vrot.slane %v448, 1
      %v451 = vsel %vm367, %v446, %v450
      %v452 = vshrl.u32 %v359, 16
      %v454 = vor.u32 %v452, %v450
      %v456 = vshll.u32 %v360, 16
      %v458 = vrot.slane %v456, 1
      %v459 = vsel %vm367, %v454, %v458
      %v460 = vshrl.u32 %v360, 16
      %v462 = vor.u32 %v460, %v458
      %v464 = vshll.u32 %v361, 16
      %v466 = vrot.slane %v464, 1
      %v467 = vsel %vm367, %v462, %v466
      %v468 = vshrl.u32 %v361, 16
      %v470 = vor.u32 %v468, %v466
      %v472 = vshll.u32 %v362, 16
      %v474 = vrot.slane %v472, 1
      %v475 = vsel %vm367, %v470, %v474
      %v476 = vshrl.u32 %v362, 16
      %v478 = vor.u32 %v476, %v474
      %v480 = vshll.u32 %v363, 16
      %v482 = vrot.slane %v480, 1
      %v483 = vsel %vm367, %v478, %v482
      %v484 = vshrl.u32 %v363, 16
      %v486 = vor.u32 %v484, %v482
      %v488 = vshll.u32 %v364, 16
      %v490 = vrot.slane %v488, 1
      %v491 = vsel %vm367, %v486, %v490
      %v492 = vshrl.u32 %v364, 16
      %v494 = vor.u32 %v492, %v490
      %v496 = vshll.u32 %v365, 16
      %v498 = vrot.slane %v496, 1
      %v499 = vsel %vm367, %v494, %v498
      %v500 = vshrl.u32 %v365, 16
      %v502 = vor.u32 %v500, %v498
      %v504 = vshll.u32 %v366, 16
      %v506 = vrot.slane %v504, 1
      %v507 = vsel %vm367, %v502, %v506
      %v508 = vshrl.u32 %v366, 16
      %v510 = vor.u32 %v508, %v506
      %vm511 = vcmask 31744
      %v513 = vsel %vm511, %v379, 0
      %v516 = vsel %vm511, %v387, 0
      %v519 = vsel %vm511, %v395, 0
      %v522 = vsel %vm511, %v403, 0
      %v525 = vsel %vm511, %v411, 0
      %v528 = vsel %vm511, %v419, 0
      %v531 = vsel %vm511, %v427, 0
      %v534 = vsel %vm511, %v435, 0
      %v537 = vsel %vm511, %v443, 0
      %v540 = vsel %vm511, %v451, 0
      %v543 = vsel %vm511, %v459, 0
      %v546 = vsel %vm511, %v467, 0
      %v549 = vsel %vm511, %v475, 0
      %v552 = vsel %vm511, %v483, 0
      %v555 = vsel %vm511, %v491, 0
      %v558 = vsel %vm511, %v499, 0
      %v561 = vsel %vm511, %v507, 0
      %v564 = vsel %vm511, %v510, 0
      %vm566 = vcmask 1041408
      %v568 = vsel %vm566, %v276, 0
      %570 = vmatprep.subr.bf16.mxu0 0
      %571 = vmatpush1.bf16.msra.mxu0 %v568
      %572 = vmatprep.subr.bf16.mxu0 0
      %573 = vmatpush1.bf16.msra.mxu0 0
      %574 = vmatprep.subr.bf16.mxu0 0
      %575 = vmatpush1.bf16.msra.mxu0 0
      %576 = vmatprep.subr.bf16.mxu0 0
      %577 = vmatpush1.bf16.msra.mxu0 0
      %578 = vmatprep.subr.bf16.mxu0 0
      %579 = vmatpush1.bf16.msra.mxu0 0
      %580 = vmatprep.subr.bf16.mxu0 0
      %581 = vmatpush1.bf16.msra.mxu0 0
      %582 = vmatprep.subr.bf16.mxu0 0
      %583 = vmatpush1.bf16.msra.mxu0 0
      %584 = vmatprep.subr.bf16.mxu0 0
      %585 = vmatpush1.bf16.msra.mxu0 0
      %586 = vmatprep.subr.bf16.mxu0 0
      %587 = vmatpush1.bf16.msra.mxu0 0
      %588 = vmatprep.subr.bf16.mxu0 0
      %589 = vmatpush1.bf16.msra.mxu0 0
      %590 = vmatprep.subr.bf16.mxu0 0
      %591 = vmatpush1.bf16.msra.mxu0 0
      %592 = vmatprep.subr.bf16.mxu0 0
      %593 = vmatpush1.bf16.msra.mxu0 0
      %594 = vmatprep.subr.bf16.mxu0 0
      %595 = vmatpush1.bf16.msra.mxu0 0
      %596 = vmatprep.subr.bf16.mxu0 0
      %597 = vmatpush1.bf16.msra.mxu0 0
      %598 = vmatprep.subr.bf16.mxu0 0
      %599 = vmatpush1.bf16.msra.mxu0 0
      %600 = vmatprep.subr.bf16.mxu0 0
      %601 = vmatpush1.bf16.msra.mxu0 0
      %602 = vmatprep.mubr.bf16.mxu0 0
      %603 = vmatmul.mubr.bf16.gmra.mrb[0].mxu0 %v513
      %v604 = vpop.f32.mrb[0].mxu0
      %v605 = vadd.f32 0.0, %v604
      %v606 = vpop.f32.mrb[0].mxu0
      %v607 = vpop.f32.mrb[0].mxu0
      %v608 = vadd.f32 0.0, %v607
      %v609 = vpop.f32.mrb[0].mxu0
      %610 = vmatprep.mubr.bf16.mxu0 0
      %611 = vmatmul.mubr.bf16.gmra.mrb[0].mxu0 %v516
      %v612 = vpop.f32.mrb[0].mxu0
      %v613 = vadd.f32 0.0, %v612
      %v614 = vpop.f32.mrb[0].mxu0
      %v615 = vpop.f32.mrb[0].mxu0
      %v616 = vadd.f32 0.0, %v615
      %v617 = vpop.f32.mrb[0].mxu0
      %618 = vmatprep.mubr.bf16.mxu0 0
      %619 = vmatmul.mubr.bf16.gmra.mrb[0].mxu0 %v519
      %v620 = vpop.f32.mrb[0].mxu0
      %v621 = vadd.f32 0.0, %v620
      %v622 = vpop.f32.mrb[0].mxu0
      %v623 = vpop.f32.mrb[0].mxu0
      %v624 = vadd.f32 0.0, %v623
      %v625 = vpop.f32.mrb[0].mxu0
      %626 = vmatprep.mubr.bf16.mxu0 0
      %627 = vmatmul.mubr.bf16.gmra.mrb[0].mxu0 %v522
      %v628 = vpop.f32.mrb[0].mxu0
      %v629 = vadd.f32 0.0, %v628
      %v630 = vpop.f32.mrb[0].mxu0
      %v631 = vpop.f32.mrb[0].mxu0
      %v632 = vadd.f32 0.0, %v631
      %v633 = vpop.f32.mrb[0].mxu0
      %634 = vmatprep.mubr.bf16.mxu0 0
      %635 = vmatmul.mubr.bf16.gmra.mrb[0].mxu0 %v525
      %v636 = vpop.f32.mrb[0].mxu0
      %v637 = vadd.f32 0.0, %v636
      %v638 = vpop.f32.mrb[0].mxu0
      %v639 = vpop.f32.mrb[0].mxu0
      %v640 = vadd.f32 0.0, %v639
      %v641 = vpop.f32.mrb[0].mxu0
      %642 = vmatprep.mubr.bf16.mxu0 0
      %643 = vmatmul.mubr.bf16.gmra.mrb[0].mxu0 %v528
      %v644 = vpop.f32.mrb[0].mxu0
      %v645 = vadd.f32 0.0, %v644
      %v646 = vpop.f32.mrb[0].mxu0
      %v647 = vpop.f32.mrb[0].mxu0
      %v648 = vadd.f32 0.0, %v647
      %v649 = vpop.f32.mrb[0].mxu0
      %650 = vmatprep.mubr.bf16.mxu0 0
      %651 = vmatmul.mubr.bf16.gmra.mrb[0].mxu0 %v531
      %v652 = vpop.f32.mrb[0].mxu0
      %v653 = vadd.f32 0.0, %v652
      %v654 = vpop.f32.mrb[0].mxu0
      %v655 = vpop.f32.mrb[0].mxu0
      %v656 = vadd.f32 0.0, %v655
      %v657 = vpop.f32.mrb[0].mxu0
      %658 = vmatprep.mubr.bf16.mxu0 0
      %659 = vmatmul.mubr.bf16.gmra.mrb[0].mxu0 %v534
      %v660 = vpop.f32.mrb[0].mxu0
      %v661 = vadd.f32 0.0, %v660
      %v662 = vpop.f32.mrb[0].mxu0
      %v663 = vpop.f32.mrb[0].mxu0
      %v664 = vadd.f32 0.0, %v663
      %v665 = vpop.f32.mrb[0].mxu0
      %666 = vmatprep.mubr.bf16.mxu0 0
      %667 = vmatmul.mubr.bf16.gmra.mrb[0].mxu0 %v537
      %v668 = vpop.f32.mrb[0].mxu0
      %v669 = vadd.f32 0.0, %v668
      %v670 = vpop.f32.mrb[0].mxu0
      %v671 = vpop.f32.mrb[0].mxu0
      %v672 = vadd.f32 0.0, %v671
      %v673 = vpop.f32.mrb[0].mxu0
      %674 = vmatprep.mubr.bf16.mxu0 0
      %675 = vmatmul.mubr.bf16.gmra.mrb[0].mxu0 %v540
      %v676 = vpop.f32.mrb[0].mxu0
      %v677 = vadd.f32 0.0, %v676
      %v678 = vpop.f32.mrb[0].mxu0
      %v679 = vpop.f32.mrb[0].mxu0
      %v680 = vadd.f32 0.0, %v679
      %v681 = vpop.f32.mrb[0].mxu0
      %682 = vmatprep.mubr.bf16.mxu0 0
      %683 = vmatmul.mubr.bf16.gmra.mrb[0].mxu0 %v543
      %v684 = vpop.f32.mrb[0].mxu0
      %v685 = vadd.f32 0.0, %v684
      %v686 = vpop.f32.mrb[0].mxu0
      %v687 = vpop.f32.mrb[0].mxu0
      %v688 = vadd.f32 0.0, %v687
      %v689 = vpop.f32.mrb[0].mxu0
      %690 = vmatprep.mubr.bf16.mxu0 0
      %691 = vmatmul.mubr.bf16.gmra.mrb[0].mxu0 %v546
      %v692 = vpop.f32.mrb[0].mxu0
      %v693 = vadd.f32 0.0, %v692
      %v694 = vpop.f32.mrb[0].mxu0
      %v695 = vpop.f32.mrb[0].mxu0
      %v696 = vadd.f32 0.0, %v695
      %v697 = vpop.f32.mrb[0].mxu0
      %698 = vmatprep.mubr.bf16.mxu0 0
      %699 = vmatmul.mubr.bf16.gmra.mrb[0].mxu0 %v549
      %v700 = vpop.f32.mrb[0].mxu0
      %v701 = vadd.f32 0.0, %v700
      %v702 = vpop.f32.mrb[0].mxu0
      %v703 = vpop.f32.mrb[0].mxu0
      %v704 = vadd.f32 0.0, %v703
      %v705 = vpop.f32.mrb[0].mxu0
      %706 = vmatprep.mubr.bf16.mxu0 0
      %707 = vmatmul.mubr.bf16.gmra.mrb[0].mxu0 %v552
      %v708 = vpop.f32.mrb[0].mxu0
      %v709 = vadd.f32 0.0, %v708
      %v710 = vpop.f32.mrb[0].mxu0
      %v711 = vpop.f32.mrb[0].mxu0
      %v712 = vadd.f32 0.0, %v711
      %v713 = vpop.f32.mrb[0].mxu0
      %714 = vmatprep.mubr.bf16.mxu0 0
      %715 = vmatmul.mubr.bf16.gmra.mrb[0].mxu0 %v555
      %v716 = vpop.f32.mrb[0].mxu0
      %v717 = vadd.f32 0.0, %v716
      %v718 = vpop.f32.mrb[0].mxu0
      %v719 = vpop.f32.mrb[0].mxu0
      %v720 = vadd.f32 0.0, %v719
      %v721 = vpop.f32.mrb[0].mxu0
      %722 = vmatprep.mubr.bf16.mxu0 0
      %723 = vmatmul.mubr.bf16.gmra.mrb[0].mxu0 %v558
      %v724 = vpop.f32.mrb[0].mxu0
      %v725 = vadd.f32 0.0, %v724
      %v726 = vpop.f32.mrb[0].mxu0
      %v727 = vpop.f32.mrb[0].mxu0
      %v728 = vadd.f32 0.0, %v727
      %v729 = vpop.f32.mrb[0].mxu0
      %730 = vmatprep.mubr.bf16.mxu0 0
      %731 = vmatmul.mubr.bf16.gmra.mrb[0].mxu0 %v561
      %v732 = vpop.f32.mrb[0].mxu0
      %v733 = vadd.f32 0.0, %v732
      %v734 = vpop.f32.mrb[0].mxu0
      %v735 = vpop.f32.mrb[0].mxu0
      %v736 = vadd.f32 0.0, %v735
      %v737 = vpop.f32.mrb[0].mxu0
      %738 = vmatprep.mubr.bf16.mxu0 0
      %739 = vmatmul.mubr.bf16.gmra.mrb[0].mxu0 %v564
      %v740 = vpop.f32.mrb[0].mxu0
      %v741 = vadd.f32 0.0, %v740
      %v742 = vpop.f32.mrb[0].mxu0
      %v743 = vpop.f32.mrb[0].mxu0
      %v744 = vadd.f32 0.0, %v743
      %v745 = vpop.f32.mrb[0].mxu0
      %746 = vdwg.mxu0
      %v748 = vunpack.c.l.b16 %v272
      %v749 = vpack.c.b16 %v748, %v347
      %v750 = vsel %vm511, %v349, 0
      %v752 = vsel %vm511, %v350, 0
      %v754 = vsel %vm511, %v351, 0
      %v756 = vsel %vm511, %v352, 0
      %v758 = vsel %vm511, %v353, 0
      %v760 = vsel %vm511, %v354, 0
      %v762 = vsel %vm511, %v355, 0
      %v764 = vsel %vm511, %v356, 0
      %v766 = vsel %vm511, %v357, 0
      %v768 = vsel %vm511, %v358, 0
      %v770 = vsel %vm511, %v359, 0
      %v772 = vsel %vm511, %v360, 0
      %v774 = vsel %vm511, %v361, 0
      %v776 = vsel %vm511, %v362, 0
      %v778 = vsel %vm511, %v363, 0
      %v780 = vsel %vm511, %v364, 0
      %v782 = vsel %vm511, %v365, 0
      %v785 = vsel %vm511, %v749, 0
      %v788 = vsel %vm566, %v273, 0
      %790 = vmatprep.subr.bf16.mxu0 0
      %791 = vmatpush1.bf16.msra.mxu0 %v788
      %792 = vmatprep.subr.bf16.mxu0 0
      %793 = vmatpush1.bf16.msra.mxu0 0
      %794 = vmatprep.subr.bf16.mxu0 0
      %795 = vmatpush1.bf16.msra.mxu0 0
      %796 = vmatprep.subr.bf16.mxu0 0
      %797 = vmatpush1.bf16.msra.mxu0 0
      %798 = vmatprep.subr.bf16.mxu0 0
      %799 = vmatpush1.bf16.msra.mxu0 0
      %800 = vmatprep.subr.bf16.mxu0 0
      %801 = vmatpush1.bf16.msra.mxu0 0
      %802 = vmatprep.subr.bf16.mxu0 0
      %803 = vmatpush1.bf16.msra.mxu0 0
      %804 = vmatprep.subr.bf16.mxu0 0
      %805 = vmatpush1.bf16.msra.mxu0 0
      %806 = vmatprep.subr.bf16.mxu0 0
      %807 = vmatpush1.bf16.msra.mxu0 0
      %808 = vmatprep.subr.bf16.mxu0 0
      %809 = vmatpush1.bf16.msra.mxu0 0
      %810 = vmatprep.subr.bf16.mxu0 0
      %811 = vmatpush1.bf16.msra.mxu0 0
      %812 = vmatprep.subr.bf16.mxu0 0
      %813 = vmatpush1.bf16.msra.mxu0 0
      %814 = vmatprep.subr.bf16.mxu0 0
      %815 = vmatpush1.bf16.msra.mxu0 0
      %816 = vmatprep.subr.bf16.mxu0 0
      %817 = vmatpush1.bf16.msra.mxu0 0
      %818 = vmatprep.subr.bf16.mxu0 0
      %819 = vmatpush1.bf16.msra.mxu0 0
      %820 = vmatprep.subr.bf16.mxu0 0
      %821 = vmatpush1.bf16.msra.mxu0 0
      %822 = vmatprep.mubr.bf16.mxu0 0
      %823 = vmatmul.mubr.bf16.gmra.mrb[0].mxu0 %v750
      %v824 = vpop.f32.mrb[0].mxu0
      %v825 = vadd.f32 %v605, %v824
      %v826 = vpop.f32.mrb[0].mxu0
      %v827 = vpop.f32.mrb[0].mxu0
      %v828 = vadd.f32 %v608, %v827
      %v829 = vpop.f32.mrb[0].mxu0
      %830 = vmatprep.mubr.bf16.mxu0 0
      %831 = vmatmul.mubr.bf16.gmra.mrb[0].mxu0 %v752
      %v832 = vpop.f32.mrb[0].mxu0
      %v833 = vadd.f32 %v613, %v832
      %v834 = vpop.f32.mrb[0].mxu0
      %v835 = vpop.f32.mrb[0].mxu0
      %v836 = vadd.f32 %v616, %v835
      %v837 = vpop.f32.mrb[0].mxu0
      %838 = vmatprep.mubr.bf16.mxu0 0
      %839 = vmatmul.mubr.bf16.gmra.mrb[0].mxu0 %v754
      %v840 = vpop.f32.mrb[0].mxu0
      %v841 = vadd.f32 %v621, %v840
      %v842 = vpop.f32.mrb[0].mxu0
      %v843 = vpop.f32.mrb[0].mxu0
      %v844 = vadd.f32 %v624, %v843
      %v845 = vpop.f32.mrb[0].mxu0
      %846 = vmatprep.mubr.bf16.mxu0 0
      %847 = vmatmul.mubr.bf16.gmra.mrb[0].mxu0 %v756
      %v848 = vpop.f32.mrb[0].mxu0
      %v849 = vadd.f32 %v629, %v848
      %v850 = vpop.f32.mrb[0].mxu0
      %v851 = vpop.f32.mrb[0].mxu0
      %v852 = vadd.f32 %v632, %v851
      %v853 = vpop.f32.mrb[0].mxu0
      %854 = vmatprep.mubr.bf16.mxu0 0
      %855 = vmatmul.mubr.bf16.gmra.mrb[0].mxu0 %v758
      %v856 = vpop.f32.mrb[0].mxu0
      %v857 = vadd.f32 %v637, %v856
      %v858 = vpop.f32.mrb[0].mxu0
      %v859 = vpop.f32.mrb[0].mxu0
      %v860 = vadd.f32 %v640, %v859
      %v861 = vpop.f32.mrb[0].mxu0
      %862 = vmatprep.mubr.bf16.mxu0 0
      %863 = vmatmul.mubr.bf16.gmra.mrb[0].mxu0 %v760
      %v864 = vpop.f32.mrb[0].mxu0
      %v865 = vadd.f32 %v645, %v864
      %v866 = vpop.f32.mrb[0].mxu0
      %v867 = vpop.f32.mrb[0].mxu0
      %v868 = vadd.f32 %v648, %v867
      %v869 = vpop.f32.mrb[0].mxu0
      %870 = vmatprep.mubr.bf16.mxu0 0
      %871 = vmatmul.mubr.bf16.gmra.mrb[0].mxu0 %v762
      %v872 = vpop.f32.mrb[0].mxu0
      %v873 = vadd.f32 %v653, %v872
      %v874 = vpop.f32.mrb[0].mxu0
      %v875 = vpop.f32.mrb[0].mxu0
      %v876 = vadd.f32 %v656, %v875
      %v877 = vpop.f32.mrb[0].mxu0
      %878 = vmatprep.mubr.bf16.mxu0 0
      %879 = vmatmul.mubr.bf16.gmra.mrb[0].mxu0 %v764
      %v880 = vpop.f32.mrb[0].mxu0
      %v881 = vadd.f32 %v661, %v880
      %v882 = vpop.f32.mrb[0].mxu0
      %v883 = vpop.f32.mrb[0].mxu0
      %v884 = vadd.f32 %v664, %v883
      %v885 = vpop.f32.mrb[0].mxu0
      %886 = vmatprep.mubr.bf16.mxu0 0
      %887 = vmatmul.mubr.bf16.gmra.mrb[0].mxu0 %v766
      %v888 = vpop.f32.mrb[0].mxu0
      %v889 = vadd.f32 %v669, %v888
      %v890 = vpop.f32.mrb[0].mxu0
      %v891 = vpop.f32.mrb[0].mxu0
      %v892 = vadd.f32 %v672, %v891
      %v893 = vpop.f32.mrb[0].mxu0
      %894 = vmatprep.mubr.bf16.mxu0 0
      %895 = vmatmul.mubr.bf16.gmra.mrb[0].mxu0 %v768
      %v896 = vpop.f32.mrb[0].mxu0
      %v897 = vadd.f32 %v677, %v896
      %v898 = vpop.f32.mrb[0].mxu0
      %v899 = vpop.f32.mrb[0].mxu0
      %v900 = vadd.f32 %v680, %v899
      %v901 = vpop.f32.mrb[0].mxu0
      %902 = vmatprep.mubr.bf16.mxu0 0
      %903 = vmatmul.mubr.bf16.gmra.mrb[0].mxu0 %v770
      %v904 = vpop.f32.mrb[0].mxu0
      %v905 = vadd.f32 %v685, %v904
      %v906 = vpop.f32.mrb[0].mxu0
      %v907 = vpop.f32.mrb[0].mxu0
      %v908 = vadd.f32 %v688, %v907
      %v909 = vpop.f32.mrb[0].mxu0
      %910 = vmatprep.mubr.bf16.mxu0 0
      %911 = vmatmul.mubr.bf16.gmra.mrb[0].mxu0 %v772
      %v912 = vpop.f32.mrb[0].mxu0
      %v913 = vadd.f32 %v693, %v912
      %v914 = vpop.f32.mrb[0].mxu0
      %v915 = vpop.f32.mrb[0].mxu0
      %v916 = vadd.f32 %v696, %v915
      %v917 = vpop.f32.mrb[0].mxu0
      %918 = vmatprep.mubr.bf16.mxu0 0
      %919 = vmatmul.mubr.bf16.gmra.mrb[0].mxu0 %v774
      %v920 = vpop.f32.mrb[0].mxu0
      %v921 = vadd.f32 %v701, %v920
      %v922 = vpop.f32.mrb[0].mxu0
      %v923 = vpop.f32.mrb[0].mxu0
      %v924 = vadd.f32 %v704, %v923
      %v925 = vpop.f32.mrb[0].mxu0
      %926 = vmatprep.mubr.bf16.mxu0 0
      %927 = vmatmul.mubr.bf16.gmra.mrb[0].mxu0 %v776
      %v928 = vpop.f32.mrb[0].mxu0
      %v929 = vadd.f32 %v709, %v928
      %v930 = vpop.f32.mrb[0].mxu0
      %v931 = vpop.f32.mrb[0].mxu0
      %v932 = vadd.f32 %v712, %v931
      %v933 = vpop.f32.mrb[0].mxu0
      %934 = vmatprep.mubr.bf16.mxu0 0
      %935 = vmatmul.mubr.bf16.gmra.mrb[0].mxu0 %v778
      %v936 = vpop.f32.mrb[0].mxu0
      %v937 = vadd.f32 %v717, %v936
      %v938 = vpop.f32.mrb[0].mxu0
      %v939 = vpop.f32.mrb[0].mxu0
      %v940 = vadd.f32 %v720, %v939
      %v941 = vpop.f32.mrb[0].mxu0
      %942 = vmatprep.mubr.bf16.mxu0 0
      %943 = vmatmul.mubr.bf16.gmra.mrb[0].mxu0 %v780
      %v944 = vpop.f32.mrb[0].mxu0
      %v945 = vadd.f32 %v725, %v944
      %v946 = vpop.f32.mrb[0].mxu0
      %v947 = vpop.f32.mrb[0].mxu0
      %v948 = vadd.f32 %v728, %v947
      %v949 = vpop.f32.mrb[0].mxu0
      %950 = vmatprep.mubr.bf16.mxu0 0
      %951 = vmatmul.mubr.bf16.gmra.mrb[0].mxu0 %v782
      %v952 = vpop.f32.mrb[0].mxu0
      %v953 = vadd.f32 %v733, %v952
      %v954 = vpop.f32.mrb[0].mxu0
      %v955 = vpop.f32.mrb[0].mxu0
      %v956 = vadd.f32 %v736, %v955
      %v957 = vpop.f32.mrb[0].mxu0
      %958 = vmatprep.mubr.bf16.mxu0 0
      %959 = vmatmul.mubr.bf16.gmra.mrb[0].mxu0 %v785
      %v960 = vpop.f32.mrb[0].mxu0
      %v961 = vadd.f32 %v741, %v960
      %v962 = vpop.f32.mrb[0].mxu0
      %v963 = vpop.f32.mrb[0].mxu0
      %v964 = vadd.f32 %v744, %v963
      %v965 = vpop.f32.mrb[0].mxu0
      %966 = vdwg.mxu0
      %v967 = vld [vmem:[%s226] sm:$0xe]
      %s968 = scalar_lea.vmem %s1, 4
      %v969 = vld [vmem:[%s968] sm:$0x3]
      %v971 = vunpack.c.l.b16 %v967
      %v972 = vpack.c.b16 %v314, %v971
      %vm973 = vcmask 1046528
      %v974 = vrot.slane %v972, 1
      %v975 = vrot.slane %v350, 1
      %v976 = vsel %vm973, %v974, %v975
      %v977 = vrot.slane %v351, 1
      %v978 = vsel %vm973, %v975, %v977
      %v979 = vrot.slane %v352, 1
      %v980 = vsel %vm973, %v977, %v979
      %v981 = vrot.slane %v353, 1
      %v982 = vsel %vm973, %v979, %v981
      %v983 = vrot.slane %v354, 1
      %v984 = vsel %vm973, %v981, %v983
      %v985 = vrot.slane %v355, 1
      %v986 = vsel %vm973, %v983, %v985
      %v987 = vrot.slane %v356, 1
      %v988 = vsel %vm973, %v985, %v987
      %v989 = vrot.slane %v357, 1
      %v990 = vsel %vm973, %v987, %v989
      %v991 = vrot.slane %v358, 1
      %v992 = vsel %vm973, %v989, %v991
      %v993 = vrot.slane %v359, 1
      %v994 = vsel %vm973, %v991, %v993
      %v995 = vrot.slane %v360, 1
      %v996 = vsel %vm973, %v993, %v995
      %v997 = vrot.slane %v361, 1
      %v998 = vsel %vm973, %v995, %v997
      %v999 = vrot.slane %v362, 1
      %v1000 = vsel %vm973, %v997, %v999
      %v1001 = vrot.slane %v363, 1
      %v1002 = vsel %vm973, %v999, %v1001
      %v1003 = vrot.slane %v364, 1
      %v1004 = vsel %vm973, %v1001, %v1003
      %v1005 = vrot.slane %v365, 1
      %v1006 = vsel %vm973, %v1003, %v1005
      %v1007 = vrot.slane %v366, 1
      %v1008 = vsel %vm973, %v1005, %v1007
      %v1010 = vsel %vm511, %v976, 0
      %v1013 = vsel %vm511, %v978, 0
      %v1016 = vsel %vm511, %v980, 0
      %v1019 = vsel %vm511, %v982, 0
      %v1022 = vsel %vm511, %v984, 0
      %v1025 = vsel %vm511, %v986, 0
      %v1028 = vsel %vm511, %v988, 0
      %v1031 = vsel %vm511, %v990, 0
      %v1034 = vsel %vm511, %v992, 0
      %v1037 = vsel %vm511, %v994, 0
      %v1040 = vsel %vm511, %v996, 0
      %v1043 = vsel %vm511, %v998, 0
      %v1046 = vsel %vm511, %v1000, 0
      %v1049 = vsel %vm511, %v1002, 0
      %v1052 = vsel %vm511, %v1004, 0
      %v1055 = vsel %vm511, %v1006, 0
      %v1058 = vsel %vm511, %v1008, 0
      %v1061 = vsel %vm511, %v1007, 0
      %v1064 = vsel %vm566, %v969, 0
      %1066 = vmatprep.subr.bf16.mxu0 0
      %1067 = vmatpush1.bf16.msra.mxu0 %v1064
      %1068 = vmatprep.subr.bf16.mxu0 0
      %1069 = vmatpush1.bf16.msra.mxu0 0
      %1070 = vmatprep.subr.bf16.mxu0 0
      %1071 = vmatpush1.bf16.msra.mxu0 0
      %1072 = vmatprep.subr.bf16.mxu0 0
      %1073 = vmatpush1.bf16.msra.mxu0 0
      %1074 = vmatprep.subr.bf16.mxu0 0
      %1075 = vmatpush1.bf16.msra.mxu0 0
      %1076 = vmatprep.subr.bf16.mxu0 0
      %1077 = vmatpush1.bf16.msra.mxu0 0
      %1078 = vmatprep.subr.bf16.mxu0 0
      %1079 = vmatpush1.bf16.msra.mxu0 0
      %1080 = vmatprep.subr.bf16.mxu0 0
      %1081 = vmatpush1.bf16.msra.mxu0 0
      %1082 = vmatprep.subr.bf16.mxu0 0
      %1083 = vmatpush1.bf16.msra.mxu0 0
      %1084 = vmatprep.subr.bf16.mxu0 0
      %1085 = vmatpush1.bf16.msra.mxu0 0
      %1086 = vmatprep.subr.bf16.mxu0 0
      %1087 = vmatpush1.bf16.msra.mxu0 0
      %1088 = vmatprep.subr.bf16.mxu0 0
      %1089 = vmatpush1.bf16.msra.mxu0 0
      %1090 = vmatprep.subr.bf16.mxu0 0
      %1091 = vmatpush1.bf16.msra.mxu0 0
      %1092 = vmatprep.subr.bf16.mxu0 0
      %1093 = vmatpush1.bf16.msra.mxu0 0
      %1094 = vmatprep.subr.bf16.mxu0 0
      %1095 = vmatpush1.bf16.msra.mxu0 0
      %1096 = vmatprep.subr.bf16.mxu0 0
      %1097 = vmatpush1.bf16.msra.mxu0 0
      %1098 = vmatprep.mubr.bf16.mxu0 0
      %1099 = vmatmul.mubr.bf16.gmra.mrb[0].mxu0 %v1010
      %v1100 = vpop.f32.mrb[0].mxu0
      %v1101 = vadd.f32 0.0, %v1100
      %v1102 = vpop.f32.mrb[0].mxu0
      %v1103 = vpop.f32.mrb[0].mxu0
      %v1104 = vadd.f32 0.0, %v1103
      %v1105 = vpop.f32.mrb[0].mxu0
      %1106 = vmatprep.mubr.bf16.mxu0 0
      %1107 = vmatmul.mubr.bf16.gmra.mrb[0].mxu0 %v1013
      %v1108 = vpop.f32.mrb[0].mxu0
      %v1109 = vadd.f32 0.0, %v1108
      %v1110 = vpop.f32.mrb[0].mxu0
      %v1111 = vpop.f32.mrb[0].mxu0
      %v1112 = vadd.f32 0.0, %v1111
      %v1113 = vpop.f32.mrb[0].mxu0
      %1114 = vmatprep.mubr.bf16.mxu0 0
      %1115 = vmatmul.mubr.bf16.gmra.mrb[0].mxu0 %v1016
      %v1116 = vpop.f32.mrb[0].mxu0
      %v1117 = vadd.f32 0.0, %v1116
      %v1118 = vpop.f32.mrb[0].mxu0
      %v1119 = vpop.f32.mrb[0].mxu0
      %v1120 = vadd.f32 0.0, %v1119
      %v1121 = vpop.f32.mrb[0].mxu0
      %1122 = vmatprep.mubr.bf16.mxu0 0
      %1123 = vmatmul.mubr.bf16.gmra.mrb[0].mxu0 %v1019
      %v1124 = vpop.f32.mrb[0].mxu0
      %v1125 = vadd.f32 0.0, %v1124
      %v1126 = vpop.f32.mrb[0].mxu0
      %v1127 = vpop.f32.mrb[0].mxu0
      %v1128 = vadd.f32 0.0, %v1127
      %v1129 = vpop.f32.mrb[0].mxu0
      %1130 = vmatprep.mubr.bf16.mxu0 0
      %1131 = vmatmul.mubr.bf16.gmra.mrb[0].mxu0 %v1022
      %v1132 = vpop.f32.mrb[0].mxu0
      %v1133 = vadd.f32 0.0, %v1132
      %v1134 = vpop.f32.mrb[0].mxu0
      %v1135 = vpop.f32.mrb[0].mxu0
      %v1136 = vadd.f32 0.0, %v1135
      %v1137 = vpop.f32.mrb[0].mxu0
      %1138 = vmatprep.mubr.bf16.mxu0 0
      %1139 = vmatmul.mubr.bf16.gmra.mrb[0].mxu0 %v1025
      %v1140 = vpop.f32.mrb[0].mxu0
      %v1141 = vadd.f32 0.0, %v1140
      %v1142 = vpop.f32.mrb[0].mxu0
      %v1143 = vpop.f32.mrb[0].mxu0
      %v1144 = vadd.f32 0.0, %v1143
      %v1145 = vpop.f32.mrb[0].mxu0
      %1146 = vmatprep.mubr.bf16.mxu0 0
      %1147 = vmatmul.mubr.bf16.gmra.mrb[0].mxu0 %v1028
      %v1148 = vpop.f32.mrb[0].mxu0
      %v1149 = vadd.f32 0.0, %v1148
      %v1150 = vpop.f32.mrb[0].mxu0
      %v1151 = vpop.f32.mrb[0].mxu0
      %v1152 = vadd.f32 0.0, %v1151
      %v1153 = vpop.f32.mrb[0].mxu0
      %1154 = vmatprep.mubr.bf16.mxu0 0
      %1155 = vmatmul.mubr.bf16.gmra.mrb[0].mxu0 %v1031
      %v1156 = vpop.f32.mrb[0].mxu0
      %v1157 = vadd.f32 0.0, %v1156
      %v1158 = vpop.f32.mrb[0].mxu0
      %v1159 = vpop.f32.mrb[0].mxu0
      %v1160 = vadd.f32 0.0, %v1159
      %v1161 = vpop.f32.mrb[0].mxu0
      %1162 = vmatprep.mubr.bf16.mxu0 0
      %1163 = vmatmul.mubr.bf16.gmra.mrb[0].mxu0 %v1034
      %v1164 = vpop.f32.mrb[0].mxu0
      %v1165 = vadd.f32 0.0, %v1164
      %v1166 = vpop.f32.mrb[0].mxu0
      %v1167 = vpop.f32.mrb[0].mxu0
      %v1168 = vadd.f32 0.0, %v1167
      %v1169 = vpop.f32.mrb[0].mxu0
      %1170 = vmatprep.mubr.bf16.mxu0 0
      %1171 = vmatmul.mubr.bf16.gmra.mrb[0].mxu0 %v1037
      %v1172 = vpop.f32.mrb[0].mxu0
      %v1173 = vadd.f32 0.0, %v1172
      %v1174 = vpop.f32.mrb[0].mxu0
      %v1175 = vpop.f32.mrb[0].mxu0
      %v1176 = vadd.f32 0.0, %v1175
      %v1177 = vpop.f32.mrb[0].mxu0
      %1178 = vmatprep.mubr.bf16.mxu0 0
      %1179 = vmatmul.mubr.bf16.gmra.mrb[0].mxu0 %v1040
      %v1180 = vpop.f32.mrb[0].mxu0
      %v1181 = vadd.f32 0.0, %v1180
      %v1182 = vpop.f32.mrb[0].mxu0
      %v1183 = vpop.f32.mrb[0].mxu0
      %v1184 = vadd.f32 0.0, %v1183
      %v1185 = vpop.f32.mrb[0].mxu0
      %1186 = vmatprep.mubr.bf16.mxu0 0
      %1187 = vmatmul.mubr.bf16.gmra.mrb[0].mxu0 %v1043
      %v1188 = vpop.f32.mrb[0].mxu0
      %v1189 = vadd.f32 0.0, %v1188
      %v1190 = vpop.f32.mrb[0].mxu0
      %v1191 = vpop.f32.mrb[0].mxu0
      %v1192 = vadd.f32 0.0, %v1191
      %v1193 = vpop.f32.mrb[0].mxu0
      %1194 = vmatprep.mubr.bf16.mxu0 0
      %1195 = vmatmul.mubr.bf16.gmra.mrb[0].mxu0 %v1046
      %v1196 = vpop.f32.mrb[0].mxu0
      %v1197 = vadd.f32 0.0, %v1196
      %v1198 = vpop.f32.mrb[0].mxu0
      %v1199 = vpop.f32.mrb[0].mxu0
      %v1200 = vadd.f32 0.0, %v1199
      %v1201 = vpop.f32.mrb[0].mxu0
      %1202 = vmatprep.mubr.bf16.mxu0 0
      %1203 = vmatmul.mubr.bf16.gmra.mrb[0].mxu0 %v1049
      %v1204 = vpop.f32.mrb[0].mxu0
      %v1205 = vadd.f32 0.0, %v1204
      %v1206 = vpop.f32.mrb[0].mxu0
      %v1207 = vpop.f32.mrb[0].mxu0
      %v1208 = vadd.f32 0.0, %v1207
      %v1209 = vpop.f32.mrb[0].mxu0
      %1210 = vmatprep.mubr.bf16.mxu0 0
      %1211 = vmatmul.mubr.bf16.gmra.mrb[0].mxu0 %v1052
      %v1212 = vpop.f32.mrb[0].mxu0
      %v1213 = vadd.f32 0.0, %v1212
      %v1214 = vpop.f32.mrb[0].mxu0
      %v1215 = vpop.f32.mrb[0].mxu0
      %v1216 = vadd.f32 0.0, %v1215
      %v1217 = vpop.f32.mrb[0].mxu0
      %1218 = vmatprep.mubr.bf16.mxu0 0
      %1219 = vmatmul.mubr.bf16.gmra.mrb[0].mxu0 %v1055
      %v1220 = vpop.f32.mrb[0].mxu0
      %v1221 = vadd.f32 0.0, %v1220
      %v1222 = vpop.f32.mrb[0].mxu0
      %v1223 = vpop.f32.mrb[0].mxu0
      %v1224 = vadd.f32 0.0, %v1223
      %v1225 = vpop.f32.mrb[0].mxu0
      %1226 = vmatprep.mubr.bf16.mxu0 0
      %1227 = vmatmul.mubr.bf16.gmra.mrb[0].mxu0 %v1058
      %v1228 = vpop.f32.mrb[0].mxu0
      %v1229 = vadd.f32 0.0, %v1228
      %v1230 = vpop.f32.mrb[0].mxu0
      %v1231 = vpop.f32.mrb[0].mxu0
      %v1232 = vadd.f32 0.0, %v1231
      %v1233 = vpop.f32.mrb[0].mxu0
      %1234 = vmatprep.mubr.bf16.mxu0 0
      %1235 = vmatmul.mubr.bf16.gmra.mrb[0].mxu0 %v1061
      %v1236 = vpop.f32.mrb[0].mxu0
      %v1237 = vadd.f32 0.0, %v1236
      %v1238 = vpop.f32.mrb[0].mxu0
      %v1239 = vpop.f32.mrb[0].mxu0
      %v1240 = vadd.f32 0.0, %v1239
      %v1241 = vpop.f32.mrb[0].mxu0
      %1242 = vdwg.mxu0
      %v1243 = vadd.f32 %v825, %v1101
      %v1244 = vadd.f32 %v828, %v1104
      %v1245 = vadd.f32 %v833, %v1109
      %v1246 = vadd.f32 %v836, %v1112
      %v1247 = vadd.f32 %v841, %v1117
      %v1248 = vadd.f32 %v844, %v1120
      %v1249 = vadd.f32 %v849, %v1125
      %v1250 = vadd.f32 %v852, %v1128
      %v1251 = vadd.f32 %v857, %v1133
      %v1252 = vadd.f32 %v860, %v1136
      %v1253 = vadd.f32 %v865, %v1141
      %v1254 = vadd.f32 %v868, %v1144
      %v1255 = vadd.f32 %v873, %v1149
      %v1256 = vadd.f32 %v876, %v1152
      %v1257 = vadd.f32 %v881, %v1157
      %v1258 = vadd.f32 %v884, %v1160
      %v1259 = vadd.f32 %v889, %v1165
      %v1260 = vadd.f32 %v892, %v1168
      %v1261 = vadd.f32 %v897, %v1173
      %v1262 = vadd.f32 %v900, %v1176
      %v1263 = vadd.f32 %v905, %v1181
      %v1264 = vadd.f32 %v908, %v1184
      %v1265 = vadd.f32 %v913, %v1189
      %v1266 = vadd.f32 %v916, %v1192
      %v1267 = vadd.f32 %v921, %v1197
      %v1268 = vadd.f32 %v924, %v1200
      %v1269 = vadd.f32 %v929, %v1205
      %v1270 = vadd.f32 %v932, %v1208
      %v1271 = vadd.f32 %v937, %v1213
      %v1272 = vadd.f32 %v940, %v1216
      %v1273 = vadd.f32 %v945, %v1221
      %v1274 = vadd.f32 %v948, %v1224
      %v1275 = vadd.f32 %v953, %v1229
      %v1276 = vadd.f32 %v956, %v1232
      %v1277 = vadd.f32 %v961, %v1237
      %v1278 = vadd.f32 %v964, %v1240
      %v1279 = vld [vmem:[%s226 + $0x8] sm:$0xe]
      %v1280 = vld [vmem:[%s226 + $0xc] sm:$0xf]
      %v1281 = vld [vmem:[%s226 + $0x10] sm:$0xf]
      %v1282 = vld [vmem:[%s226 + $0x14] sm:$0xf]
      %v1283 = vld [vmem:[%s226 + $0x18] sm:$0xf]
      %v1284 = vld [vmem:[%s226 + $0x1c] sm:$0xf]
      %v1285 = vld [vmem:[%s226 + $0x20] sm:$0xf]
      %v1286 = vld [vmem:[%s226 + $0x24] sm:$0xf]
      %v1287 = vld [vmem:[%s226 + $0x28] sm:$0xf]
      %v1288 = vld [vmem:[%s226 + $0x2c] sm:$0xf]
      %v1289 = vld [vmem:[%s226 + $0x30] sm:$0xf]
      %v1290 = vld [vmem:[%s226 + $0x34] sm:$0xf]
      %v1291 = vld [vmem:[%s226 + $0x38] sm:$0xf]
      %v1292 = vld [vmem:[%s226 + $0x3c] sm:$0xf]
      %v1293 = vld [vmem:[%s226 + $0x40] sm:$0xf]
      %v1294 = vld [vmem:[%s226 + $0x44] sm:$0xf]
      %v1295 = vld [vmem:[%s226 + $0x48] sm:$0xf]
      %v1296 = vld [vmem:[%s226 + $0x4c] sm:$0xf]
      %v1297 = vld [vmem:[%s226 + $0x50] sm:$0xf]
      %v1298 = vld [vmem:[%s226 + $0x54] sm:$0xf]
      %v1299 = vld [vmem:[%s226 + $0x58] sm:$0xf]
      %v1300 = vld [vmem:[%s226 + $0x5c] sm:$0xf]
      %v1301 = vld [vmem:[%s226 + $0x60] sm:$0xf]
      %v1302 = vld [vmem:[%s226 + $0x64] sm:$0xf]
      %v1303 = vld [vmem:[%s226 + $0x68] sm:$0xf]
      %v1304 = vld [vmem:[%s226 + $0x6c] sm:$0xf]
      %v1305 = vld [vmem:[%s226 + $0x70] sm:$0xf]
      %v1306 = vld [vmem:[%s226 + $0x74] sm:$0xf]
      %v1307 = vld [vmem:[%s226 + $0x78] sm:$0xf]
      %v1308 = vld [vmem:[%s226 + $0x7c] sm:$0xf]
      %v1309 = vld [vmem:[%s226 + $0x80] sm:$0xf]
      %v1310 = vld [vmem:[%s226 + $0x84] sm:$0xf]
      %v1311 = vld [vmem:[%s226 + $0x88] sm:$0xf]
      %v1312 = vld [vmem:[%s226 + $0x8c] sm:$0xf]
      %v1313 = vld [vmem:[%s226 + $0x90] sm:$0xf]
      %v1314 = vld [vmem:[%s226 + $0x94] sm:$0xf]
      %s1315 = scalar_lea.vmem %s1, 6
      %v1316 = vld [vmem:[%s1315] sm:$0x3]
      %v1353 = vunpack.c.l.b16 %v1279
      %v1354 = vunpack.c.l.b16 %v1280
      %v1355 = vunpack.c.l.b16 %v1281
      %v1356 = vunpack.c.l.b16 %v1282
      %v1357 = vunpack.c.l.b16 %v1283
      %v1358 = vunpack.c.l.b16 %v1284
      %v1359 = vunpack.c.l.b16 %v1285
      %v1360 = vunpack.c.l.b16 %v1286
      %v1361 = vunpack.c.l.b16 %v1287
      %v1362 = vunpack.c.l.b16 %v1288
      %v1363 = vunpack.c.l.b16 %v1289
      %v1364 = vunpack.c.l.b16 %v1290
      %v1365 = vunpack.c.l.b16 %v1291
      %v1366 = vunpack.c.l.b16 %v1292
      %v1367 = vunpack.c.l.b16 %v1293
      %v1368 = vunpack.c.l.b16 %v1294
      %v1369 = vunpack.c.l.b16 %v1295
      %v1370 = vunpack.c.l.b16 %v1296
      %v1371 = vunpack.c.l.b16 %v1297
      %v1372 = vunpack.c.l.b16 %v1298
      %v1373 = vunpack.c.l.b16 %v1299
      %v1374 = vunpack.c.l.b16 %v1300
      %v1375 = vunpack.c.l.b16 %v1301
      %v1376 = vunpack.c.l.b16 %v1302
      %v1377 = vunpack.c.l.b16 %v1303
      %v1378 = vunpack.c.l.b16 %v1304
      %v1379 = vunpack.c.l.b16 %v1305
      %v1380 = vunpack.c.l.b16 %v1306
      %v1381 = vunpack.c.l.b16 %v1307
      %v1382 = vunpack.c.l.b16 %v1308
      %v1383 = vunpack.c.l.b16 %v1309
      %v1384 = vunpack.c.l.b16 %v1310
      %v1385 = vunpack.c.l.b16 %v1311
      %v1386 = vunpack.c.l.b16 %v1312
      %v1387 = vunpack.c.l.b16 %v1313
      %v1388 = vunpack.c.l.b16 %v1314
      %v1389 = vpack.c.b16 %v1354, %v1353
      %v1390 = vpack.c.b16 %v1356, %v1355
      %v1391 = vpack.c.b16 %v1358, %v1357
      %v1392 = vpack.c.b16 %v1360, %v1359
      %v1393 = vpack.c.b16 %v1362, %v1361
      %v1394 = vpack.c.b16 %v1364, %v1363
      %v1395 = vpack.c.b16 %v1366, %v1365
      %v1396 = vpack.c.b16 %v1368, %v1367
      %v1397 = vpack.c.b16 %v1370, %v1369
      %v1398 = vpack.c.b16 %v1372, %v1371
      %v1399 = vpack.c.b16 %v1374, %v1373
      %v1400 = vpack.c.b16 %v1376, %v1375
      %v1401 = vpack.c.b16 %v1378, %v1377
      %v1402 = vpack.c.b16 %v1380, %v1379
      %v1403 = vpack.c.b16 %v1382, %v1381
      %v1404 = vpack.c.b16 %v1384, %v1383
      %v1405 = vpack.c.b16 %v1386, %v1385
      %v1406 = vpack.c.b16 %v1388, %v1387
      %v1407 = vrot.slane %v1389, 1
      %v1408 = vrot.slane %v1390, 1
      %v1409 = vsel %vm973, %v1407, %v1408
      %v1410 = vrot.slane %v1391, 1
      %v1411 = vsel %vm973, %v1408, %v1410
      %v1412 = vrot.slane %v1392, 1
      %v1413 = vsel %vm973, %v1410, %v1412
      %v1414 = vrot.slane %v1393, 1
      %v1415 = vsel %vm973, %v1412, %v1414
      %v1416 = vrot.slane %v1394, 1
      %v1417 = vsel %vm973, %v1414, %v1416
      %v1418 = vrot.slane %v1395, 1
      %v1419 = vsel %vm973, %v1416, %v1418
      %v1420 = vrot.slane %v1396, 1
      %v1421 = vsel %vm973, %v1418, %v1420
      %v1422 = vrot.slane %v1397, 1
      %v1423 = vsel %vm973, %v1420, %v1422
      %v1424 = vrot.slane %v1398, 1
      %v1425 = vsel %vm973, %v1422, %v1424
      %v1426 = vrot.slane %v1399, 1
      %v1427 = vsel %vm973, %v1424, %v1426
      %v1428 = vrot.slane %v1400, 1
      %v1429 = vsel %vm973, %v1426, %v1428
      %v1430 = vrot.slane %v1401, 1
      %v1431 = vsel %vm973, %v1428, %v1430
      %v1432 = vrot.slane %v1402, 1
      %v1433 = vsel %vm973, %v1430, %v1432
      %v1434 = vrot.slane %v1403, 1
      %v1435 = vsel %vm973, %v1432, %v1434
      %v1436 = vrot.slane %v1404, 1
      %v1437 = vsel %vm973, %v1434, %v1436
      %v1438 = vrot.slane %v1405, 1
      %v1439 = vsel %vm973, %v1436, %v1438
      %v1440 = vrot.slane %v1406, 1
      %v1441 = vsel %vm973, %v1438, %v1440
      %v1443 = vsel %vm511, %v1409, 0
      %v1446 = vsel %vm511, %v1411, 0
      %v1449 = vsel %vm511, %v1413, 0
      %v1452 = vsel %vm511, %v1415, 0
      %v1455 = vsel %vm511, %v1417, 0
      %v1458 = vsel %vm511, %v1419, 0
      %v1461 = vsel %vm511, %v1421, 0
      %v1464 = vsel %vm511, %v1423, 0
      %v1467 = vsel %vm511, %v1425, 0
      %v1470 = vsel %vm511, %v1427, 0
      %v1473 = vsel %vm511, %v1429, 0
      %v1476 = vsel %vm511, %v1431, 0
      %v1479 = vsel %vm511, %v1433, 0
      %v1482 = vsel %vm511, %v1435, 0
      %v1485 = vsel %vm511, %v1437, 0
      %v1488 = vsel %vm511, %v1439, 0
      %v1491 = vsel %vm511, %v1441, 0
      %v1494 = vsel %vm511, %v1440, 0
      %v1497 = vsel %vm566, %v1316, 0
      %1499 = vmatprep.subr.bf16.mxu0 0
      %1500 = vmatpush1.bf16.msra.mxu0 %v1497
      %1501 = vmatprep.subr.bf16.mxu0 0
      %1502 = vmatpush1.bf16.msra.mxu0 0
      %1503 = vmatprep.subr.bf16.mxu0 0
      %1504 = vmatpush1.bf16.msra.mxu0 0
      %1505 = vmatprep.subr.bf16.mxu0 0
      %1506 = vmatpush1.bf16.msra.mxu0 0
      %1507 = vmatprep.subr.bf16.mxu0 0
      %1508 = vmatpush1.bf16.msra.mxu0 0
      %1509 = vmatprep.subr.bf16.mxu0 0
      %1510 = vmatpush1.bf16.msra.mxu0 0
      %1511 = vmatprep.subr.bf16.mxu0 0
      %1512 = vmatpush1.bf16.msra.mxu0 0
      %1513 = vmatprep.subr.bf16.mxu0 0
      %1514 = vmatpush1.bf16.msra.mxu0 0
      %1515 = vmatprep.subr.bf16.mxu0 0
      %1516 = vmatpush1.bf16.msra.mxu0 0
      %1517 = vmatprep.subr.bf16.mxu0 0
      %1518 = vmatpush1.bf16.msra.mxu0 0
      %1519 = vmatprep.subr.bf16.mxu0 0
      %1520 = vmatpush1.bf16.msra.mxu0 0
      %1521 = vmatprep.subr.bf16.mxu0 0
      %1522 = vmatpush1.bf16.msra.mxu0 0
      %1523 = vmatprep.subr.bf16.mxu0 0
      %1524 = vmatpush1.bf16.msra.mxu0 0
      %1525 = vmatprep.subr.bf16.mxu0 0
      %1526 = vmatpush1.bf16.msra.mxu0 0
      %1527 = vmatprep.subr.bf16.mxu0 0
      %1528 = vmatpush1.bf16.msra.mxu0 0
      %1529 = vmatprep.subr.bf16.mxu0 0
      %1530 = vmatpush1.bf16.msra.mxu0 0
      %1531 = vmatprep.mubr.bf16.mxu0 0
      %1532 = vmatmul.mubr.bf16.gmra.mrb[0].mxu0 %v1443
      %v1533 = vpop.f32.mrb[0].mxu0
      %v1534 = vadd.f32 0.0, %v1533
      %v1535 = vpop.f32.mrb[0].mxu0
      %v1536 = vpop.f32.mrb[0].mxu0
      %v1537 = vadd.f32 0.0, %v1536
      %v1538 = vpop.f32.mrb[0].mxu0
      %1539 = vmatprep.mubr.bf16.mxu0 0
      %1540 = vmatmul.mubr.bf16.gmra.mrb[0].mxu0 %v1446
      %v1541 = vpop.f32.mrb[0].mxu0
      %v1542 = vadd.f32 0.0, %v1541
      %v1543 = vpop.f32.mrb[0].mxu0
      %v1544 = vpop.f32.mrb[0].mxu0
      %v1545 = vadd.f32 0.0, %v1544
      %v1546 = vpop.f32.mrb[0].mxu0
      %1547 = vmatprep.mubr.bf16.mxu0 0
      %1548 = vmatmul.mubr.bf16.gmra.mrb[0].mxu0 %v1449
      %v1549 = vpop.f32.mrb[0].mxu0
      %v1550 = vadd.f32 0.0, %v1549
      %v1551 = vpop.f32.mrb[0].mxu0
      %v1552 = vpop.f32.mrb[0].mxu0
      %v1553 = vadd.f32 0.0, %v1552
      %v1554 = vpop.f32.mrb[0].mxu0
      %1555 = vmatprep.mubr.bf16.mxu0 0
      %1556 = vmatmul.mubr.bf16.gmra.mrb[0].mxu0 %v1452
      %v1557 = vpop.f32.mrb[0].mxu0
      %v1558 = vadd.f32 0.0, %v1557
      %v1559 = vpop.f32.mrb[0].mxu0
      %v1560 = vpop.f32.mrb[0].mxu0
      %v1561 = vadd.f32 0.0, %v1560
      %v1562 = vpop.f32.mrb[0].mxu0
      %1563 = vmatprep.mubr.bf16.mxu0 0
      %1564 = vmatmul.mubr.bf16.gmra.mrb[0].mxu0 %v1455
      %v1565 = vpop.f32.mrb[0].mxu0
      %v1566 = vadd.f32 0.0, %v1565
      %v1567 = vpop.f32.mrb[0].mxu0
      %v1568 = vpop.f32.mrb[0].mxu0
      %v1569 = vadd.f32 0.0, %v1568
      %v1570 = vpop.f32.mrb[0].mxu0
      %1571 = vmatprep.mubr.bf16.mxu0 0
      %1572 = vmatmul.mubr.bf16.gmra.mrb[0].mxu0 %v1458
      %v1573 = vpop.f32.mrb[0].mxu0
      %v1574 = vadd.f32 0.0, %v1573
      %v1575 = vpop.f32.mrb[0].mxu0
      %v1576 = vpop.f32.mrb[0].mxu0
      %v1577 = vadd.f32 0.0, %v1576
      %v1578 = vpop.f32.mrb[0].mxu0
      %1579 = vmatprep.mubr.bf16.mxu0 0
      %1580 = vmatmul.mubr.bf16.gmra.mrb[0].mxu0 %v1461
      %v1581 = vpop.f32.mrb[0].mxu0
      %v1582 = vadd.f32 0.0, %v1581
      %v1583 = vpop.f32.mrb[0].mxu0
      %v1584 = vpop.f32.mrb[0].mxu0
      %v1585 = vadd.f32 0.0, %v1584
      %v1586 = vpop.f32.mrb[0].mxu0
      %1587 = vmatprep.mubr.bf16.mxu0 0
      %1588 = vmatmul.mubr.bf16.gmra.mrb[0].mxu0 %v1464
      %v1589 = vpop.f32.mrb[0].mxu0
      %v1590 = vadd.f32 0.0, %v1589
      %v1591 = vpop.f32.mrb[0].mxu0
      %v1592 = vpop.f32.mrb[0].mxu0
      %v1593 = vadd.f32 0.0, %v1592
      %v1594 = vpop.f32.mrb[0].mxu0
      %1595 = vmatprep.mubr.bf16.mxu0 0
      %1596 = vmatmul.mubr.bf16.gmra.mrb[0].mxu0 %v1467
      %v1597 = vpop.f32.mrb[0].mxu0
      %v1598 = vadd.f32 0.0, %v1597
      %v1599 = vpop.f32.mrb[0].mxu0
      %v1600 = vpop.f32.mrb[0].mxu0
      %v1601 = vadd.f32 0.0, %v1600
      %v1602 = vpop.f32.mrb[0].mxu0
      %1603 = vmatprep.mubr.bf16.mxu0 0
      %1604 = vmatmul.mubr.bf16.gmra.mrb[0].mxu0 %v1470
      %v1605 = vpop.f32.mrb[0].mxu0
      %v1606 = vadd.f32 0.0, %v1605
      %v1607 = vpop.f32.mrb[0].mxu0
      %v1608 = vpop.f32.mrb[0].mxu0
      %v1609 = vadd.f32 0.0, %v1608
      %v1610 = vpop.f32.mrb[0].mxu0
      %1611 = vmatprep.mubr.bf16.mxu0 0
      %1612 = vmatmul.mubr.bf16.gmra.mrb[0].mxu0 %v1473
      %v1613 = vpop.f32.mrb[0].mxu0
      %v1614 = vadd.f32 0.0, %v1613
      %v1615 = vpop.f32.mrb[0].mxu0
      %v1616 = vpop.f32.mrb[0].mxu0
      %v1617 = vadd.f32 0.0, %v1616
      %v1618 = vpop.f32.mrb[0].mxu0
      %1619 = vmatprep.mubr.bf16.mxu0 0
      %1620 = vmatmul.mubr.bf16.gmra.mrb[0].mxu0 %v1476
      %v1621 = vpop.f32.mrb[0].mxu0
      %v1622 = vadd.f32 0.0, %v1621
      %v1623 = vpop.f32.mrb[0].mxu0
      %v1624 = vpop.f32.mrb[0].mxu0
      %v1625 = vadd.f32 0.0, %v1624
      %v1626 = vpop.f32.mrb[0].mxu0
      %1627 = vmatprep.mubr.bf16.mxu0 0
      %1628 = vmatmul.mubr.bf16.gmra.mrb[0].mxu0 %v1479
      %v1629 = vpop.f32.mrb[0].mxu0
      %v1630 = vadd.f32 0.0, %v1629
      %v1631 = vpop.f32.mrb[0].mxu0
      %v1632 = vpop.f32.mrb[0].mxu0
      %v1633 = vadd.f32 0.0, %v1632
      %v1634 = vpop.f32.mrb[0].mxu0
      %1635 = vmatprep.mubr.bf16.mxu0 0
      %1636 = vmatmul.mubr.bf16.gmra.mrb[0].mxu0 %v1482
      %v1637 = vpop.f32.mrb[0].mxu0
      %v1638 = vadd.f32 0.0, %v1637
      %v1639 = vpop.f32.mrb[0].mxu0
      %v1640 = vpop.f32.mrb[0].mxu0
      %v1641 = vadd.f32 0.0, %v1640
      %v1642 = vpop.f32.mrb[0].mxu0
      %1643 = vmatprep.mubr.bf16.mxu0 0
      %1644 = vmatmul.mubr.bf16.gmra.mrb[0].mxu0 %v1485
      %v1645 = vpop.f32.mrb[0].mxu0
      %v1646 = vadd.f32 0.0, %v1645
      %v1647 = vpop.f32.mrb[0].mxu0
      %v1648 = vpop.f32.mrb[0].mxu0
      %v1649 = vadd.f32 0.0, %v1648
      %v1650 = vpop.f32.mrb[0].mxu0
      %1651 = vmatprep.mubr.bf16.mxu0 0
      %1652 = vmatmul.mubr.bf16.gmra.mrb[0].mxu0 %v1488
      %v1653 = vpop.f32.mrb[0].mxu0
      %v1654 = vadd.f32 0.0, %v1653
      %v1655 = vpop.f32.mrb[0].mxu0
      %v1656 = vpop.f32.mrb[0].mxu0
      %v1657 = vadd.f32 0.0, %v1656
      %v1658 = vpop.f32.mrb[0].mxu0
      %1659 = vmatprep.mubr.bf16.mxu0 0
      %1660 = vmatmul.mubr.bf16.gmra.mrb[0].mxu0 %v1491
      %v1661 = vpop.f32.mrb[0].mxu0
      %v1662 = vadd.f32 0.0, %v1661
      %v1663 = vpop.f32.mrb[0].mxu0
      %v1664 = vpop.f32.mrb[0].mxu0
      %v1665 = vadd.f32 0.0, %v1664
      %v1666 = vpop.f32.mrb[0].mxu0
      %1667 = vmatprep.mubr.bf16.mxu0 0
      %1668 = vmatmul.mubr.bf16.gmra.mrb[0].mxu0 %v1494
      %v1669 = vpop.f32.mrb[0].mxu0
      %v1670 = vadd.f32 0.0, %v1669
      %v1671 = vpop.f32.mrb[0].mxu0
      %v1672 = vpop.f32.mrb[0].mxu0
      %v1673 = vadd.f32 0.0, %v1672
      %v1674 = vpop.f32.mrb[0].mxu0
      %1675 = vdwg.mxu0
      %v1676 = vadd.f32 %v1243, %v1534
      %v1677 = vadd.f32 %v1244, %v1537
      %v1678 = vadd.f32 %v1245, %v1542
      %v1679 = vadd.f32 %v1246, %v1545
      %v1680 = vadd.f32 %v1247, %v1550
      %v1681 = vadd.f32 %v1248, %v1553
      %v1682 = vadd.f32 %v1249, %v1558
      %v1683 = vadd.f32 %v1250, %v1561
      %v1684 = vadd.f32 %v1251, %v1566
      %v1685 = vadd.f32 %v1252, %v1569
      %v1686 = vadd.f32 %v1253, %v1574
      %v1687 = vadd.f32 %v1254, %v1577
      %v1688 = vadd.f32 %v1255, %v1582
      %v1689 = vadd.f32 %v1256, %v1585
      %v1690 = vadd.f32 %v1257, %v1590
      %v1691 = vadd.f32 %v1258, %v1593
      %v1692 = vadd.f32 %v1259, %v1598
      %v1693 = vadd.f32 %v1260, %v1601
      %v1694 = vadd.f32 %v1261, %v1606
      %v1695 = vadd.f32 %v1262, %v1609
      %v1696 = vadd.f32 %v1263, %v1614
      %v1697 = vadd.f32 %v1264, %v1617
      %v1698 = vadd.f32 %v1265, %v1622
      %v1699 = vadd.f32 %v1266, %v1625
      %v1700 = vadd.f32 %v1267, %v1630
      %v1701 = vadd.f32 %v1268, %v1633
      %v1702 = vadd.f32 %v1269, %v1638
      %v1703 = vadd.f32 %v1270, %v1641
      %v1704 = vadd.f32 %v1271, %v1646
      %v1705 = vadd.f32 %v1272, %v1649
      %v1706 = vadd.f32 %v1273, %v1654
      %v1707 = vadd.f32 %v1274, %v1657
      %v1708 = vadd.f32 %v1275, %v1662
      %v1709 = vadd.f32 %v1276, %v1665
      %v1710 = vadd.f32 %v1277, %v1670
      %v1711 = vadd.f32 %v1278, %v1673
      %v1712 = vld [vmem:[%s226 + $0x8] sm:$0xe]
      %v1713 = vld [vmem:[%s226 + $0xc] sm:$0xf]
      %v1714 = vld [vmem:[%s226 + $0x10] sm:$0xf]
      %v1715 = vld [vmem:[%s226 + $0x14] sm:$0xf]
      %v1716 = vld [vmem:[%s226 + $0x18] sm:$0xf]
      %v1717 = vld [vmem:[%s226 + $0x1c] sm:$0xf]
      %v1718 = vld [vmem:[%s226 + $0x20] sm:$0xf]
      %v1719 = vld [vmem:[%s226 + $0x24] sm:$0xf]
      %v1720 = vld [vmem:[%s226 + $0x28] sm:$0xf]
      %v1721 = vld [vmem:[%s226 + $0x2c] sm:$0xf]
      %v1722 = vld [vmem:[%s226 + $0x30] sm:$0xf]
      %v1723 = vld [vmem:[%s226 + $0x34] sm:$0xf]
      %v1724 = vld [vmem:[%s226 + $0x38] sm:$0xf]
      %v1725 = vld [vmem:[%s226 + $0x3c] sm:$0xf]
      %v1726 = vld [vmem:[%s226 + $0x40] sm:$0xf]
      %v1727 = vld [vmem:[%s226 + $0x44] sm:$0xf]
      %v1728 = vld [vmem:[%s226 + $0x48] sm:$0xf]
      %v1729 = vld [vmem:[%s226 + $0x4c] sm:$0xf]
      %v1730 = vld [vmem:[%s226 + $0x50] sm:$0xf]
      %v1731 = vld [vmem:[%s226 + $0x54] sm:$0xf]
      %v1732 = vld [vmem:[%s226 + $0x58] sm:$0xf]
      %v1733 = vld [vmem:[%s226 + $0x5c] sm:$0xf]
      %v1734 = vld [vmem:[%s226 + $0x60] sm:$0xf]
      %v1735 = vld [vmem:[%s226 + $0x64] sm:$0xf]
      %v1736 = vld [vmem:[%s226 + $0x68] sm:$0xf]
      %v1737 = vld [vmem:[%s226 + $0x6c] sm:$0xf]
      %v1738 = vld [vmem:[%s226 + $0x70] sm:$0xf]
      %v1739 = vld [vmem:[%s226 + $0x74] sm:$0xf]
      %v1740 = vld [vmem:[%s226 + $0x78] sm:$0xf]
      %v1741 = vld [vmem:[%s226 + $0x7c] sm:$0xf]
      %v1742 = vld [vmem:[%s226 + $0x80] sm:$0xf]
      %v1743 = vld [vmem:[%s226 + $0x84] sm:$0xf]
      %v1744 = vld [vmem:[%s226 + $0x88] sm:$0xf]
      %v1745 = vld [vmem:[%s226 + $0x8c] sm:$0xf]
      %v1746 = vld [vmem:[%s226 + $0x90] sm:$0xf]
      %v1747 = vld [vmem:[%s226 + $0x94] sm:$0xf]
      %v1748 = vld [vmem:[%s226 + $0x98] sm:$0x1]
      %s1749 = scalar_lea.vmem %s1, 8
      %v1750 = vld [vmem:[%s1749] sm:$0x3]
      %v1788 = vunpack.c.l.b16 %v1712
      %v1789 = vunpack.c.l.b16 %v1713
      %v1790 = vunpack.c.l.b16 %v1714
      %v1791 = vunpack.c.l.b16 %v1715
      %v1792 = vunpack.c.l.b16 %v1716
      %v1793 = vunpack.c.l.b16 %v1717
      %v1794 = vunpack.c.l.b16 %v1718
      %v1795 = vunpack.c.l.b16 %v1719
      %v1796 = vunpack.c.l.b16 %v1720
      %v1797 = vunpack.c.l.b16 %v1721
      %v1798 = vunpack.c.l.b16 %v1722
      %v1799 = vunpack.c.l.b16 %v1723
      %v1800 = vunpack.c.l.b16 %v1724
      %v1801 = vunpack.c.l.b16 %v1725
      %v1802 = vunpack.c.l.b16 %v1726
      %v1803 = vunpack.c.l.b16 %v1727
      %v1804 = vunpack.c.l.b16 %v1728
      %v1805 = vunpack.c.l.b16 %v1729
      %v1806 = vunpack.c.l.b16 %v1730
      %v1807 = vunpack.c.l.b16 %v1731
      %v1808 = vunpack.c.l.b16 %v1732
      %v1809 = vunpack.c.l.b16 %v1733
      %v1810 = vunpack.c.l.b16 %v1734
      %v1811 = vunpack.c.l.b16 %v1735
      %v1812 = vunpack.c.l.b16 %v1736
      %v1813 = vunpack.c.l.b16 %v1737
      %v1814 = vunpack.c.l.b16 %v1738
      %v1815 = vunpack.c.l.b16 %v1739
      %v1816 = vunpack.c.l.b16 %v1740
      %v1817 = vunpack.c.l.b16 %v1741
      %v1818 = vunpack.c.l.b16 %v1742
      %v1819 = vunpack.c.l.b16 %v1743
      %v1820 = vunpack.c.l.b16 %v1744
      %v1821 = vunpack.c.l.b16 %v1745
      %v1822 = vunpack.c.l.b16 %v1746
      %v1823 = vunpack.c.l.b16 %v1747
      %v1824 = vunpack.c.l.b16 %v1748
      %v1825 = vpack.c.b16 %v1789, %v1788
      %v1826 = vpack.c.b16 %v1791, %v1790
      %v1827 = vpack.c.b16 %v1793, %v1792
      %v1828 = vpack.c.b16 %v1795, %v1794
      %v1829 = vpack.c.b16 %v1797, %v1796
      %v1830 = vpack.c.b16 %v1799, %v1798
      %v1831 = vpack.c.b16 %v1801, %v1800
      %v1832 = vpack.c.b16 %v1803, %v1802
      %v1833 = vpack.c.b16 %v1805, %v1804
      %v1834 = vpack.c.b16 %v1807, %v1806
      %v1835 = vpack.c.b16 %v1809, %v1808
      %v1836 = vpack.c.b16 %v1811, %v1810
      %v1837 = vpack.c.b16 %v1813, %v1812
      %v1838 = vpack.c.b16 %v1815, %v1814
      %v1839 = vpack.c.b16 %v1817, %v1816
      %v1840 = vpack.c.b16 %v1819, %v1818
      %v1841 = vpack.c.b16 %v1821, %v1820
      %v1842 = vpack.c.b16 %v1823, %v1822
      %v1843 = vpack.c.b16 %v1824, %v1824
      %vm1844 = vsmask.f32 6400
      %v1846 = vshrl.u32 %v1825, 16
      %v1848 = vrot.slane %v1846, 1
      %v1849 = vshll.u32 %v1825, 16
      %v1851 = vrot.slane %v1849, 2
      %v1852 = vor.u32 %v1848, %v1851
      %v1854 = vshrl.u32 %v1826, 16
      %v1856 = vrot.slane %v1854, 1
      %v1857 = vshll.u32 %v1826, 16
      %v1859 = vrot.slane %v1857, 2
      %v1860 = vor.u32 %v1856, %v1859
      %v1861 = vsel %vm1844, %v1852, %v1860
      %v1863 = vshrl.u32 %v1827, 16
      %v1865 = vrot.slane %v1863, 1
      %v1866 = vshll.u32 %v1827, 16
      %v1868 = vrot.slane %v1866, 2
      %v1869 = vor.u32 %v1865, %v1868
      %v1870 = vsel %vm1844, %v1860, %v1869
      %v1872 = vshrl.u32 %v1828, 16
      %v1874 = vrot.slane %v1872, 1
      %v1875 = vshll.u32 %v1828, 16
      %v1877 = vrot.slane %v1875, 2
      %v1878 = vor.u32 %v1874, %v1877
      %v1879 = vsel %vm1844, %v1869, %v1878
      %v1881 = vshrl.u32 %v1829, 16
      %v1883 = vrot.slane %v1881, 1
      %v1884 = vshll.u32 %v1829, 16
      %v1886 = vrot.slane %v1884, 2
      %v1887 = vor.u32 %v1883, %v1886
      %v1888 = vsel %vm1844, %v1878, %v1887
      %v1890 = vshrl.u32 %v1830, 16
      %v1892 = vrot.slane %v1890, 1
      %v1893 = vshll.u32 %v1830, 16
      %v1895 = vrot.slane %v1893, 2
      %v1896 = vor.u32 %v1892, %v1895
      %v1897 = vsel %vm1844, %v1887, %v1896
      %v1899 = vshrl.u32 %v1831, 16
      %v1901 = vrot.slane %v1899, 1
      %v1902 = vshll.u32 %v1831, 16
      %v1904 = vrot.slane %v1902, 2
      %v1905 = vor.u32 %v1901, %v1904
      %v1906 = vsel %vm1844, %v1896, %v1905
      %v1908 = vshrl.u32 %v1832, 16
      %v1910 = vrot.slane %v1908, 1
      %v1911 = vshll.u32 %v1832, 16
      %v1913 = vrot.slane %v1911, 2
      %v1914 = vor.u32 %v1910, %v1913
      %v1915 = vsel %vm1844, %v1905, %v1914
      %v1917 = vshrl.u32 %v1833, 16
      %v1919 = vrot.slane %v1917, 1
      %v1920 = vshll.u32 %v1833, 16
      %v1922 = vrot.slane %v1920, 2
      %v1923 = vor.u32 %v1919, %v1922
      %v1924 = vsel %vm1844, %v1914, %v1923
      %v1926 = vshrl.u32 %v1834, 16
      %v1928 = vrot.slane %v1926, 1
      %v1929 = vshll.u32 %v1834, 16
      %v1931 = vrot.slane %v1929, 2
      %v1932 = vor.u32 %v1928, %v1931
      %v1933 = vsel %vm1844, %v1923, %v1932
      %v1935 = vshrl.u32 %v1835, 16
      %v1937 = vrot.slane %v1935, 1
      %v1938 = vshll.u32 %v1835, 16
      %v1940 = vrot.slane %v1938, 2
      %v1941 = vor.u32 %v1937, %v1940
      %v1942 = vsel %vm1844, %v1932, %v1941
      %v1944 = vshrl.u32 %v1836, 16
      %v1946 = vrot.slane %v1944, 1
      %v1947 = vshll.u32 %v1836, 16
      %v1949 = vrot.slane %v1947, 2
      %v1950 = vor.u32 %v1946, %v1949
      %v1951 = vsel %vm1844, %v1941, %v1950
      %v1953 = vshrl.u32 %v1837, 16
      %v1955 = vrot.slane %v1953, 1
      %v1956 = vshll.u32 %v1837, 16
      %v1958 = vrot.slane %v1956, 2
      %v1959 = vor.u32 %v1955, %v1958
      %v1960 = vsel %vm1844, %v1950, %v1959
      %v1962 = vshrl.u32 %v1838, 16
      %v1964 = vrot.slane %v1962, 1
      %v1965 = vshll.u32 %v1838, 16
      %v1967 = vrot.slane %v1965, 2
      %v1968 = vor.u32 %v1964, %v1967
      %v1969 = vsel %vm1844, %v1959, %v1968
      %v1971 = vshrl.u32 %v1839, 16
      %v1973 = vrot.slane %v1971, 1
      %v1974 = vshll.u32 %v1839, 16
      %v1976 = vrot.slane %v1974, 2
      %v1977 = vor.u32 %v1973, %v1976
      %v1978 = vsel %vm1844, %v1968, %v1977
      %v1980 = vshrl.u32 %v1840, 16
      %v1982 = vrot.slane %v1980, 1
      %v1983 = vshll.u32 %v1840, 16
      %v1985 = vrot.slane %v1983, 2
      %v1986 = vor.u32 %v1982, %v1985
      %v1987 = vsel %vm1844, %v1977, %v1986
      %v1989 = vshrl.u32 %v1841, 16
      %v1991 = vrot.slane %v1989, 1
      %v1992 = vshll.u32 %v1841, 16
      %v1994 = vrot.slane %v1992, 2
      %v1995 = vor.u32 %v1991, %v1994
      %v1996 = vsel %vm1844, %v1986, %v1995
      %v1998 = vshrl.u32 %v1842, 16
      %v2000 = vrot.slane %v1998, 1
      %v2001 = vshll.u32 %v1842, 16
      %v2003 = vrot.slane %v2001, 2
      %v2004 = vor.u32 %v2000, %v2003
      %v2005 = vsel %vm1844, %v1995, %v2004
      %v2007 = vshll.u32 %v1843, 16
      %v2009 = vrot.slane %v2007, 2
      %v2010 = vsel %vm1844, %v2004, %v2009
      %v2012 = vsel %vm511, %v1861, 0
      %v2015 = vsel %vm511, %v1870, 0
      %v2018 = vsel %vm511, %v1879, 0
      %v2021 = vsel %vm511, %v1888, 0
      %v2024 = vsel %vm511, %v1897, 0
      %v2027 = vsel %vm511, %v1906, 0
      %v2030 = vsel %vm511, %v1915, 0
      %v2033 = vsel %vm511, %v1924, 0
      %v2036 = vsel %vm511, %v1933, 0
      %v2039 = vsel %vm511, %v1942, 0
      %v2042 = vsel %vm511, %v1951, 0
      %v2045 = vsel %vm511, %v1960, 0
      %v2048 = vsel %vm511, %v1969, 0
      %v2051 = vsel %vm511, %v1978, 0
      %v2054 = vsel %vm511, %v1987, 0
      %v2057 = vsel %vm511, %v1996, 0
      %v2060 = vsel %vm511, %v2005, 0
      %v2063 = vsel %vm511, %v2010, 0
      %v2066 = vsel %vm566, %v1750, 0
      %2068 = vmatprep.subr.bf16.mxu0 0
      %2069 = vmatpush1.bf16.msra.mxu0 %v2066
      %2070 = vmatprep.subr.bf16.mxu0 0
      %2071 = vmatpush1.bf16.msra.mxu0 0
      %2072 = vmatprep.subr.bf16.mxu0 0
      %2073 = vmatpush1.bf16.msra.mxu0 0
      %2074 = vmatprep.subr.bf16.mxu0 0
      %2075 = vmatpush1.bf16.msra.mxu0 0
      %2076 = vmatprep.subr.bf16.mxu0 0
      %2077 = vmatpush1.bf16.msra.mxu0 0
      %2078 = vmatprep.subr.bf16.mxu0 0
      %2079 = vmatpush1.bf16.msra.mxu0 0
      %2080 = vmatprep.subr.bf16.mxu0 0
      %2081 = vmatpush1.bf16.msra.mxu0 0
      %2082 = vmatprep.subr.bf16.mxu0 0
      %2083 = vmatpush1.bf16.msra.mxu0 0
      %2084 = vmatprep.subr.bf16.mxu0 0
      %2085 = vmatpush1.bf16.msra.mxu0 0
      %2086 = vmatprep.subr.bf16.mxu0 0
      %2087 = vmatpush1.bf16.msra.mxu0 0
      %2088 = vmatprep.subr.bf16.mxu0 0
      %2089 = vmatpush1.bf16.msra.mxu0 0
      %2090 = vmatprep.subr.bf16.mxu0 0
      %2091 = vmatpush1.bf16.msra.mxu0 0
      %2092 = vmatprep.subr.bf16.mxu0 0
      %2093 = vmatpush1.bf16.msra.mxu0 0
      %2094 = vmatprep.subr.bf16.mxu0 0
      %2095 = vmatpush1.bf16.msra.mxu0 0
      %2096 = vmatprep.subr.bf16.mxu0 0
      %2097 = vmatpush1.bf16.msra.mxu0 0
      %2098 = vmatprep.subr.bf16.mxu0 0
      %2099 = vmatpush1.bf16.msra.mxu0 0
      %2100 = vmatprep.mubr.bf16.mxu0 0
      %2101 = vmatmul.mubr.bf16.gmra.mrb[0].mxu0 %v2012
      %v2102 = vpop.f32.mrb[0].mxu0
      %v2103 = vadd.f32 0.0, %v2102
      %v2104 = vpop.f32.mrb[0].mxu0
      %v2105 = vpop.f32.mrb[0].mxu0
      %v2106 = vadd.f32 0.0, %v2105
      %v2107 = vpop.f32.mrb[0].mxu0
      %2108 = vmatprep.mubr.bf16.mxu0 0
      %2109 = vmatmul.mubr.bf16.gmra.mrb[0].mxu0 %v2015
      %v2110 = vpop.f32.mrb[0].mxu0
      %v2111 = vadd.f32 0.0, %v2110
      %v2112 = vpop.f32.mrb[0].mxu0
      %v2113 = vpop.f32.mrb[0].mxu0
      %v2114 = vadd.f32 0.0, %v2113
      %v2115 = vpop.f32.mrb[0].mxu0
      %2116 = vmatprep.mubr.bf16.mxu0 0
      %2117 = vmatmul.mubr.bf16.gmra.mrb[0].mxu0 %v2018
      %v2118 = vpop.f32.mrb[0].mxu0
      %v2119 = vadd.f32 0.0, %v2118
      %v2120 = vpop.f32.mrb[0].mxu0
      %v2121 = vpop.f32.mrb[0].mxu0
      %v2122 = vadd.f32 0.0, %v2121
      %v2123 = vpop.f32.mrb[0].mxu0
      %2124 = vmatprep.mubr.bf16.mxu0 0
      %2125 = vmatmul.mubr.bf16.gmra.mrb[0].mxu0 %v2021
      %v2126 = vpop.f32.mrb[0].mxu0
      %v2127 = vadd.f32 0.0, %v2126
      %v2128 = vpop.f32.mrb[0].mxu0
      %v2129 = vpop.f32.mrb[0].mxu0
      %v2130 = vadd.f32 0.0, %v2129
      %v2131 = vpop.f32.mrb[0].mxu0
      %2132 = vmatprep.mubr.bf16.mxu0 0
      %2133 = vmatmul.mubr.bf16.gmra.mrb[0].mxu0 %v2024
      %v2134 = vpop.f32.mrb[0].mxu0
      %v2135 = vadd.f32 0.0, %v2134
      %v2136 = vpop.f32.mrb[0].mxu0
      %v2137 = vpop.f32.mrb[0].mxu0
      %v2138 = vadd.f32 0.0, %v2137
      %v2139 = vpop.f32.mrb[0].mxu0
      %2140 = vmatprep.mubr.bf16.mxu0 0
      %2141 = vmatmul.mubr.bf16.gmra.mrb[0].mxu0 %v2027
      %v2142 = vpop.f32.mrb[0].mxu0
      %v2143 = vadd.f32 0.0, %v2142
      %v2144 = vpop.f32.mrb[0].mxu0
      %v2145 = vpop.f32.mrb[0].mxu0
      %v2146 = vadd.f32 0.0, %v2145
      %v2147 = vpop.f32.mrb[0].mxu0
      %2148 = vmatprep.mubr.bf16.mxu0 0
      %2149 = vmatmul.mubr.bf16.gmra.mrb[0].mxu0 %v2030
      %v2150 = vpop.f32.mrb[0].mxu0
      %v2151 = vadd.f32 0.0, %v2150
      %v2152 = vpop.f32.mrb[0].mxu0
      %v2153 = vpop.f32.mrb[0].mxu0
      %v2154 = vadd.f32 0.0, %v2153
      %v2155 = vpop.f32.mrb[0].mxu0
      %2156 = vmatprep.mubr.bf16.mxu0 0
      %2157 = vmatmul.mubr.bf16.gmra.mrb[0].mxu0 %v2033
      %v2158 = vpop.f32.mrb[0].mxu0
      %v2159 = vadd.f32 0.0, %v2158
      %v2160 = vpop.f32.mrb[0].mxu0
      %v2161 = vpop.f32.mrb[0].mxu0
      %v2162 = vadd.f32 0.0, %v2161
      %v2163 = vpop.f32.mrb[0].mxu0
      %2164 = vmatprep.mubr.bf16.mxu0 0
      %2165 = vmatmul.mubr.bf16.gmra.mrb[0].mxu0 %v2036
      %v2166 = vpop.f32.mrb[0].mxu0
      %v2167 = vadd.f32 0.0, %v2166
      %v2168 = vpop.f32.mrb[0].mxu0
      %v2169 = vpop.f32.mrb[0].mxu0
      %v2170 = vadd.f32 0.0, %v2169
      %v2171 = vpop.f32.mrb[0].mxu0
      %2172 = vmatprep.mubr.bf16.mxu0 0
      %2173 = vmatmul.mubr.bf16.gmra.mrb[0].mxu0 %v2039
      %v2174 = vpop.f32.mrb[0].mxu0
      %v2175 = vadd.f32 0.0, %v2174
      %v2176 = vpop.f32.mrb[0].mxu0
      %v2177 = vpop.f32.mrb[0].mxu0
      %v2178 = vadd.f32 0.0, %v2177
      %v2179 = vpop.f32.mrb[0].mxu0
      %2180 = vmatprep.mubr.bf16.mxu0 0
      %2181 = vmatmul.mubr.bf16.gmra.mrb[0].mxu0 %v2042
      %v2182 = vpop.f32.mrb[0].mxu0
      %v2183 = vadd.f32 0.0, %v2182
      %v2184 = vpop.f32.mrb[0].mxu0
      %v2185 = vpop.f32.mrb[0].mxu0
      %v2186 = vadd.f32 0.0, %v2185
      %v2187 = vpop.f32.mrb[0].mxu0
      %2188 = vmatprep.mubr.bf16.mxu0 0
      %2189 = vmatmul.mubr.bf16.gmra.mrb[0].mxu0 %v2045
      %v2190 = vpop.f32.mrb[0].mxu0
      %v2191 = vadd.f32 0.0, %v2190
      %v2192 = vpop.f32.mrb[0].mxu0
      %v2193 = vpop.f32.mrb[0].mxu0
      %v2194 = vadd.f32 0.0, %v2193
      %v2195 = vpop.f32.mrb[0].mxu0
      %2196 = vmatprep.mubr.bf16.mxu0 0
      %2197 = vmatmul.mubr.bf16.gmra.mrb[0].mxu0 %v2048
      %v2198 = vpop.f32.mrb[0].mxu0
      %v2199 = vadd.f32 0.0, %v2198
      %v2200 = vpop.f32.mrb[0].mxu0
      %v2201 = vpop.f32.mrb[0].mxu0
      %v2202 = vadd.f32 0.0, %v2201
      %v2203 = vpop.f32.mrb[0].mxu0
      %2204 = vmatprep.mubr.bf16.mxu0 0
      %2205 = vmatmul.mubr.bf16.gmra.mrb[0].mxu0 %v2051
      %v2206 = vpop.f32.mrb[0].mxu0
      %v2207 = vadd.f32 0.0, %v2206
      %v2208 = vpop.f32.mrb[0].mxu0
      %v2209 = vpop.f32.mrb[0].mxu0
      %v2210 = vadd.f32 0.0, %v2209
      %v2211 = vpop.f32.mrb[0].mxu0
      %2212 = vmatprep.mubr.bf16.mxu0 0
      %2213 = vmatmul.mubr.bf16.gmra.mrb[0].mxu0 %v2054
      %v2214 = vpop.f32.mrb[0].mxu0
      %v2215 = vadd.f32 0.0, %v2214
      %v2216 = vpop.f32.mrb[0].mxu0
      %v2217 = vpop.f32.mrb[0].mxu0
      %v2218 = vadd.f32 0.0, %v2217
      %v2219 = vpop.f32.mrb[0].mxu0
      %2220 = vmatprep.mubr.bf16.mxu0 0
      %2221 = vmatmul.mubr.bf16.gmra.mrb[0].mxu0 %v2057
      %v2222 = vpop.f32.mrb[0].mxu0
      %v2223 = vadd.f32 0.0, %v2222
      %v2224 = vpop.f32.mrb[0].mxu0
      %v2225 = vpop.f32.mrb[0].mxu0
      %v2226 = vadd.f32 0.0, %v2225
      %v2227 = vpop.f32.mrb[0].mxu0
      %2228 = vmatprep.mubr.bf16.mxu0 0
      %2229 = vmatmul.mubr.bf16.gmra.mrb[0].mxu0 %v2060
      %v2230 = vpop.f32.mrb[0].mxu0
      %v2231 = vadd.f32 0.0, %v2230
      %v2232 = vpop.f32.mrb[0].mxu0
      %v2233 = vpop.f32.mrb[0].mxu0
      %v2234 = vadd.f32 0.0, %v2233
      %v2235 = vpop.f32.mrb[0].mxu0
      %2236 = vmatprep.mubr.bf16.mxu0 0
      %2237 = vmatmul.mubr.bf16.gmra.mrb[0].mxu0 %v2063
      %v2238 = vpop.f32.mrb[0].mxu0
      %v2239 = vadd.f32 0.0, %v2238
      %v2240 = vpop.f32.mrb[0].mxu0
      %v2241 = vpop.f32.mrb[0].mxu0
      %v2242 = vadd.f32 0.0, %v2241
      %v2243 = vpop.f32.mrb[0].mxu0
      %2244 = vdwg.mxu0
      %v2245 = vadd.f32 %v1676, %v2103
      %v2246 = vadd.f32 %v1677, %v2106
      %v2247 = vadd.f32 %v1678, %v2111
      %v2248 = vadd.f32 %v1679, %v2114
      %v2249 = vadd.f32 %v1680, %v2119
      %v2250 = vadd.f32 %v1681, %v2122
      %v2251 = vadd.f32 %v1682, %v2127
      %v2252 = vadd.f32 %v1683, %v2130
      %v2253 = vadd.f32 %v1684, %v2135
      %v2254 = vadd.f32 %v1685, %v2138
      %v2255 = vadd.f32 %v1686, %v2143
      %v2256 = vadd.f32 %v1687, %v2146
      %v2257 = vadd.f32 %v1688, %v2151
      %v2258 = vadd.f32 %v1689, %v2154
      %v2259 = vadd.f32 %v1690, %v2159
      %v2260 = vadd.f32 %v1691, %v2162
      %v2261 = vadd.f32 %v1692, %v2167
      %v2262 = vadd.f32 %v1693, %v2170
      %v2263 = vadd.f32 %v1694, %v2175
      %v2264 = vadd.f32 %v1695, %v2178
      %v2265 = vadd.f32 %v1696, %v2183
      %v2266 = vadd.f32 %v1697, %v2186
      %v2267 = vadd.f32 %v1698, %v2191
      %v2268 = vadd.f32 %v1699, %v2194
      %v2269 = vadd.f32 %v1700, %v2199
      %v2270 = vadd.f32 %v1701, %v2202
      %v2271 = vadd.f32 %v1702, %v2207
      %v2272 = vadd.f32 %v1703, %v2210
      %v2273 = vadd.f32 %v1704, %v2215
      %v2274 = vadd.f32 %v1705, %v2218
      %v2275 = vadd.f32 %v1706, %v2223
      %v2276 = vadd.f32 %v1707, %v2226
      %v2277 = vadd.f32 %v1708, %v2231
      %v2278 = vadd.f32 %v1709, %v2234
      %v2279 = vadd.f32 %v1710, %v2239
      %v2280 = vadd.f32 %v1711, %v2242
      %v2281 = vld [vmem:[%s226 + $0x8] sm:$0xc]
      %s2282 = scalar_lea.vmem %s1, 10
      %v2283 = vld [vmem:[%s2282] sm:$0x3]
      %v2285 = vunpack.c.l.b16 %v2281
      %v2286 = vpack.c.b16 %v1789, %v2285
      %vm2287 = vcmask 1045504
      %v2288 = vrot.slane %v2286, 2
      %v2289 = vrot.slane %v1826, 2
      %v2290 = vsel %vm2287, %v2288, %v2289
      %v2291 = vrot.slane %v1827, 2
      %v2292 = vsel %vm2287, %v2289, %v2291
      %v2293 = vrot.slane %v1828, 2
      %v2294 = vsel %vm2287, %v2291, %v2293
      %v2295 = vrot.slane %v1829, 2
      %v2296 = vsel %vm2287, %v2293, %v2295
      %v2297 = vrot.slane %v1830, 2
      %v2298 = vsel %vm2287, %v2295, %v2297
      %v2299 = vrot.slane %v1831, 2
      %v2300 = vsel %vm2287, %v2297, %v2299
      %v2301 = vrot.slane %v1832, 2
      %v2302 = vsel %vm2287, %v2299, %v2301
      %v2303 = vrot.slane %v1833, 2
      %v2304 = vsel %vm2287, %v2301, %v2303
      %v2305 = vrot.slane %v1834, 2
      %v2306 = vsel %vm2287, %v2303, %v2305
      %v2307 = vrot.slane %v1835, 2
      %v2308 = vsel %vm2287, %v2305, %v2307
      %v2309 = vrot.slane %v1836, 2
      %v2310 = vsel %vm2287, %v2307, %v2309
      %v2311 = vrot.slane %v1837, 2
      %v2312 = vsel %vm2287, %v2309, %v2311
      %v2313 = vrot.slane %v1838, 2
      %v2314 = vsel %vm2287, %v2311, %v2313
      %v2315 = vrot.slane %v1839, 2
      %v2316 = vsel %vm2287, %v2313, %v2315
      %v2317 = vrot.slane %v1840, 2
      %v2318 = vsel %vm2287, %v2315, %v2317
      %v2319 = vrot.slane %v1841, 2
      %v2320 = vsel %vm2287, %v2317, %v2319
      %v2321 = vrot.slane %v1842, 2
      %v2322 = vsel %vm2287, %v2319, %v2321
      %v2323 = vrot.slane %v1843, 2
      %v2324 = vsel %vm2287, %v2321, %v2323
      %v2326 = vsel %vm511, %v2290, 0
      %v2329 = vsel %vm511, %v2292, 0
      %v2332 = vsel %vm511, %v2294, 0
      %v2335 = vsel %vm511, %v2296, 0
      %v2338 = vsel %vm511, %v2298, 0
      %v2341 = vsel %vm511, %v2300, 0
      %v2344 = vsel %vm511, %v2302, 0
      %v2347 = vsel %vm511, %v2304, 0
      %v2350 = vsel %vm511, %v2306, 0
      %v2353 = vsel %vm511, %v2308, 0
      %v2356 = vsel %vm511, %v2310, 0
      %v2359 = vsel %vm511, %v2312, 0
      %v2362 = vsel %vm511, %v2314, 0
      %v2365 = vsel %vm511, %v2316, 0
      %v2368 = vsel %vm511, %v2318, 0
      %v2371 = vsel %vm511, %v2320, 0
      %v2374 = vsel %vm511, %v2322, 0
      %v2377 = vsel %vm511, %v2324, 0
      %v2380 = vsel %vm566, %v2283, 0
      %2382 = vmatprep.subr.bf16.mxu0 0
      %2383 = vmatpush1.bf16.msra.mxu0 %v2380
      %2384 = vmatprep.subr.bf16.mxu0 0
      %2385 = vmatpush1.bf16.msra.mxu0 0
      %2386 = vmatprep.subr.bf16.mxu0 0
      %2387 = vmatpush1.bf16.msra.mxu0 0
      %2388 = vmatprep.subr.bf16.mxu0 0
      %2389 = vmatpush1.bf16.msra.mxu0 0
      %2390 = vmatprep.subr.bf16.mxu0 0
      %2391 = vmatpush1.bf16.msra.mxu0 0
      %2392 = vmatprep.subr.bf16.mxu0 0
      %2393 = vmatpush1.bf16.msra.mxu0 0
      %2394 = vmatprep.subr.bf16.mxu0 0
      %2395 = vmatpush1.bf16.msra.mxu0 0
      %2396 = vmatprep.subr.bf16.mxu0 0
      %2397 = vmatpush1.bf16.msra.mxu0 0
      %2398 = vmatprep.subr.bf16.mxu0 0
      %2399 = vmatpush1.bf16.msra.mxu0 0
      %2400 = vmatprep.subr.bf16.mxu0 0
      %2401 = vmatpush1.bf16.msra.mxu0 0
      %2402 = vmatprep.subr.bf16.mxu0 0
      %2403 = vmatpush1.bf16.msra.mxu0 0
      %2404 = vmatprep.subr.bf16.mxu0 0
      %2405 = vmatpush1.bf16.msra.mxu0 0
      %2406 = vmatprep.subr.bf16.mxu0 0
      %2407 = vmatpush1.bf16.msra.mxu0 0
      %2408 = vmatprep.subr.bf16.mxu0 0
      %2409 = vmatpush1.bf16.msra.mxu0 0
      %2410 = vmatprep.subr.bf16.mxu0 0
      %2411 = vmatpush1.bf16.msra.mxu0 0
      %2412 = vmatprep.subr.bf16.mxu0 0
      %2413 = vmatpush1.bf16.msra.mxu0 0
      %2414 = vmatprep.mubr.bf16.mxu0 0
      %2415 = vmatmul.mubr.bf16.gmra.mrb[0].mxu0 %v2326
      %v2416 = vpop.f32.mrb[0].mxu0
      %v2417 = vadd.f32 0.0, %v2416
      %v2418 = vpop.f32.mrb[0].mxu0
      %v2419 = vpop.f32.mrb[0].mxu0
      %v2420 = vadd.f32 0.0, %v2419
      %v2421 = vpop.f32.mrb[0].mxu0
      %2422 = vmatprep.mubr.bf16.mxu0 0
      %2423 = vmatmul.mubr.bf16.gmra.mrb[0].mxu0 %v2329
      %v2424 = vpop.f32.mrb[0].mxu0
      %v2425 = vadd.f32 0.0, %v2424
      %v2426 = vpop.f32.mrb[0].mxu0
      %v2427 = vpop.f32.mrb[0].mxu0
      %v2428 = vadd.f32 0.0, %v2427
      %v2429 = vpop.f32.mrb[0].mxu0
      %2430 = vmatprep.mubr.bf16.mxu0 0
      %2431 = vmatmul.mubr.bf16.gmra.mrb[0].mxu0 %v2332
      %v2432 = vpop.f32.mrb[0].mxu0
      %v2433 = vadd.f32 0.0, %v2432
      %v2434 = vpop.f32.mrb[0].mxu0
      %v2435 = vpop.f32.mrb[0].mxu0
      %v2436 = vadd.f32 0.0, %v2435
      %v2437 = vpop.f32.mrb[0].mxu0
      %2438 = vmatprep.mubr.bf16.mxu0 0
      %2439 = vmatmul.mubr.bf16.gmra.mrb[0].mxu0 %v2335
      %v2440 = vpop.f32.mrb[0].mxu0
      %v2441 = vadd.f32 0.0, %v2440
      %v2442 = vpop.f32.mrb[0].mxu0
      %v2443 = vpop.f32.mrb[0].mxu0
      %v2444 = vadd.f32 0.0, %v2443
      %v2445 = vpop.f32.mrb[0].mxu0
      %2446 = vmatprep.mubr.bf16.mxu0 0
      %2447 = vmatmul.mubr.bf16.gmra.mrb[0].mxu0 %v2338
      %v2448 = vpop.f32.mrb[0].mxu0
      %v2449 = vadd.f32 0.0, %v2448
      %v2450 = vpop.f32.mrb[0].mxu0
      %v2451 = vpop.f32.mrb[0].mxu0
      %v2452 = vadd.f32 0.0, %v2451
      %v2453 = vpop.f32.mrb[0].mxu0
      %2454 = vmatprep.mubr.bf16.mxu0 0
      %2455 = vmatmul.mubr.bf16.gmra.mrb[0].mxu0 %v2341
      %v2456 = vpop.f32.mrb[0].mxu0
      %v2457 = vadd.f32 0.0, %v2456
      %v2458 = vpop.f32.mrb[0].mxu0
      %v2459 = vpop.f32.mrb[0].mxu0
      %v2460 = vadd.f32 0.0, %v2459
      %v2461 = vpop.f32.mrb[0].mxu0
      %2462 = vmatprep.mubr.bf16.mxu0 0
      %2463 = vmatmul.mubr.bf16.gmra.mrb[0].mxu0 %v2344
      %v2464 = vpop.f32.mrb[0].mxu0
      %v2465 = vadd.f32 0.0, %v2464
      %v2466 = vpop.f32.mrb[0].mxu0
      %v2467 = vpop.f32.mrb[0].mxu0
      %v2468 = vadd.f32 0.0, %v2467
      %v2469 = vpop.f32.mrb[0].mxu0
      %2470 = vmatprep.mubr.bf16.mxu0 0
      %2471 = vmatmul.mubr.bf16.gmra.mrb[0].mxu0 %v2347
      %v2472 = vpop.f32.mrb[0].mxu0
      %v2473 = vadd.f32 0.0, %v2472
      %v2474 = vpop.f32.mrb[0].mxu0
      %v2475 = vpop.f32.mrb[0].mxu0
      %v2476 = vadd.f32 0.0, %v2475
      %v2477 = vpop.f32.mrb[0].mxu0
      %2478 = vmatprep.mubr.bf16.mxu0 0
      %2479 = vmatmul.mubr.bf16.gmra.mrb[0].mxu0 %v2350
      %v2480 = vpop.f32.mrb[0].mxu0
      %v2481 = vadd.f32 0.0, %v2480
      %v2482 = vpop.f32.mrb[0].mxu0
      %v2483 = vpop.f32.mrb[0].mxu0
      %v2484 = vadd.f32 0.0, %v2483
      %v2485 = vpop.f32.mrb[0].mxu0
      %2486 = vmatprep.mubr.bf16.mxu0 0
      %2487 = vmatmul.mubr.bf16.gmra.mrb[0].mxu0 %v2353
      %v2488 = vpop.f32.mrb[0].mxu0
      %v2489 = vadd.f32 0.0, %v2488
      %v2490 = vpop.f32.mrb[0].mxu0
      %v2491 = vpop.f32.mrb[0].mxu0
      %v2492 = vadd.f32 0.0, %v2491
      %v2493 = vpop.f32.mrb[0].mxu0
      %2494 = vmatprep.mubr.bf16.mxu0 0
      %2495 = vmatmul.mubr.bf16.gmra.mrb[0].mxu0 %v2356
      %v2496 = vpop.f32.mrb[0].mxu0
      %v2497 = vadd.f32 0.0, %v2496
      %v2498 = vpop.f32.mrb[0].mxu0
      %v2499 = vpop.f32.mrb[0].mxu0
      %v2500 = vadd.f32 0.0, %v2499
      %v2501 = vpop.f32.mrb[0].mxu0
      %2502 = vmatprep.mubr.bf16.mxu0 0
      %2503 = vmatmul.mubr.bf16.gmra.mrb[0].mxu0 %v2359
      %v2504 = vpop.f32.mrb[0].mxu0
      %v2505 = vadd.f32 0.0, %v2504
      %v2506 = vpop.f32.mrb[0].mxu0
      %v2507 = vpop.f32.mrb[0].mxu0
      %v2508 = vadd.f32 0.0, %v2507
      %v2509 = vpop.f32.mrb[0].mxu0
      %2510 = vmatprep.mubr.bf16.mxu0 0
      %2511 = vmatmul.mubr.bf16.gmra.mrb[0].mxu0 %v2362
      %v2512 = vpop.f32.mrb[0].mxu0
      %v2513 = vadd.f32 0.0, %v2512
      %v2514 = vpop.f32.mrb[0].mxu0
      %v2515 = vpop.f32.mrb[0].mxu0
      %v2516 = vadd.f32 0.0, %v2515
      %v2517 = vpop.f32.mrb[0].mxu0
      %2518 = vmatprep.mubr.bf16.mxu0 0
      %2519 = vmatmul.mubr.bf16.gmra.mrb[0].mxu0 %v2365
      %v2520 = vpop.f32.mrb[0].mxu0
      %v2521 = vadd.f32 0.0, %v2520
      %v2522 = vpop.f32.mrb[0].mxu0
      %v2523 = vpop.f32.mrb[0].mxu0
      %v2524 = vadd.f32 0.0, %v2523
      %v2525 = vpop.f32.mrb[0].mxu0
      %2526 = vmatprep.mubr.bf16.mxu0 0
      %2527 = vmatmul.mubr.bf16.gmra.mrb[0].mxu0 %v2368
      %v2528 = vpop.f32.mrb[0].mxu0
      %v2529 = vadd.f32 0.0, %v2528
      %v2530 = vpop.f32.mrb[0].mxu0
      %v2531 = vpop.f32.mrb[0].mxu0
      %v2532 = vadd.f32 0.0, %v2531
      %v2533 = vpop.f32.mrb[0].mxu0
      %2534 = vmatprep.mubr.bf16.mxu0 0
      %2535 = vmatmul.mubr.bf16.gmra.mrb[0].mxu0 %v2371
      %v2536 = vpop.f32.mrb[0].mxu0
      %v2537 = vadd.f32 0.0, %v2536
      %v2538 = vpop.f32.mrb[0].mxu0
      %v2539 = vpop.f32.mrb[0].mxu0
      %v2540 = vadd.f32 0.0, %v2539
      %v2541 = vpop.f32.mrb[0].mxu0
      %2542 = vmatprep.mubr.bf16.mxu0 0
      %2543 = vmatmul.mubr.bf16.gmra.mrb[0].mxu0 %v2374
      %v2544 = vpop.f32.mrb[0].mxu0
      %v2545 = vadd.f32 0.0, %v2544
      %v2546 = vpop.f32.mrb[0].mxu0
      %v2547 = vpop.f32.mrb[0].mxu0
      %v2548 = vadd.f32 0.0, %v2547
      %v2549 = vpop.f32.mrb[0].mxu0
      %2550 = vmatprep.mubr.bf16.mxu0 0
      %2551 = vmatmul.mubr.bf16.gmra.mrb[0].mxu0 %v2377
      %v2552 = vpop.f32.mrb[0].mxu0
      %v2553 = vadd.f32 0.0, %v2552
      %v2554 = vpop.f32.mrb[0].mxu0
      %v2555 = vpop.f32.mrb[0].mxu0
      %v2556 = vadd.f32 0.0, %v2555
      %v2557 = vpop.f32.mrb[0].mxu0
      %2558 = vdwg.mxu0
      %v2559 = vadd.f32 %v2245, %v2417
      %v2560 = vadd.f32 %v2246, %v2420
      %v2561 = vadd.f32 %v2247, %v2425
      %v2562 = vadd.f32 %v2248, %v2428
      %v2563 = vadd.f32 %v2249, %v2433
      %v2564 = vadd.f32 %v2250, %v2436
      %v2565 = vadd.f32 %v2251, %v2441
      %v2566 = vadd.f32 %v2252, %v2444
      %v2567 = vadd.f32 %v2253, %v2449
      %v2568 = vadd.f32 %v2254, %v2452
      %v2569 = vadd.f32 %v2255, %v2457
      %v2570 = vadd.f32 %v2256, %v2460
      %v2571 = vadd.f32 %v2257, %v2465
      %v2572 = vadd.f32 %v2258, %v2468
      %v2573 = vadd.f32 %v2259, %v2473
      %v2574 = vadd.f32 %v2260, %v2476
      %v2575 = vadd.f32 %v2261, %v2481
      %v2576 = vadd.f32 %v2262, %v2484
      %v2577 = vadd.f32 %v2263, %v2489
      %v2578 = vadd.f32 %v2264, %v2492
      %v2579 = vadd.f32 %v2265, %v2497
      %v2580 = vadd.f32 %v2266, %v2500
      %v2581 = vadd.f32 %v2267, %v2505
      %v2582 = vadd.f32 %v2268, %v2508
      %v2583 = vadd.f32 %v2269, %v2513
      %v2584 = vadd.f32 %v2270, %v2516
      %v2585 = vadd.f32 %v2271, %v2521
      %v2586 = vadd.f32 %v2272, %v2524
      %v2587 = vadd.f32 %v2273, %v2529
      %v2588 = vadd.f32 %v2274, %v2532
      %v2589 = vadd.f32 %v2275, %v2537
      %v2590 = vadd.f32 %v2276, %v2540
      %v2591 = vadd.f32 %v2277, %v2545
      %v2592 = vadd.f32 %v2278, %v2548
      %v2593 = vadd.f32 %v2279, %v2553
      %v2594 = vadd.f32 %v2280, %v2556
      %v2595 = vld [vmem:[%s226 + $0x10] sm:$0xc]
      %v2596 = vld [vmem:[%s226 + $0x14] sm:$0xf]
      %v2597 = vld [vmem:[%s226 + $0x18] sm:$0xf]
      %v2598 = vld [vmem:[%s226 + $0x1c] sm:$0xf]
      %v2599 = vld [vmem:[%s226 + $0x20] sm:$0xf]
      %v2600 = vld [vmem:[%s226 + $0x24] sm:$0xf]
      %v2601 = vld [vmem:[%s226 + $0x28] sm:$0xf]
      %v2602 = vld [vmem:[%s226 + $0x2c] sm:$0xf]
      %v2603 = vld [vmem:[%s226 + $0x30] sm:$0xf]
      %v2604 = vld [vmem:[%s226 + $0x34] sm:$0xf]
      %v2605 = vld [vmem:[%s226 + $0x38] sm:$0xf]
      %v2606 = vld [vmem:[%s226 + $0x3c] sm:$0xf]
      %v2607 = vld [vmem:[%s226 + $0x40] sm:$0xf]
      %v2608 = vld [vmem:[%s226 + $0x44] sm:$0xf]
      %v2609 = vld [vmem:[%s226 + $0x48] sm:$0xf]
      %v2610 = vld [vmem:[%s226 + $0x4c] sm:$0xf]
      %v2611 = vld [vmem:[%s226 + $0x50] sm:$0xf]
      %v2612 = vld [vmem:[%s226 + $0x54] sm:$0xf]
      %v2613 = vld [vmem:[%s226 + $0x58] sm:$0xf]
      %v2614 = vld [vmem:[%s226 + $0x5c] sm:$0xf]
      %v2615 = vld [vmem:[%s226 + $0x60] sm:$0xf]
      %v2616 = vld [vmem:[%s226 + $0x64] sm:$0xf]
      %v2617 = vld [vmem:[%s226 + $0x68] sm:$0xf]
      %v2618 = vld [vmem:[%s226 + $0x6c] sm:$0xf]
      %v2619 = vld [vmem:[%s226 + $0x70] sm:$0xf]
      %v2620 = vld [vmem:[%s226 + $0x74] sm:$0xf]
      %v2621 = vld [vmem:[%s226 + $0x78] sm:$0xf]
      %v2622 = vld [vmem:[%s226 + $0x7c] sm:$0xf]
      %v2623 = vld [vmem:[%s226 + $0x80] sm:$0xf]
      %v2624 = vld [vmem:[%s226 + $0x84] sm:$0xf]
      %v2625 = vld [vmem:[%s226 + $0x88] sm:$0xf]
      %v2626 = vld [vmem:[%s226 + $0x8c] sm:$0xf]
      %v2627 = vld [vmem:[%s226 + $0x90] sm:$0xf]
      %v2628 = vld [vmem:[%s226 + $0x94] sm:$0xf]
      %v2629 = vld [vmem:[%s226 + $0x98] sm:$0xf]
      %v2630 = vld [vmem:[%s226 + $0x9c] sm:$0xf]
      %v2631 = vld [vmem:[%s226 + $0xa0] sm:$0x1]
      %s2632 = scalar_lea.vmem %s1, 12
      %v2633 = vld [vmem:[%s2632] sm:$0x3]
      %v2671 = vunpack.c.l.b16 %v2595
      %v2672 = vunpack.c.l.b16 %v2596
      %v2673 = vunpack.c.l.b16 %v2597
      %v2674 = vunpack.c.l.b16 %v2598
      %v2675 = vunpack.c.l.b16 %v2599
      %v2676 = vunpack.c.l.b16 %v2600
      %v2677 = vunpack.c.l.b16 %v2601
      %v2678 = vunpack.c.l.b16 %v2602
      %v2679 = vunpack.c.l.b16 %v2603
      %v2680 = vunpack.c.l.b16 %v2604
      %v2681 = vunpack.c.l.b16 %v2605
      %v2682 = vunpack.c.l.b16 %v2606
      %v2683 = vunpack.c.l.b16 %v2607
      %v2684 = vunpack.c.l.b16 %v2608
      %v2685 = vunpack.c.l.b16 %v2609
      %v2686 = vunpack.c.l.b16 %v2610
      %v2687 = vunpack.c.l.b16 %v2611
      %v2688 = vunpack.c.l.b16 %v2612
      %v2689 = vunpack.c.l.b16 %v2613
      %v2690 = vunpack.c.l.b16 %v2614
      %v2691 = vunpack.c.l.b16 %v2615
      %v2692 = vunpack.c.l.b16 %v2616
      %v2693 = vunpack.c.l.b16 %v2617
      %v2694 = vunpack.c.l.b16 %v2618
      %v2695 = vunpack.c.l.b16 %v2619
      %v2696 = vunpack.c.l.b16 %v2620
      %v2697 = vunpack.c.l.b16 %v2621
      %v2698 = vunpack.c.l.b16 %v2622
      %v2699 = vunpack.c.l.b16 %v2623
      %v2700 = vunpack.c.l.b16 %v2624
      %v2701 = vunpack.c.l.b16 %v2625
      %v2702 = vunpack.c.l.b16 %v2626
      %v2703 = vunpack.c.l.b16 %v2627
      %v2704 = vunpack.c.l.b16 %v2628
      %v2705 = vunpack.c.l.b16 %v2629
      %v2706 = vunpack.c.l.b16 %v2630
      %v2707 = vunpack.c.l.b16 %v2631
      %v2708 = vpack.c.b16 %v2672, %v2671
      %v2709 = vpack.c.b16 %v2674, %v2673
      %v2710 = vpack.c.b16 %v2676, %v2675
      %v2711 = vpack.c.b16 %v2678, %v2677
      %v2712 = vpack.c.b16 %v2680, %v2679
      %v2713 = vpack.c.b16 %v2682, %v2681
      %v2714 = vpack.c.b16 %v2684, %v2683
      %v2715 = vpack.c.b16 %v2686, %v2685
      %v2716 = vpack.c.b16 %v2688, %v2687
      %v2717 = vpack.c.b16 %v2690, %v2689
      %v2718 = vpack.c.b16 %v2692, %v2691
      %v2719 = vpack.c.b16 %v2694, %v2693
      %v2720 = vpack.c.b16 %v2696, %v2695
      %v2721 = vpack.c.b16 %v2698, %v2697
      %v2722 = vpack.c.b16 %v2700, %v2699
      %v2723 = vpack.c.b16 %v2702, %v2701
      %v2724 = vpack.c.b16 %v2704, %v2703
      %v2725 = vpack.c.b16 %v2706, %v2705
      %v2726 = vpack.c.b16 %v2707, %v2707
      %v2727 = vrot.slane %v2708, 2
      %v2728 = vrot.slane %v2709, 2
      %v2729 = vsel %vm2287, %v2727, %v2728
      %v2730 = vrot.slane %v2710, 2
      %v2731 = vsel %vm2287, %v2728, %v2730
      %v2732 = vrot.slane %v2711, 2
      %v2733 = vsel %vm2287, %v2730, %v2732
      %v2734 = vrot.slane %v2712, 2
      %v2735 = vsel %vm2287, %v2732, %v2734
      %v2736 = vrot.slane %v2713, 2
      %v2737 = vsel %vm2287, %v2734, %v2736
      %v2738 = vrot.slane %v2714, 2
      %v2739 = vsel %vm2287, %v2736, %v2738
      %v2740 = vrot.slane %v2715, 2
      %v2741 = vsel %vm2287, %v2738, %v2740
      %v2742 = vrot.slane %v2716, 2
      %v2743 = vsel %vm2287, %v2740, %v2742
      %v2744 = vrot.slane %v2717, 2
      %v2745 = vsel %vm2287, %v2742, %v2744
      %v2746 = vrot.slane %v2718, 2
      %v2747 = vsel %vm2287, %v2744, %v2746
      %v2748 = vrot.slane %v2719, 2
      %v2749 = vsel %vm2287, %v2746, %v2748
      %v2750 = vrot.slane %v2720, 2
      %v2751 = vsel %vm2287, %v2748, %v2750
      %v2752 = vrot.slane %v2721, 2
      %v2753 = vsel %vm2287, %v2750, %v2752
      %v2754 = vrot.slane %v2722, 2
      %v2755 = vsel %vm2287, %v2752, %v2754
      %v2756 = vrot.slane %v2723, 2
      %v2757 = vsel %vm2287, %v2754, %v2756
      %v2758 = vrot.slane %v2724, 2
      %v2759 = vsel %vm2287, %v2756, %v2758
      %v2760 = vrot.slane %v2725, 2
      %v2761 = vsel %vm2287, %v2758, %v2760
      %v2762 = vrot.slane %v2726, 2
      %v2763 = vsel %vm2287, %v2760, %v2762
      %v2765 = vsel %vm511, %v2729, 0
      %v2768 = vsel %vm511, %v2731, 0
      %v2771 = vsel %vm511, %v2733, 0
      %v2774 = vsel %vm511, %v2735, 0
      %v2777 = vsel %vm511, %v2737, 0
      %v2780 = vsel %vm511, %v2739, 0
      %v2783 = vsel %vm511, %v2741, 0
      %v2786 = vsel %vm511, %v2743, 0
      %v2789 = vsel %vm511, %v2745, 0
      %v2792 = vsel %vm511, %v2747, 0
      %v2795 = vsel %vm511, %v2749, 0
      %v2798 = vsel %vm511, %v2751, 0
      %v2801 = vsel %vm511, %v2753, 0
      %v2804 = vsel %vm511, %v2755, 0
      %v2807 = vsel %vm511, %v2757, 0
      %v2810 = vsel %vm511, %v2759, 0
      %v2813 = vsel %vm511, %v2761, 0
      %v2816 = vsel %vm511, %v2763, 0
      %v2819 = vsel %vm566, %v2633, 0
      %2821 = vmatprep.subr.bf16.mxu0 0
      %2822 = vmatpush1.bf16.msra.mxu0 %v2819
      %2823 = vmatprep.subr.bf16.mxu0 0
      %2824 = vmatpush1.bf16.msra.mxu0 0
      %2825 = vmatprep.subr.bf16.mxu0 0
      %2826 = vmatpush1.bf16.msra.mxu0 0
      %2827 = vmatprep.subr.bf16.mxu0 0
      %2828 = vmatpush1.bf16.msra.mxu0 0
      %2829 = vmatprep.subr.bf16.mxu0 0
      %2830 = vmatpush1.bf16.msra.mxu0 0
      %2831 = vmatprep.subr.bf16.mxu0 0
      %2832 = vmatpush1.bf16.msra.mxu0 0
      %2833 = vmatprep.subr.bf16.mxu0 0
      %2834 = vmatpush1.bf16.msra.mxu0 0
      %2835 = vmatprep.subr.bf16.mxu0 0
      %2836 = vmatpush1.bf16.msra.mxu0 0
      %2837 = vmatprep.subr.bf16.mxu0 0
      %2838 = vmatpush1.bf16.msra.mxu0 0
      %2839 = vmatprep.subr.bf16.mxu0 0
      %2840 = vmatpush1.bf16.msra.mxu0 0
      %2841 = vmatprep.subr.bf16.mxu0 0
      %2842 = vmatpush1.bf16.msra.mxu0 0
      %2843 = vmatprep.subr.bf16.mxu0 0
      %2844 = vmatpush1.bf16.msra.mxu0 0
      %2845 = vmatprep.subr.bf16.mxu0 0
      %2846 = vmatpush1.bf16.msra.mxu0 0
      %2847 = vmatprep.subr.bf16.mxu0 0
      %2848 = vmatpush1.bf16.msra.mxu0 0
      %2849 = vmatprep.subr.bf16.mxu0 0
      %2850 = vmatpush1.bf16.msra.mxu0 0
      %2851 = vmatprep.subr.bf16.mxu0 0
      %2852 = vmatpush1.bf16.msra.mxu0 0
      %2853 = vmatprep.mubr.bf16.mxu0 0
      %2854 = vmatmul.mubr.bf16.gmra.mrb[0].mxu0 %v2765
      %v2855 = vpop.f32.mrb[0].mxu0
      %v2856 = vadd.f32 0.0, %v2855
      %v2857 = vpop.f32.mrb[0].mxu0
      %v2858 = vpop.f32.mrb[0].mxu0
      %v2859 = vadd.f32 0.0, %v2858
      %v2860 = vpop.f32.mrb[0].mxu0
      %2861 = vmatprep.mubr.bf16.mxu0 0
      %2862 = vmatmul.mubr.bf16.gmra.mrb[0].mxu0 %v2768
      %v2863 = vpop.f32.mrb[0].mxu0
      %v2864 = vadd.f32 0.0, %v2863
      %v2865 = vpop.f32.mrb[0].mxu0
      %v2866 = vpop.f32.mrb[0].mxu0
      %v2867 = vadd.f32 0.0, %v2866
      %v2868 = vpop.f32.mrb[0].mxu0
      %2869 = vmatprep.mubr.bf16.mxu0 0
      %2870 = vmatmul.mubr.bf16.gmra.mrb[0].mxu0 %v2771
      %v2871 = vpop.f32.mrb[0].mxu0
      %v2872 = vadd.f32 0.0, %v2871
      %v2873 = vpop.f32.mrb[0].mxu0
      %v2874 = vpop.f32.mrb[0].mxu0
      %v2875 = vadd.f32 0.0, %v2874
      %v2876 = vpop.f32.mrb[0].mxu0
      %2877 = vmatprep.mubr.bf16.mxu0 0
      %2878 = vmatmul.mubr.bf16.gmra.mrb[0].mxu0 %v2774
      %v2879 = vpop.f32.mrb[0].mxu0
      %v2880 = vadd.f32 0.0, %v2879
      %v2881 = vpop.f32.mrb[0].mxu0
      %v2882 = vpop.f32.mrb[0].mxu0
      %v2883 = vadd.f32 0.0, %v2882
      %v2884 = vpop.f32.mrb[0].mxu0
      %2885 = vmatprep.mubr.bf16.mxu0 0
      %2886 = vmatmul.mubr.bf16.gmra.mrb[0].mxu0 %v2777
      %v2887 = vpop.f32.mrb[0].mxu0
      %v2888 = vadd.f32 0.0, %v2887
      %v2889 = vpop.f32.mrb[0].mxu0
      %v2890 = vpop.f32.mrb[0].mxu0
      %v2891 = vadd.f32 0.0, %v2890
      %v2892 = vpop.f32.mrb[0].mxu0
      %2893 = vmatprep.mubr.bf16.mxu0 0
      %2894 = vmatmul.mubr.bf16.gmra.mrb[0].mxu0 %v2780
      %v2895 = vpop.f32.mrb[0].mxu0
      %v2896 = vadd.f32 0.0, %v2895
      %v2897 = vpop.f32.mrb[0].mxu0
      %v2898 = vpop.f32.mrb[0].mxu0
      %v2899 = vadd.f32 0.0, %v2898
      %v2900 = vpop.f32.mrb[0].mxu0
      %2901 = vmatprep.mubr.bf16.mxu0 0
      %2902 = vmatmul.mubr.bf16.gmra.mrb[0].mxu0 %v2783
      %v2903 = vpop.f32.mrb[0].mxu0
      %v2904 = vadd.f32 0.0, %v2903
      %v2905 = vpop.f32.mrb[0].mxu0
      %v2906 = vpop.f32.mrb[0].mxu0
      %v2907 = vadd.f32 0.0, %v2906
      %v2908 = vpop.f32.mrb[0].mxu0
      %2909 = vmatprep.mubr.bf16.mxu0 0
      %2910 = vmatmul.mubr.bf16.gmra.mrb[0].mxu0 %v2786
      %v2911 = vpop.f32.mrb[0].mxu0
      %v2912 = vadd.f32 0.0, %v2911
      %v2913 = vpop.f32.mrb[0].mxu0
      %v2914 = vpop.f32.mrb[0].mxu0
      %v2915 = vadd.f32 0.0, %v2914
      %v2916 = vpop.f32.mrb[0].mxu0
      %2917 = vmatprep.mubr.bf16.mxu0 0
      %2918 = vmatmul.mubr.bf16.gmra.mrb[0].mxu0 %v2789
      %v2919 = vpop.f32.mrb[0].mxu0
      %v2920 = vadd.f32 0.0, %v2919
      %v2921 = vpop.f32.mrb[0].mxu0
      %v2922 = vpop.f32.mrb[0].mxu0
      %v2923 = vadd.f32 0.0, %v2922
      %v2924 = vpop.f32.mrb[0].mxu0
      %2925 = vmatprep.mubr.bf16.mxu0 0
      %2926 = vmatmul.mubr.bf16.gmra.mrb[0].mxu0 %v2792
      %v2927 = vpop.f32.mrb[0].mxu0
      %v2928 = vadd.f32 0.0, %v2927
      %v2929 = vpop.f32.mrb[0].mxu0
      %v2930 = vpop.f32.mrb[0].mxu0
      %v2931 = vadd.f32 0.0, %v2930
      %v2932 = vpop.f32.mrb[0].mxu0
      %2933 = vmatprep.mubr.bf16.mxu0 0
      %2934 = vmatmul.mubr.bf16.gmra.mrb[0].mxu0 %v2795
      %v2935 = vpop.f32.mrb[0].mxu0
      %v2936 = vadd.f32 0.0, %v2935
      %v2937 = vpop.f32.mrb[0].mxu0
      %v2938 = vpop.f32.mrb[0].mxu0
      %v2939 = vadd.f32 0.0, %v2938
      %v2940 = vpop.f32.mrb[0].mxu0
      %2941 = vmatprep.mubr.bf16.mxu0 0
      %2942 = vmatmul.mubr.bf16.gmra.mrb[0].mxu0 %v2798
      %v2943 = vpop.f32.mrb[0].mxu0
      %v2944 = vadd.f32 0.0, %v2943
      %v2945 = vpop.f32.mrb[0].mxu0
      %v2946 = vpop.f32.mrb[0].mxu0
      %v2947 = vadd.f32 0.0, %v2946
      %v2948 = vpop.f32.mrb[0].mxu0
      %2949 = vmatprep.mubr.bf16.mxu0 0
      %2950 = vmatmul.mubr.bf16.gmra.mrb[0].mxu0 %v2801
      %v2951 = vpop.f32.mrb[0].mxu0
      %v2952 = vadd.f32 0.0, %v2951
      %v2953 = vpop.f32.mrb[0].mxu0
      %v2954 = vpop.f32.mrb[0].mxu0
      %v2955 = vadd.f32 0.0, %v2954
      %v2956 = vpop.f32.mrb[0].mxu0
      %2957 = vmatprep.mubr.bf16.mxu0 0
      %2958 = vmatmul.mubr.bf16.gmra.mrb[0].mxu0 %v2804
      %v2959 = vpop.f32.mrb[0].mxu0
      %v2960 = vadd.f32 0.0, %v2959
      %v2961 = vpop.f32.mrb[0].mxu0
      %v2962 = vpop.f32.mrb[0].mxu0
      %v2963 = vadd.f32 0.0, %v2962
      %v2964 = vpop.f32.mrb[0].mxu0
      %2965 = vmatprep.mubr.bf16.mxu0 0
      %2966 = vmatmul.mubr.bf16.gmra.mrb[0].mxu0 %v2807
      %v2967 = vpop.f32.mrb[0].mxu0
      %v2968 = vadd.f32 0.0, %v2967
      %v2969 = vpop.f32.mrb[0].mxu0
      %v2970 = vpop.f32.mrb[0].mxu0
      %v2971 = vadd.f32 0.0, %v2970
      %v2972 = vpop.f32.mrb[0].mxu0
      %2973 = vmatprep.mubr.bf16.mxu0 0
      %2974 = vmatmul.mubr.bf16.gmra.mrb[0].mxu0 %v2810
      %v2975 = vpop.f32.mrb[0].mxu0
      %v2976 = vadd.f32 0.0, %v2975
      %v2977 = vpop.f32.mrb[0].mxu0
      %v2978 = vpop.f32.mrb[0].mxu0
      %v2979 = vadd.f32 0.0, %v2978
      %v2980 = vpop.f32.mrb[0].mxu0
      %2981 = vmatprep.mubr.bf16.mxu0 0
      %2982 = vmatmul.mubr.bf16.gmra.mrb[0].mxu0 %v2813
      %v2983 = vpop.f32.mrb[0].mxu0
      %v2984 = vadd.f32 0.0, %v2983
      %v2985 = vpop.f32.mrb[0].mxu0
      %v2986 = vpop.f32.mrb[0].mxu0
      %v2987 = vadd.f32 0.0, %v2986
      %v2988 = vpop.f32.mrb[0].mxu0
      %2989 = vmatprep.mubr.bf16.mxu0 0
      %2990 = vmatmul.mubr.bf16.gmra.mrb[0].mxu0 %v2816
      %v2991 = vpop.f32.mrb[0].mxu0
      %v2992 = vadd.f32 0.0, %v2991
      %v2993 = vpop.f32.mrb[0].mxu0
      %v2994 = vpop.f32.mrb[0].mxu0
      %v2995 = vadd.f32 0.0, %v2994
      %v2996 = vpop.f32.mrb[0].mxu0
      %2997 = vdwg.mxu0
      %v2998 = vadd.f32 %v2559, %v2856
      %v2999 = vadd.f32 %v2560, %v2859
      %v3000 = vadd.f32 %v2561, %v2864
      %v3001 = vadd.f32 %v2562, %v2867
      %v3002 = vadd.f32 %v2563, %v2872
      %v3003 = vadd.f32 %v2564, %v2875
      %v3004 = vadd.f32 %v2565, %v2880
      %v3005 = vadd.f32 %v2566, %v2883
      %v3006 = vadd.f32 %v2567, %v2888
      %v3007 = vadd.f32 %v2568, %v2891
      %v3008 = vadd.f32 %v2569, %v2896
      %v3009 = vadd.f32 %v2570, %v2899
      %v3010 = vadd.f32 %v2571, %v2904
      %v3011 = vadd.f32 %v2572, %v2907
      %v3012 = vadd.f32 %v2573, %v2912
      %v3013 = vadd.f32 %v2574, %v2915
      %v3014 = vadd.f32 %v2575, %v2920
      %v3015 = vadd.f32 %v2576, %v2923
      %v3016 = vadd.f32 %v2577, %v2928
      %v3017 = vadd.f32 %v2578, %v2931
      %v3018 = vadd.f32 %v2579, %v2936
      %v3019 = vadd.f32 %v2580, %v2939
      %v3020 = vadd.f32 %v2581, %v2944
      %v3021 = vadd.f32 %v2582, %v2947
      %v3022 = vadd.f32 %v2583, %v2952
      %v3023 = vadd.f32 %v2584, %v2955
      %v3024 = vadd.f32 %v2585, %v2960
      %v3025 = vadd.f32 %v2586, %v2963
      %v3026 = vadd.f32 %v2587, %v2968
      %v3027 = vadd.f32 %v2588, %v2971
      %v3028 = vadd.f32 %v2589, %v2976
      %v3029 = vadd.f32 %v2590, %v2979
      %v3030 = vadd.f32 %v2591, %v2984
      %v3031 = vadd.f32 %v2592, %v2987
      %v3032 = vadd.f32 %v2593, %v2992
      %v3033 = vadd.f32 %v2594, %v2995
      %v3034 = vld [vmem:[%s226 + $0xa0] sm:$0x3]
      %s3035 = scalar_lea.vmem %s1, 14
      %v3036 = vld [vmem:[%s3035] sm:$0x3]
      %v3038 = vunpack.c.l.b16 %v3034
      %v3039 = vpack.c.b16 %v3038, %v3038
      %vm3040 = vsmask.f32 5376
      %v3042 = vshrl.u32 %v2708, 16
      %v3044 = vrot.slane %v3042, 2
      %v3045 = vshll.u32 %v2708, 16
      %v3047 = vrot.slane %v3045, 3
      %v3048 = vor.u32 %v3044, %v3047
      %v3050 = vshrl.u32 %v2709, 16
      %v3052 = vrot.slane %v3050, 2
      %v3053 = vshll.u32 %v2709, 16
      %v3055 = vrot.slane %v3053, 3
      %v3056 = vor.u32 %v3052, %v3055
      %v3057 = vsel %vm3040, %v3048, %v3056
      %v3059 = vshrl.u32 %v2710, 16
      %v3061 = vrot.slane %v3059, 2
      %v3062 = vshll.u32 %v2710, 16
      %v3064 = vrot.slane %v3062, 3
      %v3065 = vor.u32 %v3061, %v3064
      %v3066 = vsel %vm3040, %v3056, %v3065
      %v3068 = vshrl.u32 %v2711, 16
      %v3070 = vrot.slane %v3068, 2
      %v3071 = vshll.u32 %v2711, 16
      %v3073 = vrot.slane %v3071, 3
      %v3074 = vor.u32 %v3070, %v3073
      %v3075 = vsel %vm3040, %v3065, %v3074
      %v3077 = vshrl.u32 %v2712, 16
      %v3079 = vrot.slane %v3077, 2
      %v3080 = vshll.u32 %v2712, 16
      %v3082 = vrot.slane %v3080, 3
      %v3083 = vor.u32 %v3079, %v3082
      %v3084 = vsel %vm3040, %v3074, %v3083
      %v3086 = vshrl.u32 %v2713, 16
      %v3088 = vrot.slane %v3086, 2
      %v3089 = vshll.u32 %v2713, 16
      %v3091 = vrot.slane %v3089, 3
      %v3092 = vor.u32 %v3088, %v3091
      %v3093 = vsel %vm3040, %v3083, %v3092
      %v3095 = vshrl.u32 %v2714, 16
      %v3097 = vrot.slane %v3095, 2
      %v3098 = vshll.u32 %v2714, 16
      %v3100 = vrot.slane %v3098, 3
      %v3101 = vor.u32 %v3097, %v3100
      %v3102 = vsel %vm3040, %v3092, %v3101
      %v3104 = vshrl.u32 %v2715, 16
      %v3106 = vrot.slane %v3104, 2
      %v3107 = vshll.u32 %v2715, 16
      %v3109 = vrot.slane %v3107, 3
      %v3110 = vor.u32 %v3106, %v3109
      %v3111 = vsel %vm3040, %v3101, %v3110
      %v3113 = vshrl.u32 %v2716, 16
      %v3115 = vrot.slane %v3113, 2
      %v3116 = vshll.u32 %v2716, 16
      %v3118 = vrot.slane %v3116, 3
      %v3119 = vor.u32 %v3115, %v3118
      %v3120 = vsel %vm3040, %v3110, %v3119
      %v3122 = vshrl.u32 %v2717, 16
      %v3124 = vrot.slane %v3122, 2
      %v3125 = vshll.u32 %v2717, 16
      %v3127 = vrot.slane %v3125, 3
      %v3128 = vor.u32 %v3124, %v3127
      %v3129 = vsel %vm3040, %v3119, %v3128
      %v3131 = vshrl.u32 %v2718, 16
      %v3133 = vrot.slane %v3131, 2
      %v3134 = vshll.u32 %v2718, 16
      %v3136 = vrot.slane %v3134, 3
      %v3137 = vor.u32 %v3133, %v3136
      %v3138 = vsel %vm3040, %v3128, %v3137
      %v3140 = vshrl.u32 %v2719, 16
      %v3142 = vrot.slane %v3140, 2
      %v3143 = vshll.u32 %v2719, 16
      %v3145 = vrot.slane %v3143, 3
      %v3146 = vor.u32 %v3142, %v3145
      %v3147 = vsel %vm3040, %v3137, %v3146
      %v3149 = vshrl.u32 %v2720, 16
      %v3151 = vrot.slane %v3149, 2
      %v3152 = vshll.u32 %v2720, 16
      %v3154 = vrot.slane %v3152, 3
      %v3155 = vor.u32 %v3151, %v3154
      %v3156 = vsel %vm3040, %v3146, %v3155
      %v3158 = vshrl.u32 %v2721, 16
      %v3160 = vrot.slane %v3158, 2
      %v3161 = vshll.u32 %v2721, 16
      %v3163 = vrot.slane %v3161, 3
      %v3164 = vor.u32 %v3160, %v3163
      %v3165 = vsel %vm3040, %v3155, %v3164
      %v3167 = vshrl.u32 %v2722, 16
      %v3169 = vrot.slane %v3167, 2
      %v3170 = vshll.u32 %v2722, 16
      %v3172 = vrot.slane %v3170, 3
      %v3173 = vor.u32 %v3169, %v3172
      %v3174 = vsel %vm3040, %v3164, %v3173
      %v3176 = vshrl.u32 %v2723, 16
      %v3178 = vrot.slane %v3176, 2
      %v3179 = vshll.u32 %v2723, 16
      %v3181 = vrot.slane %v3179, 3
      %v3182 = vor.u32 %v3178, %v3181
      %v3183 = vsel %vm3040, %v3173, %v3182
      %v3185 = vshrl.u32 %v2724, 16
      %v3187 = vrot.slane %v3185, 2
      %v3188 = vshll.u32 %v2724, 16
      %v3190 = vrot.slane %v3188, 3
      %v3191 = vor.u32 %v3187, %v3190
      %v3192 = vsel %vm3040, %v3182, %v3191
      %v3194 = vshrl.u32 %v2725, 16
      %v3196 = vrot.slane %v3194, 2
      %v3197 = vshll.u32 %v2725, 16
      %v3199 = vrot.slane %v3197, 3
      %v3200 = vor.u32 %v3196, %v3199
      %v3201 = vsel %vm3040, %v3191, %v3200
      %v3203 = vshrl.u32 %v3039, 16
      %v3205 = vrot.slane %v3203, 2
      %v3206 = vshll.u32 %v3039, 16
      %v3208 = vrot.slane %v3206, 3
      %v3209 = vor.u32 %v3205, %v3208
      %v3210 = vsel %vm3040, %v3200, %v3209
      %v3212 = vsel %vm511, %v3057, 0
      %v3215 = vsel %vm511, %v3066, 0
      %v3218 = vsel %vm511, %v3075, 0
      %v3221 = vsel %vm511, %v3084, 0
      %v3224 = vsel %vm511, %v3093, 0
      %v3227 = vsel %vm511, %v3102, 0
      %v3230 = vsel %vm511, %v3111, 0
      %v3233 = vsel %vm511, %v3120, 0
      %v3236 = vsel %vm511, %v3129, 0
      %v3239 = vsel %vm511, %v3138, 0
      %v3242 = vsel %vm511, %v3147, 0
      %v3245 = vsel %vm511, %v3156, 0
      %v3248 = vsel %vm511, %v3165, 0
      %v3251 = vsel %vm511, %v3174, 0
      %v3254 = vsel %vm511, %v3183, 0
      %v3257 = vsel %vm511, %v3192, 0
      %v3260 = vsel %vm511, %v3201, 0
      %v3263 = vsel %vm511, %v3210, 0
      %v3266 = vsel %vm566, %v3036, 0
      %3268 = vmatprep.subr.bf16.mxu0 0
      %3269 = vmatpush1.bf16.msra.mxu0 %v3266
      %3270 = vmatprep.subr.bf16.mxu0 0
      %3271 = vmatpush1.bf16.msra.mxu0 0
      %3272 = vmatprep.subr.bf16.mxu0 0
      %3273 = vmatpush1.bf16.msra.mxu0 0
      %3274 = vmatprep.subr.bf16.mxu0 0
      %3275 = vmatpush1.bf16.msra.mxu0 0
      %3276 = vmatprep.subr.bf16.mxu0 0
      %3277 = vmatpush1.bf16.msra.mxu0 0
      %3278 = vmatprep.subr.bf16.mxu0 0
      %3279 = vmatpush1.bf16.msra.mxu0 0
      %3280 = vmatprep.subr.bf16.mxu0 0
      %3281 = vmatpush1.bf16.msra.mxu0 0
      %3282 = vmatprep.subr.bf16.mxu0 0
      %3283 = vmatpush1.bf16.msra.mxu0 0
      %3284 = vmatprep.subr.bf16.mxu0 0
      %3285 = vmatpush1.bf16.msra.mxu0 0
      %3286 = vmatprep.subr.bf16.mxu0 0
      %3287 = vmatpush1.bf16.msra.mxu0 0
      %3288 = vmatprep.subr.bf16.mxu0 0
      %3289 = vmatpush1.bf16.msra.mxu0 0
      %3290 = vmatprep.subr.bf16.mxu0 0
      %3291 = vmatpush1.bf16.msra.mxu0 0
      %3292 = vmatprep.subr.bf16.mxu0 0
      %3293 = vmatpush1.bf16.msra.mxu0 0
      %3294 = vmatprep.subr.bf16.mxu0 0
      %3295 = vmatpush1.bf16.msra.mxu0 0
      %3296 = vmatprep.subr.bf16.mxu0 0
      %3297 = vmatpush1.bf16.msra.mxu0 0
      %3298 = vmatprep.subr.bf16.mxu0 0
      %3299 = vmatpush1.bf16.msra.mxu0 0
      %3300 = vmatprep.mubr.bf16.mxu0 0
      %3301 = vmatmul.mubr.bf16.gmra.mrb[0].mxu0 %v3212
      %v3302 = vpop.f32.mrb[0].mxu0
      %v3303 = vadd.f32 0.0, %v3302
      %v3304 = vpop.f32.mrb[0].mxu0
      %v3305 = vpop.f32.mrb[0].mxu0
      %v3306 = vadd.f32 0.0, %v3305
      %v3307 = vpop.f32.mrb[0].mxu0
      %3308 = vmatprep.mubr.bf16.mxu0 0
      %3309 = vmatmul.mubr.bf16.gmra.mrb[0].mxu0 %v3215
      %v3310 = vpop.f32.mrb[0].mxu0
      %v3311 = vadd.f32 0.0, %v3310
      %v3312 = vpop.f32.mrb[0].mxu0
      %v3313 = vpop.f32.mrb[0].mxu0
      %v3314 = vadd.f32 0.0, %v3313
      %v3315 = vpop.f32.mrb[0].mxu0
      %3316 = vmatprep.mubr.bf16.mxu0 0
      %3317 = vmatmul.mubr.bf16.gmra.mrb[0].mxu0 %v3218
      %v3318 = vpop.f32.mrb[0].mxu0
      %v3319 = vadd.f32 0.0, %v3318
      %v3320 = vpop.f32.mrb[0].mxu0
      %v3321 = vpop.f32.mrb[0].mxu0
      %v3322 = vadd.f32 0.0, %v3321
      %v3323 = vpop.f32.mrb[0].mxu0
      %3324 = vmatprep.mubr.bf16.mxu0 0
      %3325 = vmatmul.mubr.bf16.gmra.mrb[0].mxu0 %v3221
      %v3326 = vpop.f32.mrb[0].mxu0
      %v3327 = vadd.f32 0.0, %v3326
      %v3328 = vpop.f32.mrb[0].mxu0
      %v3329 = vpop.f32.mrb[0].mxu0
      %v3330 = vadd.f32 0.0, %v3329
      %v3331 = vpop.f32.mrb[0].mxu0
      %3332 = vmatprep.mubr.bf16.mxu0 0
      %3333 = vmatmul.mubr.bf16.gmra.mrb[0].mxu0 %v3224
      %v3334 = vpop.f32.mrb[0].mxu0
      %v3335 = vadd.f32 0.0, %v3334
      %v3336 = vpop.f32.mrb[0].mxu0
      %v3337 = vpop.f32.mrb[0].mxu0
      %v3338 = vadd.f32 0.0, %v3337
      %v3339 = vpop.f32.mrb[0].mxu0
      %3340 = vmatprep.mubr.bf16.mxu0 0
      %3341 = vmatmul.mubr.bf16.gmra.mrb[0].mxu0 %v3227
      %v3342 = vpop.f32.mrb[0].mxu0
      %v3343 = vadd.f32 0.0, %v3342
      %v3344 = vpop.f32.mrb[0].mxu0
      %v3345 = vpop.f32.mrb[0].mxu0
      %v3346 = vadd.f32 0.0, %v3345
      %v3347 = vpop.f32.mrb[0].mxu0
      %3348 = vmatprep.mubr.bf16.mxu0 0
      %3349 = vmatmul.mubr.bf16.gmra.mrb[0].mxu0 %v3230
      %v3350 = vpop.f32.mrb[0].mxu0
      %v3351 = vadd.f32 0.0, %v3350
      %v3352 = vpop.f32.mrb[0].mxu0
      %v3353 = vpop.f32.mrb[0].mxu0
      %v3354 = vadd.f32 0.0, %v3353
      %v3355 = vpop.f32.mrb[0].mxu0
      %3356 = vmatprep.mubr.bf16.mxu0 0
      %3357 = vmatmul.mubr.bf16.gmra.mrb[0].mxu0 %v3233
      %v3358 = vpop.f32.mrb[0].mxu0
      %v3359 = vadd.f32 0.0, %v3358
      %v3360 = vpop.f32.mrb[0].mxu0
      %v3361 = vpop.f32.mrb[0].mxu0
      %v3362 = vadd.f32 0.0, %v3361
      %v3363 = vpop.f32.mrb[0].mxu0
      %3364 = vmatprep.mubr.bf16.mxu0 0
      %3365 = vmatmul.mubr.bf16.gmra.mrb[0].mxu0 %v3236
      %v3366 = vpop.f32.mrb[0].mxu0
      %v3367 = vadd.f32 0.0, %v3366
      %v3368 = vpop.f32.mrb[0].mxu0
      %v3369 = vpop.f32.mrb[0].mxu0
      %v3370 = vadd.f32 0.0, %v3369
      %v3371 = vpop.f32.mrb[0].mxu0
      %3372 = vmatprep.mubr.bf16.mxu0 0
      %3373 = vmatmul.mubr.bf16.gmra.mrb[0].mxu0 %v3239
      %v3374 = vpop.f32.mrb[0].mxu0
      %v3375 = vadd.f32 0.0, %v3374
      %v3376 = vpop.f32.mrb[0].mxu0
      %v3377 = vpop.f32.mrb[0].mxu0
      %v3378 = vadd.f32 0.0, %v3377
      %v3379 = vpop.f32.mrb[0].mxu0
      %3380 = vmatprep.mubr.bf16.mxu0 0
      %3381 = vmatmul.mubr.bf16.gmra.mrb[0].mxu0 %v3242
      %v3382 = vpop.f32.mrb[0].mxu0
      %v3383 = vadd.f32 0.0, %v3382
      %v3384 = vpop.f32.mrb[0].mxu0
      %v3385 = vpop.f32.mrb[0].mxu0
      %v3386 = vadd.f32 0.0, %v3385
      %v3387 = vpop.f32.mrb[0].mxu0
      %3388 = vmatprep.mubr.bf16.mxu0 0
      %3389 = vmatmul.mubr.bf16.gmra.mrb[0].mxu0 %v3245
      %v3390 = vpop.f32.mrb[0].mxu0
      %v3391 = vadd.f32 0.0, %v3390
      %v3392 = vpop.f32.mrb[0].mxu0
      %v3393 = vpop.f32.mrb[0].mxu0
      %v3394 = vadd.f32 0.0, %v3393
      %v3395 = vpop.f32.mrb[0].mxu0
      %3396 = vmatprep.mubr.bf16.mxu0 0
      %3397 = vmatmul.mubr.bf16.gmra.mrb[0].mxu0 %v3248
      %v3398 = vpop.f32.mrb[0].mxu0
      %v3399 = vadd.f32 0.0, %v3398
      %v3400 = vpop.f32.mrb[0].mxu0
      %v3401 = vpop.f32.mrb[0].mxu0
      %v3402 = vadd.f32 0.0, %v3401
      %v3403 = vpop.f32.mrb[0].mxu0
      %3404 = vmatprep.mubr.bf16.mxu0 0
      %3405 = vmatmul.mubr.bf16.gmra.mrb[0].mxu0 %v3251
      %v3406 = vpop.f32.mrb[0].mxu0
      %v3407 = vadd.f32 0.0, %v3406
      %v3408 = vpop.f32.mrb[0].mxu0
      %v3409 = vpop.f32.mrb[0].mxu0
      %v3410 = vadd.f32 0.0, %v3409
      %v3411 = vpop.f32.mrb[0].mxu0
      %3412 = vmatprep.mubr.bf16.mxu0 0
      %3413 = vmatmul.mubr.bf16.gmra.mrb[0].mxu0 %v3254
      %v3414 = vpop.f32.mrb[0].mxu0
      %v3415 = vadd.f32 0.0, %v3414
      %v3416 = vpop.f32.mrb[0].mxu0
      %v3417 = vpop.f32.mrb[0].mxu0
      %v3418 = vadd.f32 0.0, %v3417
      %v3419 = vpop.f32.mrb[0].mxu0
      %3420 = vmatprep.mubr.bf16.mxu0 0
      %3421 = vmatmul.mubr.bf16.gmra.mrb[0].mxu0 %v3257
      %v3422 = vpop.f32.mrb[0].mxu0
      %v3423 = vadd.f32 0.0, %v3422
      %v3424 = vpop.f32.mrb[0].mxu0
      %v3425 = vpop.f32.mrb[0].mxu0
      %v3426 = vadd.f32 0.0, %v3425
      %v3427 = vpop.f32.mrb[0].mxu0
      %3428 = vmatprep.mubr.bf16.mxu0 0
      %3429 = vmatmul.mubr.bf16.gmra.mrb[0].mxu0 %v3260
      %v3430 = vpop.f32.mrb[0].mxu0
      %v3431 = vadd.f32 0.0, %v3430
      %v3432 = vpop.f32.mrb[0].mxu0
      %v3433 = vpop.f32.mrb[0].mxu0
      %v3434 = vadd.f32 0.0, %v3433
      %v3435 = vpop.f32.mrb[0].mxu0
      %3436 = vmatprep.mubr.bf16.mxu0 0
      %3437 = vmatmul.mubr.bf16.gmra.mrb[0].mxu0 %v3263
      %v3438 = vpop.f32.mrb[0].mxu0
      %v3439 = vadd.f32 0.0, %v3438
      %v3440 = vpop.f32.mrb[0].mxu0
      %v3441 = vpop.f32.mrb[0].mxu0
      %v3442 = vadd.f32 0.0, %v3441
      %v3443 = vpop.f32.mrb[0].mxu0
      %3444 = vdwg.mxu0
      %v3445 = vadd.f32 %v2998, %v3303
      %v3446 = vadd.f32 %v2999, %v3306
      %v3447 = vadd.f32 %v3000, %v3311
      %v3448 = vadd.f32 %v3001, %v3314
      %v3449 = vadd.f32 %v3002, %v3319
      %v3450 = vadd.f32 %v3003, %v3322
      %v3451 = vadd.f32 %v3004, %v3327
      %v3452 = vadd.f32 %v3005, %v3330
      %v3453 = vadd.f32 %v3006, %v3335
      %v3454 = vadd.f32 %v3007, %v3338
      %v3455 = vadd.f32 %v3008, %v3343
      %v3456 = vadd.f32 %v3009, %v3346
      %v3457 = vadd.f32 %v3010, %v3351
      %v3458 = vadd.f32 %v3011, %v3354
      %v3459 = vadd.f32 %v3012, %v3359
      %v3460 = vadd.f32 %v3013, %v3362
      %v3461 = vadd.f32 %v3014, %v3367
      %v3462 = vadd.f32 %v3015, %v3370
      %v3463 = vadd.f32 %v3016, %v3375
      %v3464 = vadd.f32 %v3017, %v3378
      %v3465 = vadd.f32 %v3018, %v3383
      %v3466 = vadd.f32 %v3019, %v3386
      %v3467 = vadd.f32 %v3020, %v3391
      %v3468 = vadd.f32 %v3021, %v3394
      %v3469 = vadd.f32 %v3022, %v3399
      %v3470 = vadd.f32 %v3023, %v3402
      %v3471 = vadd.f32 %v3024, %v3407
      %v3472 = vadd.f32 %v3025, %v3410
      %v3473 = vadd.f32 %v3026, %v3415
      %v3474 = vadd.f32 %v3027, %v3418
      %v3475 = vadd.f32 %v3028, %v3423
      %v3476 = vadd.f32 %v3029, %v3426
      %v3477 = vadd.f32 %v3030, %v3431
      %v3478 = vadd.f32 %v3031, %v3434
      %v3479 = vadd.f32 %v3032, %v3439
      %v3480 = vadd.f32 %v3033, %v3442
      %v3481 = vld [vmem:[%s226 + $0x10] sm:$0x8]
      %s3482 = scalar_lea.vmem %s1, 16
      %v3483 = vld [vmem:[%s3482] sm:$0x3]
      %v3485 = vunpack.c.l.b16 %v3481
      %v3486 = vpack.c.b16 %v2672, %v3485
      %vm3487 = vcmask 1044480
      %v3488 = vrot.slane %v3486, 3
      %v3489 = vrot.slane %v2709, 3
      %v3490 = vsel %vm3487, %v3488, %v3489
      %v3491 = vrot.slane %v2710, 3
      %v3492 = vsel %vm3487, %v3489, %v3491
      %v3493 = vrot.slane %v2711, 3
      %v3494 = vsel %vm3487, %v3491, %v3493
      %v3495 = vrot.slane %v2712, 3
      %v3496 = vsel %vm3487, %v3493, %v3495
      %v3497 = vrot.slane %v2713, 3
      %v3498 = vsel %vm3487, %v3495, %v3497
      %v3499 = vrot.slane %v2714, 3
      %v3500 = vsel %vm3487, %v3497, %v3499
      %v3501 = vrot.slane %v2715, 3
      %v3502 = vsel %vm3487, %v3499, %v3501
      %v3503 = vrot.slane %v2716, 3
      %v3504 = vsel %vm3487, %v3501, %v3503
      %v3505 = vrot.slane %v2717, 3
      %v3506 = vsel %vm3487, %v3503, %v3505
      %v3507 = vrot.slane %v2718, 3
      %v3508 = vsel %vm3487, %v3505, %v3507
      %v3509 = vrot.slane %v2719, 3
      %v3510 = vsel %vm3487, %v3507, %v3509
      %v3511 = vrot.slane %v2720, 3
      %v3512 = vsel %vm3487, %v3509, %v3511
      %v3513 = vrot.slane %v2721, 3
      %v3514 = vsel %vm3487, %v3511, %v3513
      %v3515 = vrot.slane %v2722, 3
      %v3516 = vsel %vm3487, %v3513, %v3515
      %v3517 = vrot.slane %v2723, 3
      %v3518 = vsel %vm3487, %v3515, %v3517
      %v3519 = vrot.slane %v2724, 3
      %v3520 = vsel %vm3487, %v3517, %v3519
      %v3521 = vrot.slane %v2725, 3
      %v3522 = vsel %vm3487, %v3519, %v3521
      %v3523 = vrot.slane %v3039, 3
      %v3524 = vsel %vm3487, %v3521, %v3523
      %v3526 = vsel %vm511, %v3490, 0
      %v3529 = vsel %vm511, %v3492, 0
      %v3532 = vsel %vm511, %v3494, 0
      %v3535 = vsel %vm511, %v3496, 0
      %v3538 = vsel %vm511, %v3498, 0
      %v3541 = vsel %vm511, %v3500, 0
      %v3544 = vsel %vm511, %v3502, 0
      %v3547 = vsel %vm511, %v3504, 0
      %v3550 = vsel %vm511, %v3506, 0
      %v3553 = vsel %vm511, %v3508, 0
      %v3556 = vsel %vm511, %v3510, 0
      %v3559 = vsel %vm511, %v3512, 0
      %v3562 = vsel %vm511, %v3514, 0
      %v3565 = vsel %vm511, %v3516, 0
      %v3568 = vsel %vm511, %v3518, 0
      %v3571 = vsel %vm511, %v3520, 0
      %v3574 = vsel %vm511, %v3522, 0
      %v3577 = vsel %vm511, %v3524, 0
      %v3580 = vsel %vm566, %v3483, 0
      %3582 = vmatprep.subr.bf16.mxu0 0
      %3583 = vmatpush1.bf16.msra.mxu0 %v3580
      %3584 = vmatprep.subr.bf16.mxu0 0
      %3585 = vmatpush1.bf16.msra.mxu0 0
      %3586 = vmatprep.subr.bf16.mxu0 0
      %3587 = vmatpush1.bf16.msra.mxu0 0
      %3588 = vmatprep.subr.bf16.mxu0 0
      %3589 = vmatpush1.bf16.msra.mxu0 0
      %3590 = vmatprep.subr.bf16.mxu0 0
      %3591 = vmatpush1.bf16.msra.mxu0 0
      %3592 = vmatprep.subr.bf16.mxu0 0
      %3593 = vmatpush1.bf16.msra.mxu0 0
      %3594 = vmatprep.subr.bf16.mxu0 0
      %3595 = vmatpush1.bf16.msra.mxu0 0
      %3596 = vmatprep.subr.bf16.mxu0 0
      %3597 = vmatpush1.bf16.msra.mxu0 0
      %3598 = vmatprep.subr.bf16.mxu0 0
      %3599 = vmatpush1.bf16.msra.mxu0 0
      %3600 = vmatprep.subr.bf16.mxu0 0
      %3601 = vmatpush1.bf16.msra.mxu0 0
      %3602 = vmatprep.subr.bf16.mxu0 0
      %3603 = vmatpush1.bf16.msra.mxu0 0
      %3604 = vmatprep.subr.bf16.mxu0 0
      %3605 = vmatpush1.bf16.msra.mxu0 0
      %3606 = vmatprep.subr.bf16.mxu0 0
      %3607 = vmatpush1.bf16.msra.mxu0 0
      %3608 = vmatprep.subr.bf16.mxu0 0
      %3609 = vmatpush1.bf16.msra.mxu0 0
      %3610 = vmatprep.subr.bf16.mxu0 0
      %3611 = vmatpush1.bf16.msra.mxu0 0
      %3612 = vmatprep.subr.bf16.mxu0 0
      %3613 = vmatpush1.bf16.msra.mxu0 0
      %3614 = vmatprep.mubr.bf16.mxu0 0
      %3615 = vmatmul.mubr.bf16.gmra.mrb[0].mxu0 %v3526
      %v3616 = vpop.f32.mrb[0].mxu0
      %v3617 = vadd.f32 0.0, %v3616
      %v3618 = vpop.f32.mrb[0].mxu0
      %v3619 = vpop.f32.mrb[0].mxu0
      %v3620 = vadd.f32 0.0, %v3619
      %v3621 = vpop.f32.mrb[0].mxu0
      %3622 = vmatprep.mubr.bf16.mxu0 0
      %3623 = vmatmul.mubr.bf16.gmra.mrb[0].mxu0 %v3529
      %v3624 = vpop.f32.mrb[0].mxu0
      %v3625 = vadd.f32 0.0, %v3624
      %v3626 = vpop.f32.mrb[0].mxu0
      %v3627 = vpop.f32.mrb[0].mxu0
      %v3628 = vadd.f32 0.0, %v3627
      %v3629 = vpop.f32.mrb[0].mxu0
      %3630 = vmatprep.mubr.bf16.mxu0 0
      %3631 = vmatmul.mubr.bf16.gmra.mrb[0].mxu0 %v3532
      %v3632 = vpop.f32.mrb[0].mxu0
      %v3633 = vadd.f32 0.0, %v3632
      %v3634 = vpop.f32.mrb[0].mxu0
      %v3635 = vpop.f32.mrb[0].mxu0
      %v3636 = vadd.f32 0.0, %v3635
      %v3637 = vpop.f32.mrb[0].mxu0
      %3638 = vmatprep.mubr.bf16.mxu0 0
      %3639 = vmatmul.mubr.bf16.gmra.mrb[0].mxu0 %v3535
      %v3640 = vpop.f32.mrb[0].mxu0
      %v3641 = vadd.f32 0.0, %v3640
      %v3642 = vpop.f32.mrb[0].mxu0
      %v3643 = vpop.f32.mrb[0].mxu0
      %v3644 = vadd.f32 0.0, %v3643
      %v3645 = vpop.f32.mrb[0].mxu0
      %3646 = vmatprep.mubr.bf16.mxu0 0
      %3647 = vmatmul.mubr.bf16.gmra.mrb[0].mxu0 %v3538
      %v3648 = vpop.f32.mrb[0].mxu0
      %v3649 = vadd.f32 0.0, %v3648
      %v3650 = vpop.f32.mrb[0].mxu0
      %v3651 = vpop.f32.mrb[0].mxu0
      %v3652 = vadd.f32 0.0, %v3651
      %v3653 = vpop.f32.mrb[0].mxu0
      %3654 = vmatprep.mubr.bf16.mxu0 0
      %3655 = vmatmul.mubr.bf16.gmra.mrb[0].mxu0 %v3541
      %v3656 = vpop.f32.mrb[0].mxu0
      %v3657 = vadd.f32 0.0, %v3656
      %v3658 = vpop.f32.mrb[0].mxu0
      %v3659 = vpop.f32.mrb[0].mxu0
      %v3660 = vadd.f32 0.0, %v3659
      %v3661 = vpop.f32.mrb[0].mxu0
      %3662 = vmatprep.mubr.bf16.mxu0 0
      %3663 = vmatmul.mubr.bf16.gmra.mrb[0].mxu0 %v3544
      %v3664 = vpop.f32.mrb[0].mxu0
      %v3665 = vadd.f32 0.0, %v3664
      %v3666 = vpop.f32.mrb[0].mxu0
      %v3667 = vpop.f32.mrb[0].mxu0
      %v3668 = vadd.f32 0.0, %v3667
      %v3669 = vpop.f32.mrb[0].mxu0
      %3670 = vmatprep.mubr.bf16.mxu0 0
      %3671 = vmatmul.mubr.bf16.gmra.mrb[0].mxu0 %v3547
      %v3672 = vpop.f32.mrb[0].mxu0
      %v3673 = vadd.f32 0.0, %v3672
      %v3674 = vpop.f32.mrb[0].mxu0
      %v3675 = vpop.f32.mrb[0].mxu0
      %v3676 = vadd.f32 0.0, %v3675
      %v3677 = vpop.f32.mrb[0].mxu0
      %3678 = vmatprep.mubr.bf16.mxu0 0
      %3679 = vmatmul.mubr.bf16.gmra.mrb[0].mxu0 %v3550
      %v3680 = vpop.f32.mrb[0].mxu0
      %v3681 = vadd.f32 0.0, %v3680
      %v3682 = vpop.f32.mrb[0].mxu0
      %v3683 = vpop.f32.mrb[0].mxu0
      %v3684 = vadd.f32 0.0, %v3683
      %v3685 = vpop.f32.mrb[0].mxu0
      %3686 = vmatprep.mubr.bf16.mxu0 0
      %3687 = vmatmul.mubr.bf16.gmra.mrb[0].mxu0 %v3553
      %v3688 = vpop.f32.mrb[0].mxu0
      %v3689 = vadd.f32 0.0, %v3688
      %v3690 = vpop.f32.mrb[0].mxu0
      %v3691 = vpop.f32.mrb[0].mxu0
      %v3692 = vadd.f32 0.0, %v3691
      %v3693 = vpop.f32.mrb[0].mxu0
      %3694 = vmatprep.mubr.bf16.mxu0 0
      %3695 = vmatmul.mubr.bf16.gmra.mrb[0].mxu0 %v3556
      %v3696 = vpop.f32.mrb[0].mxu0
      %v3697 = vadd.f32 0.0, %v3696
      %v3698 = vpop.f32.mrb[0].mxu0
      %v3699 = vpop.f32.mrb[0].mxu0
      %v3700 = vadd.f32 0.0, %v3699
      %v3701 = vpop.f32.mrb[0].mxu0
      %3702 = vmatprep.mubr.bf16.mxu0 0
      %3703 = vmatmul.mubr.bf16.gmra.mrb[0].mxu0 %v3559
      %v3704 = vpop.f32.mrb[0].mxu0
      %v3705 = vadd.f32 0.0, %v3704
      %v3706 = vpop.f32.mrb[0].mxu0
      %v3707 = vpop.f32.mrb[0].mxu0
      %v3708 = vadd.f32 0.0, %v3707
      %v3709 = vpop.f32.mrb[0].mxu0
      %3710 = vmatprep.mubr.bf16.mxu0 0
      %3711 = vmatmul.mubr.bf16.gmra.mrb[0].mxu0 %v3562
      %v3712 = vpop.f32.mrb[0].mxu0
      %v3713 = vadd.f32 0.0, %v3712
      %v3714 = vpop.f32.mrb[0].mxu0
      %v3715 = vpop.f32.mrb[0].mxu0
      %v3716 = vadd.f32 0.0, %v3715
      %v3717 = vpop.f32.mrb[0].mxu0
      %3718 = vmatprep.mubr.bf16.mxu0 0
      %3719 = vmatmul.mubr.bf16.gmra.mrb[0].mxu0 %v3565
      %v3720 = vpop.f32.mrb[0].mxu0
      %v3721 = vadd.f32 0.0, %v3720
      %v3722 = vpop.f32.mrb[0].mxu0
      %v3723 = vpop.f32.mrb[0].mxu0
      %v3724 = vadd.f32 0.0, %v3723
      %v3725 = vpop.f32.mrb[0].mxu0
      %3726 = vmatprep.mubr.bf16.mxu0 0
      %3727 = vmatmul.mubr.bf16.gmra.mrb[0].mxu0 %v3568
      %v3728 = vpop.f32.mrb[0].mxu0
      %v3729 = vadd.f32 0.0, %v3728
      %v3730 = vpop.f32.mrb[0].mxu0
      %v3731 = vpop.f32.mrb[0].mxu0
      %v3732 = vadd.f32 0.0, %v3731
      %v3733 = vpop.f32.mrb[0].mxu0
      %3734 = vmatprep.mubr.bf16.mxu0 0
      %3735 = vmatmul.mubr.bf16.gmra.mrb[0].mxu0 %v3571
      %v3736 = vpop.f32.mrb[0].mxu0
      %v3737 = vadd.f32 0.0, %v3736
      %v3738 = vpop.f32.mrb[0].mxu0
      %v3739 = vpop.f32.mrb[0].mxu0
      %v3740 = vadd.f32 0.0, %v3739
      %v3741 = vpop.f32.mrb[0].mxu0
      %3742 = vmatprep.mubr.bf16.mxu0 0
      %3743 = vmatmul.mubr.bf16.gmra.mrb[0].mxu0 %v3574
      %v3744 = vpop.f32.mrb[0].mxu0
      %v3745 = vadd.f32 0.0, %v3744
      %v3746 = vpop.f32.mrb[0].mxu0
      %v3747 = vpop.f32.mrb[0].mxu0
      %v3748 = vadd.f32 0.0, %v3747
      %v3749 = vpop.f32.mrb[0].mxu0
      %3750 = vmatprep.mubr.bf16.mxu0 0
      %3751 = vmatmul.mubr.bf16.gmra.mrb[0].mxu0 %v3577
      %v3752 = vpop.f32.mrb[0].mxu0
      %v3753 = vadd.f32 0.0, %v3752
      %v3754 = vpop.f32.mrb[0].mxu0
      %v3755 = vpop.f32.mrb[0].mxu0
      %v3756 = vadd.f32 0.0, %v3755
      %v3757 = vpop.f32.mrb[0].mxu0
      %3758 = vdwg.mxu0
      %v3759 = vadd.f32 %v3445, %v3617
      %v3760 = vadd.f32 %v3446, %v3620
      %v3761 = vadd.f32 %v3447, %v3625
      %v3762 = vadd.f32 %v3448, %v3628
      %v3763 = vadd.f32 %v3449, %v3633
      %v3764 = vadd.f32 %v3450, %v3636
      %v3765 = vadd.f32 %v3451, %v3641
      %v3766 = vadd.f32 %v3452, %v3644
      %v3767 = vadd.f32 %v3453, %v3649
      %v3768 = vadd.f32 %v3454, %v3652
      %v3769 = vadd.f32 %v3455, %v3657
      %v3770 = vadd.f32 %v3456, %v3660
      %v3771 = vadd.f32 %v3457, %v3665
      %v3772 = vadd.f32 %v3458, %v3668
      %v3773 = vadd.f32 %v3459, %v3673
      %v3774 = vadd.f32 %v3460, %v3676
      %v3775 = vadd.f32 %v3461, %v3681
      %v3776 = vadd.f32 %v3462, %v3684
      %v3777 = vadd.f32 %v3463, %v3689
      %v3778 = vadd.f32 %v3464, %v3692
      %v3779 = vadd.f32 %v3465, %v3697
      %v3780 = vadd.f32 %v3466, %v3700
      %v3781 = vadd.f32 %v3467, %v3705
      %v3782 = vadd.f32 %v3468, %v3708
      %v3783 = vadd.f32 %v3469, %v3713
      %v3784 = vadd.f32 %v3470, %v3716
      %v3785 = vadd.f32 %v3471, %v3721
      %v3786 = vadd.f32 %v3472, %v3724
      %v3787 = vadd.f32 %v3473, %v3729
      %v3788 = vadd.f32 %v3474, %v3732
      %v3789 = vadd.f32 %v3475, %v3737
      %v3790 = vadd.f32 %v3476, %v3740
      %v3791 = vadd.f32 %v3477, %v3745
      %v3792 = vadd.f32 %v3478, %v3748
      %v3793 = vadd.f32 %v3479, %v3753
      %v3794 = vadd.f32 %v3480, %v3756
      %v3795 = vld [vmem:[%s2] sm:$0x1]
      %v3797 = vlaneseq
      %v3798 = vshrl.u32 %v3797, 7
      %v3799 = vsub.s32 0, %v3798
      %v3800 = vrot.slane %v3795, %v3799
      %v3802 = vadd.f32 %v3759, %v3800
      %v3803 = vadd.f32 %v3760, %v3800
      %v3804 = vadd.f32 %v3761, %v3800
      %v3805 = vadd.f32 %v3762, %v3800
      %v3806 = vadd.f32 %v3763, %v3800
      %v3807 = vadd.f32 %v3764, %v3800
      %v3808 = vadd.f32 %v3765, %v3800
      %v3809 = vadd.f32 %v3766, %v3800
      %v3810 = vadd.f32 %v3767, %v3800
      %v3811 = vadd.f32 %v3768, %v3800
      %v3812 = vadd.f32 %v3769, %v3800
      %v3813 = vadd.f32 %v3770, %v3800
      %v3814 = vadd.f32 %v3771, %v3800
      %v3815 = vadd.f32 %v3772, %v3800
      %v3816 = vadd.f32 %v3773, %v3800
      %v3817 = vadd.f32 %v3774, %v3800
      %v3818 = vadd.f32 %v3775, %v3800
      %v3819 = vadd.f32 %v3776, %v3800
      %v3820 = vadd.f32 %v3777, %v3800
      %v3821 = vadd.f32 %v3778, %v3800
      %v3822 = vadd.f32 %v3779, %v3800
      %v3823 = vadd.f32 %v3780, %v3800
      %v3824 = vadd.f32 %v3781, %v3800
      %v3825 = vadd.f32 %v3782, %v3800
      %v3826 = vadd.f32 %v3783, %v3800
      %v3827 = vadd.f32 %v3784, %v3800
      %v3828 = vadd.f32 %v3785, %v3800
      %v3829 = vadd.f32 %v3786, %v3800
      %v3830 = vadd.f32 %v3787, %v3800
      %v3831 = vadd.f32 %v3788, %v3800
      %v3832 = vadd.f32 %v3789, %v3800
      %v3833 = vadd.f32 %v3790, %v3800
      %v3834 = vadd.f32 %v3791, %v3800
      %v3835 = vadd.f32 %v3792, %v3800
      %v3836 = vadd.f32 %v3793, %v3800
      %v3837 = vadd.f32 %v3794, %v3800
      %v3838 = vround.ne.pseudo %v3802
      %v3839 = vround.ne.pseudo %v3803
      %v3840 = vround.ne.pseudo %v3804
      %v3841 = vround.ne.pseudo %v3805
      %v3842 = vround.ne.pseudo %v3806
      %v3843 = vround.ne.pseudo %v3807
      %v3844 = vround.ne.pseudo %v3808
      %v3845 = vround.ne.pseudo %v3809
      %v3846 = vround.ne.pseudo %v3810
      %v3847 = vround.ne.pseudo %v3811
      %v3848 = vround.ne.pseudo %v3812
      %v3849 = vround.ne.pseudo %v3813
      %v3850 = vround.ne.pseudo %v3814
      %v3851 = vround.ne.pseudo %v3815
      %v3852 = vround.ne.pseudo %v3816
      %v3853 = vround.ne.pseudo %v3817
      %v3854 = vround.ne.pseudo %v3818
      %v3855 = vround.ne.pseudo %v3819
      %v3856 = vround.ne.pseudo %v3820
      %v3857 = vround.ne.pseudo %v3821
      %v3858 = vround.ne.pseudo %v3822
      %v3859 = vround.ne.pseudo %v3823
      %v3860 = vround.ne.pseudo %v3824
      %v3861 = vround.ne.pseudo %v3825
      %v3862 = vround.ne.pseudo %v3826
      %v3863 = vround.ne.pseudo %v3827
      %v3864 = vround.ne.pseudo %v3828
      %v3865 = vround.ne.pseudo %v3829
      %v3866 = vround.ne.pseudo %v3830
      %v3867 = vround.ne.pseudo %v3831
      %v3868 = vround.ne.pseudo %v3832
      %v3869 = vround.ne.pseudo %v3833
      %v3870 = vround.ne.pseudo %v3834
      %v3871 = vround.ne.pseudo %v3835
      %v3872 = vround.ne.pseudo %v3836
      %v3873 = vround.ne.pseudo %v3837
      %v3874 = vmax.f32 %v3838, -128.0
      %v3875 = vmax.f32 %v3839, -128.0
      %v3876 = vmax.f32 %v3840, -128.0
      %v3877 = vmax.f32 %v3841, -128.0
      %v3878 = vmax.f32 %v3842, -128.0
      %v3879 = vmax.f32 %v3843, -128.0
      %v3880 = vmax.f32 %v3844, -128.0
      %v3881 = vmax.f32 %v3845, -128.0
      %v3882 = vmax.f32 %v3846, -128.0
      %v3883 = vmax.f32 %v3847, -128.0
      %v3884 = vmax.f32 %v3848, -128.0
      %v3885 = vmax.f32 %v3849, -128.0
      %v3886 = vmax.f32 %v3850, -128.0
      %v3887 = vmax.f32 %v3851, -128.0
      %v3888 = vmax.f32 %v3852, -128.0
      %v3889 = vmax.f32 %v3853, -128.0
      %v3890 = vmax.f32 %v3854, -128.0
      %v3891 = vmax.f32 %v3855, -128.0
      %v3892 = vmax.f32 %v3856, -128.0
      %v3893 = vmax.f32 %v3857, -128.0
      %v3894 = vmax.f32 %v3858, -128.0
      %v3895 = vmax.f32 %v3859, -128.0
      %v3896 = vmax.f32 %v3860, -128.0
      %v3897 = vmax.f32 %v3861, -128.0
      %v3898 = vmax.f32 %v3862, -128.0
      %v3899 = vmax.f32 %v3863, -128.0
      %v3900 = vmax.f32 %v3864, -128.0
      %v3901 = vmax.f32 %v3865, -128.0
      %v3902 = vmax.f32 %v3866, -128.0
      %v3903 = vmax.f32 %v3867, -128.0
      %v3904 = vmax.f32 %v3868, -128.0
      %v3905 = vmax.f32 %v3869, -128.0
      %v3906 = vmax.f32 %v3870, -128.0
      %v3907 = vmax.f32 %v3871, -128.0
      %v3908 = vmax.f32 %v3872, -128.0
      %v3909 = vmax.f32 %v3873, -128.0
      %v3910 = vmin.f32 %v3874, 127.0
      %v3911 = vmin.f32 %v3875, 127.0
      %v3912 = vmin.f32 %v3876, 127.0
      %v3913 = vmin.f32 %v3877, 127.0
      %v3914 = vmin.f32 %v3878, 127.0
      %v3915 = vmin.f32 %v3879, 127.0
      %v3916 = vmin.f32 %v3880, 127.0
      %v3917 = vmin.f32 %v3881, 127.0
      %v3918 = vmin.f32 %v3882, 127.0
      %v3919 = vmin.f32 %v3883, 127.0
      %v3920 = vmin.f32 %v3884, 127.0
      %v3921 = vmin.f32 %v3885, 127.0
      %v3922 = vmin.f32 %v3886, 127.0
      %v3923 = vmin.f32 %v3887, 127.0
      %v3924 = vmin.f32 %v3888, 127.0
      %v3925 = vmin.f32 %v3889, 127.0
      %v3926 = vmin.f32 %v3890, 127.0
      %v3927 = vmin.f32 %v3891, 127.0
      %v3928 = vmin.f32 %v3892, 127.0
      %v3929 = vmin.f32 %v3893, 127.0
      %v3930 = vmin.f32 %v3894, 127.0
      %v3931 = vmin.f32 %v3895, 127.0
      %v3932 = vmin.f32 %v3896, 127.0
      %v3933 = vmin.f32 %v3897, 127.0
      %v3934 = vmin.f32 %v3898, 127.0
      %v3935 = vmin.f32 %v3899, 127.0
      %v3936 = vmin.f32 %v3900, 127.0
      %v3937 = vmin.f32 %v3901, 127.0
      %v3938 = vmin.f32 %v3902, 127.0
      %v3939 = vmin.f32 %v3903, 127.0
      %v3940 = vmin.f32 %v3904, 127.0
      %v3941 = vmin.f32 %v3905, 127.0
      %v3942 = vmin.f32 %v3906, 127.0
      %v3943 = vmin.f32 %v3907, 127.0
      %v3944 = vmin.f32 %v3908, 127.0
      %v3945 = vmin.f32 %v3909, 127.0
      %v3946 = vpack.c.bf16 %v3911, %v3910
      %v3947 = vpack.c.bf16 %v3913, %v3912
      %v3948 = vpack.c.bf16 %v3915, %v3914
      %v3949 = vpack.c.bf16 %v3917, %v3916
      %v3950 = vpack.c.bf16 %v3919, %v3918
      %v3951 = vpack.c.bf16 %v3921, %v3920
      %v3952 = vpack.c.bf16 %v3923, %v3922
      %v3953 = vpack.c.bf16 %v3925, %v3924
      %v3954 = vpack.c.bf16 %v3927, %v3926
      %v3955 = vpack.c.bf16 %v3929, %v3928
      %v3956 = vpack.c.bf16 %v3931, %v3930
      %v3957 = vpack.c.bf16 %v3933, %v3932
      %v3958 = vpack.c.bf16 %v3935, %v3934
      %v3959 = vpack.c.bf16 %v3937, %v3936
      %v3960 = vpack.c.bf16 %v3939, %v3938
      %v3961 = vpack.c.bf16 %v3941, %v3940
      %v3962 = vpack.c.bf16 %v3943, %v3942
      %v3963 = vpack.c.bf16 %v3945, %v3944
      %v3982 = vunpack.c.l.b16 %v3946
      %v3983 = vunpack.c.h.b16 %v3946
      %v3984 = vunpack.c.l.b16 %v3947
      %v3985 = vunpack.c.h.b16 %v3947
      %v3986 = vunpack.c.l.b16 %v3948
      %v3987 = vunpack.c.h.b16 %v3948
      %v3988 = vunpack.c.l.b16 %v3949
      %v3989 = vunpack.c.h.b16 %v3949
      %v3990 = vunpack.c.l.b16 %v3950
      %v3991 = vunpack.c.h.b16 %v3950
      %v3992 = vunpack.c.l.b16 %v3951
      %v3993 = vunpack.c.h.b16 %v3951
      %v3994 = vunpack.c.l.b16 %v3952
      %v3995 = vunpack.c.h.b16 %v3952
      %v3996 = vunpack.c.l.b16 %v3953
      %v3997 = vunpack.c.h.b16 %v3953
      %v3998 = vunpack.c.l.b16 %v3954
      %v3999 = vunpack.c.h.b16 %v3954
      %v4000 = vunpack.c.l.b16 %v3955
      %v4001 = vunpack.c.h.b16 %v3955
      %v4002 = vunpack.c.l.b16 %v3956
      %v4003 = vunpack.c.h.b16 %v3956
      %v4004 = vunpack.c.l.b16 %v3957
      %v4005 = vunpack.c.h.b16 %v3957
      %v4006 = vunpack.c.l.b16 %v3958
      %v4007 = vunpack.c.h.b16 %v3958
      %v4008 = vunpack.c.l.b16 %v3959
      %v4009 = vunpack.c.h.b16 %v3959
      %v4010 = vunpack.c.l.b16 %v3960
      %v4011 = vunpack.c.h.b16 %v3960
      %v4012 = vunpack.c.l.b16 %v3961
      %v4013 = vunpack.c.h.b16 %v3961
      %v4014 = vunpack.c.l.b16 %v3962
      %v4015 = vunpack.c.h.b16 %v3962
      %v4016 = vunpack.c.l.b16 %v3963
      %v4017 = vunpack.c.h.b16 %v3963
      %v4018 = vpack.c.b16 %v3982, %v3982
      %v4019 = vpack.c.b16 %v3983, %v3983
      %v4020 = vpack.c.b16 %v3984, %v3984
      %v4021 = vpack.c.b16 %v3985, %v3985
      %v4022 = vpack.c.b16 %v3986, %v3986
      %v4023 = vpack.c.b16 %v3987, %v3987
      %v4024 = vpack.c.b16 %v3988, %v3988
      %v4025 = vpack.c.b16 %v3989, %v3989
      %v4026 = vpack.c.b16 %v3990, %v3990
      %v4027 = vpack.c.b16 %v3991, %v3991
      %v4028 = vpack.c.b16 %v3992, %v3992
      %v4029 = vpack.c.b16 %v3993, %v3993
      %v4030 = vpack.c.b16 %v3994, %v3994
      %v4031 = vpack.c.b16 %v3995, %v3995
      %v4032 = vpack.c.b16 %v3996, %v3996
      %v4033 = vpack.c.b16 %v3997, %v3997
      %v4034 = vpack.c.b16 %v3998, %v3998
      %v4035 = vpack.c.b16 %v3999, %v3999
      %v4036 = vpack.c.b16 %v4000, %v4000
      %v4037 = vpack.c.b16 %v4001, %v4001
      %v4038 = vpack.c.b16 %v4002, %v4002
      %v4039 = vpack.c.b16 %v4003, %v4003
      %v4040 = vpack.c.b16 %v4004, %v4004
      %v4041 = vpack.c.b16 %v4005, %v4005
      %v4042 = vpack.c.b16 %v4006, %v4006
      %v4043 = vpack.c.b16 %v4007, %v4007
      %v4044 = vpack.c.b16 %v4008, %v4008
      %v4045 = vpack.c.b16 %v4009, %v4009
      %v4046 = vpack.c.b16 %v4010, %v4010
      %v4047 = vpack.c.b16 %v4011, %v4011
      %v4048 = vpack.c.b16 %v4012, %v4012
      %v4049 = vpack.c.b16 %v4013, %v4013
      %v4050 = vpack.c.b16 %v4014, %v4014
      %v4051 = vpack.c.b16 %v4015, %v4015
      %v4052 = vpack.c.b16 %v4016, %v4016
      %v4053 = vpack.c.b16 %v4017, %v4017
      %4090 = vst [vmem:[%s231] sm:$0xf] %v4018
      %4091 = vst [vmem:[%s231 + $0x4] sm:$0xf] %v4019
      %4092 = vst [vmem:[%s231 + $0x8] sm:$0xf] %v4020
      %4093 = vst [vmem:[%s231 + $0xc] sm:$0xf] %v4021
      %4094 = vst [vmem:[%s231 + $0x10] sm:$0xf] %v4022
      %4095 = vst [vmem:[%s231 + $0x14] sm:$0xf] %v4023
      %4096 = vst [vmem:[%s231 + $0x18] sm:$0xf] %v4024
      %4097 = vst [vmem:[%s231 + $0x1c] sm:$0xf] %v4025
      %4098 = vst [vmem:[%s231 + $0x20] sm:$0xf] %v4026
      %4099 = vst [vmem:[%s231 + $0x24] sm:$0xf] %v4027
      %4100 = vst [vmem:[%s231 + $0x28] sm:$0xf] %v4028
      %4101 = vst [vmem:[%s231 + $0x2c] sm:$0xf] %v4029
      %4102 = vst [vmem:[%s231 + $0x30] sm:$0xf] %v4030
      %4103 = vst [vmem:[%s231 + $0x34] sm:$0xf] %v4031
      %4104 = vst [vmem:[%s231 + $0x38] sm:$0xf] %v4032
      %4105 = vst [vmem:[%s231 + $0x3c] sm:$0xf] %v4033
      %4106 = vst [vmem:[%s231 + $0x40] sm:$0xf] %v4034
      %4107 = vst [vmem:[%s231 + $0x44] sm:$0xf] %v4035
      %4108 = vst [vmem:[%s231 + $0x48] sm:$0xf] %v4036
      %4109 = vst [vmem:[%s231 + $0x4c] sm:$0xf] %v4037
      %4110 = vst [vmem:[%s231 + $0x50] sm:$0xf] %v4038
      %4111 = vst [vmem:[%s231 + $0x54] sm:$0xf] %v4039
      %4112 = vst [vmem:[%s231 + $0x58] sm:$0xf] %v4040
      %4113 = vst [vmem:[%s231 + $0x5c] sm:$0xf] %v4041
      %4114 = vst [vmem:[%s231 + $0x60] sm:$0xf] %v4042
      %4115 = vst [vmem:[%s231 + $0x64] sm:$0xf] %v4043
      %4116 = vst [vmem:[%s231 + $0x68] sm:$0xf] %v4044
      %4117 = vst [vmem:[%s231 + $0x6c] sm:$0xf] %v4045
      %4118 = vst [vmem:[%s231 + $0x70] sm:$0xf] %v4046
      %4119 = vst [vmem:[%s231 + $0x74] sm:$0xf] %v4047
      %4120 = vst [vmem:[%s231 + $0x78] sm:$0xf] %v4048
      %4121 = vst [vmem:[%s231 + $0x7c] sm:$0xf] %v4049
      %4122 = vst [vmem:[%s231 + $0x80] sm:$0xf] %v4050
      %4123 = vst [vmem:[%s231 + $0x84] sm:$0xf] %v4051
      %4124 = vst [vmem:[%s231 + $0x88] sm:$0xf] %v4052
      %4125 = vst [vmem:[%s231 + $0x8c] sm:$0x7] %v4053
      %v4126 = vld [vmem:[%s3] sm:$0xff]
      %v4127 = vld [vmem:[%s3 + $0x8] sm:$0xff]
      %v4128 = vld [vmem:[%s3 + $0x10] sm:$0xff]
      %v4129 = vld [vmem:[%s3 + $0x18] sm:$0xff]
      %v4130 = vld [vmem:[%s3 + $0x20] sm:$0xff]
      %v4131 = vld [vmem:[%s3 + $0x28] sm:$0xff]
      %v4132 = vld [vmem:[%s3 + $0x30] sm:$0xff]
      %v4133 = vld [vmem:[%s3 + $0x38] sm:$0xff]
      %v4134 = vld [vmem:[%s3 + $0x40] sm:$0xff]
      %v4135 = vld [vmem:[%s3 + $0x48] sm:$0xff]
      %v4136 = vld [vmem:[%s3 + $0x50] sm:$0xff]
      %v4137 = vld [vmem:[%s3 + $0x58] sm:$0xff]
      %v4138 = vld [vmem:[%s3 + $0x60] sm:$0xff]
      %v4139 = vld [vmem:[%s3 + $0x68] sm:$0xff]
      %v4140 = vld [vmem:[%s3 + $0x70] sm:$0xff]
      %v4141 = vld [vmem:[%s3 + $0x78] sm:$0xff]
      %v4142 = vld [vmem:[%s3 + $0x80] sm:$0xff]
      %v4143 = vld [vmem:[%s3 + $0x88] sm:$0xff]
      %v4144 = vld [vmem:[%s3 + $0x90] sm:$0xff]
      %v4145 = vld [vmem:[%s3 + $0x98] sm:$0xff]
      %v4146 = vld [vmem:[%s3 + $0xa0] sm:$0xff]
      %v4147 = vld [vmem:[%s3 + $0xa8] sm:$0xff]
      %v4148 = vld [vmem:[%s3 + $0xb0] sm:$0xff]
      %v4149 = vld [vmem:[%s3 + $0xb8] sm:$0xff]
      %v4150 = vld [vmem:[%s3 + $0xc0] sm:$0xff]
      %v4151 = vld [vmem:[%s3 + $0xc8] sm:$0xff]
      %v4152 = vld [vmem:[%s3 + $0xd0] sm:$0xff]
      %v4153 = vld [vmem:[%s3 + $0xd8] sm:$0xff]
      %v4154 = vld [vmem:[%s3 + $0xe0] sm:$0xff]
      %v4155 = vld [vmem:[%s3 + $0xe8] sm:$0xff]
      %v4156 = vld [vmem:[%s3 + $0xf0] sm:$0xff]
      %v4157 = vld [vmem:[%s3 + $0xf8] sm:$0xff]
      %v4158 = vld [vmem:[%s3 + $0x100] sm:$0xff]
      %v4159 = vld [vmem:[%s3 + $0x108] sm:$0xff]
      %v4160 = vld [vmem:[%s3 + $0x110] sm:$0xff]
      %v4161 = vld [vmem:[%s3 + $0x118] sm:$0x3f]
      %4163 = vset.pattern.permute.xlu0 0
      %4164 = vperm.xlu0 %4163, %v4126
      %v4165 = vpop.permute.xlu0 %4164
      %4168 = vset.pattern.permute.xlu0 0
      %4169 = vperm.xlu0 %4168, %v4127
      %v4170 = vpop.permute.xlu0 %4169
      %4173 = vset.pattern.permute.xlu0 0
      %4174 = vperm.xlu0 %4173, %v4128
      %v4175 = vpop.permute.xlu0 %4174
      %4178 = vset.pattern.permute.xlu0 0
      %4179 = vperm.xlu0 %4178, %v4129
      %v4180 = vpop.permute.xlu0 %4179
      %4183 = vset.pattern.permute.xlu0 0
      %4184 = vperm.xlu0 %4183, %v4130
      %v4185 = vpop.permute.xlu0 %4184
      %4188 = vset.pattern.permute.xlu0 0
      %4189 = vperm.xlu0 %4188, %v4131
      %v4190 = vpop.permute.xlu0 %4189
      %4193 = vset.pattern.permute.xlu0 0
      %4194 = vperm.xlu0 %4193, %v4132
      %v4195 = vpop.permute.xlu0 %4194
      %4198 = vset.pattern.permute.xlu0 0
      %4199 = vperm.xlu0 %4198, %v4133
      %v4200 = vpop.permute.xlu0 %4199
      %4203 = vset.pattern.permute.xlu0 0
      %4204 = vperm.xlu0 %4203, %v4134
      %v4205 = vpop.permute.xlu0 %4204
      %4208 = vset.pattern.permute.xlu0 0
      %4209 = vperm.xlu0 %4208, %v4135
      %v4210 = vpop.permute.xlu0 %4209
      %4213 = vset.pattern.permute.xlu0 0
      %4214 = vperm.xlu0 %4213, %v4136
      %v4215 = vpop.permute.xlu0 %4214
      %4218 = vset.pattern.permute.xlu0 0
      %4219 = vperm.xlu0 %4218, %v4137
      %v4220 = vpop.permute.xlu0 %4219
      %4223 = vset.pattern.permute.xlu0 0
      %4224 = vperm.xlu0 %4223, %v4138
      %v4225 = vpop.permute.xlu0 %4224
      %4228 = vset.pattern.permute.xlu0 0
      %4229 = vperm.xlu0 %4228, %v4139
      %v4230 = vpop.permute.xlu0 %4229
      %4233 = vset.pattern.permute.xlu0 0
      %4234 = vperm.xlu0 %4233, %v4140
      %v4235 = vpop.permute.xlu0 %4234
      %4238 = vset.pattern.permute.xlu0 0
      %4239 = vperm.xlu0 %4238, %v4141
      %v4240 = vpop.permute.xlu0 %4239
      %4243 = vset.pattern.permute.xlu0 0
      %4244 = vperm.xlu0 %4243, %v4142
      %v4245 = vpop.permute.xlu0 %4244
      %4248 = vset.pattern.permute.xlu0 0
      %4249 = vperm.xlu0 %4248, %v4143
      %v4250 = vpop.permute.xlu0 %4249
      %4253 = vset.pattern.permute.xlu0 0
      %4254 = vperm.xlu0 %4253, %v4144
      %v4255 = vpop.permute.xlu0 %4254
      %4258 = vset.pattern.permute.xlu0 0
      %4259 = vperm.xlu0 %4258, %v4145
      %v4260 = vpop.permute.xlu0 %4259
      %4263 = vset.pattern.permute.xlu0 0
      %4264 = vperm.xlu0 %4263, %v4146
      %v4265 = vpop.permute.xlu0 %4264
      %4268 = vset.pattern.permute.xlu0 0
      %4269 = vperm.xlu0 %4268, %v4147
      %v4270 = vpop.permute.xlu0 %4269
      %4273 = vset.pattern.permute.xlu0 0
      %4274 = vperm.xlu0 %4273, %v4148
      %v4275 = vpop.permute.xlu0 %4274
      %4278 = vset.pattern.permute.xlu0 0
      %4279 = vperm.xlu0 %4278, %v4149
      %v4280 = vpop.permute.xlu0 %4279
      %4283 = vset.pattern.permute.xlu0 0
      %4284 = vperm.xlu0 %4283, %v4150
      %v4285 = vpop.permute.xlu0 %4284
      %4288 = vset.pattern.permute.xlu0 0
      %4289 = vperm.xlu0 %4288, %v4151
      %v4290 = vpop.permute.xlu0 %4289
      %4293 = vset.pattern.permute.xlu0 0
      %4294 = vperm.xlu0 %4293, %v4152
      %v4295 = vpop.permute.xlu0 %4294
      %4298 = vset.pattern.permute.xlu0 0
      %4299 = vperm.xlu0 %4298, %v4153
      %v4300 = vpop.permute.xlu0 %4299
      %4303 = vset.pattern.permute.xlu0 0
      %4304 = vperm.xlu0 %4303, %v4154
      %v4305 = vpop.permute.xlu0 %4304
      %4308 = vset.pattern.permute.xlu0 0
      %4309 = vperm.xlu0 %4308, %v4155
      %v4310 = vpop.permute.xlu0 %4309
      %4313 = vset.pattern.permute.xlu0 0
      %4314 = vperm.xlu0 %4313, %v4156
      %v4315 = vpop.permute.xlu0 %4314
      %4318 = vset.pattern.permute.xlu0 0
      %4319 = vperm.xlu0 %4318, %v4157
      %v4320 = vpop.permute.xlu0 %4319
      %4323 = vset.pattern.permute.xlu0 0
      %4324 = vperm.xlu0 %4323, %v4158
      %v4325 = vpop.permute.xlu0 %4324
      %4328 = vset.pattern.permute.xlu0 0
      %4329 = vperm.xlu0 %4328, %v4159
      %v4330 = vpop.permute.xlu0 %4329
      %4333 = vset.pattern.permute.xlu0 0
      %4334 = vperm.xlu0 %4333, %v4160
      %v4335 = vpop.permute.xlu0 %4334
      %4338 = vset.pattern.permute.xlu0 0
      %4339 = vperm.xlu0 %4338, %v4161
      %v4340 = vpop.permute.xlu0 %4339
      %v4342 = vmul.f32 %v3910, %v4165
      %v4343 = vmul.f32 %v3911, %v4170
      %v4344 = vmul.f32 %v3912, %v4175
      %v4345 = vmul.f32 %v3913, %v4180
      %v4346 = vmul.f32 %v3914, %v4185
      %v4347 = vmul.f32 %v3915, %v4190
      %v4348 = vmul.f32 %v3916, %v4195
      %v4349 = vmul.f32 %v3917, %v4200
      %v4350 = vmul.f32 %v3918, %v4205
      %v4351 = vmul.f32 %v3919, %v4210
      %v4352 = vmul.f32 %v3920, %v4215
      %v4353 = vmul.f32 %v3921, %v4220
      %v4354 = vmul.f32 %v3922, %v4225
      %v4355 = vmul.f32 %v3923, %v4230
      %v4356 = vmul.f32 %v3924, %v4235
      %v4357 = vmul.f32 %v3925, %v4240
      %v4358 = vmul.f32 %v3926, %v4245
      %v4359 = vmul.f32 %v3927, %v4250
      %v4360 = vmul.f32 %v3928, %v4255
      %v4361 = vmul.f32 %v3929, %v4260
      %v4362 = vmul.f32 %v3930, %v4265
      %v4363 = vmul.f32 %v3931, %v4270
      %v4364 = vmul.f32 %v3932, %v4275
      %v4365 = vmul.f32 %v3933, %v4280
      %v4366 = vmul.f32 %v3934, %v4285
      %v4367 = vmul.f32 %v3935, %v4290
      %v4368 = vmul.f32 %v3936, %v4295
      %v4369 = vmul.f32 %v3937, %v4300
      %v4370 = vmul.f32 %v3938, %v4305
      %v4371 = vmul.f32 %v3939, %v4310
      %v4372 = vmul.f32 %v3940, %v4315
      %v4373 = vmul.f32 %v3941, %v4320
      %v4374 = vmul.f32 %v3942, %v4325
      %v4375 = vmul.f32 %v3943, %v4330
      %v4376 = vmul.f32 %v3944, %v4335
      %v4377 = vmul.f32 %v3945, %v4340
      %v4378 = vadd.f32 %v4342, %v4343
      %v4379 = vadd.f32 %v4378, %v4344
      %v4380 = vadd.f32 %v4379, %v4345
      %v4381 = vadd.f32 %v4380, %v4346
      %v4382 = vadd.f32 %v4381, %v4347
      %v4383 = vadd.f32 %v4382, %v4348
      %v4384 = vadd.f32 %v4383, %v4349
      %v4385 = vadd.f32 %v4384, %v4350
      %v4386 = vadd.f32 %v4385, %v4351
      %v4387 = vadd.f32 %v4386, %v4352
      %v4388 = vadd.f32 %v4387, %v4353
      %v4389 = vadd.f32 %v4388, %v4354
      %v4390 = vadd.f32 %v4389, %v4355
      %v4391 = vadd.f32 %v4390, %v4356
      %v4392 = vadd.f32 %v4391, %v4357
      %v4393 = vadd.f32 %v4392, %v4358
      %v4394 = vadd.f32 %v4393, %v4359
      %v4395 = vadd.f32 %v4394, %v4360
      %v4396 = vadd.f32 %v4395, %v4361
      %v4397 = vadd.f32 %v4396, %v4362
      %v4398 = vadd.f32 %v4397, %v4363
      %v4399 = vadd.f32 %v4398, %v4364
      %v4400 = vadd.f32 %v4399, %v4365
      %v4401 = vadd.f32 %v4400, %v4366
      %v4402 = vadd.f32 %v4401, %v4367
      %v4403 = vadd.f32 %v4402, %v4368
      %v4404 = vadd.f32 %v4403, %v4369
      %v4405 = vadd.f32 %v4404, %v4370
      %v4406 = vadd.f32 %v4405, %v4371
      %v4407 = vadd.f32 %v4406, %v4372
      %v4408 = vadd.f32 %v4407, %v4373
      %v4409 = vadd.f32 %v4408, %v4374
      %v4410 = vadd.f32 %v4409, %v4375
      %v4411 = vadd.f32 %v4410, %v4376
      %vm4412 = vcmask 1045504
      %v4413 = vsel %vm4412, %v4377, 0.0
      %v4414 = vadd.f32 %v4411, %v4413
      %v4415 = vrot.slane %v4414, 4
      %v4416 = vadd.f32 %v4414, %v4415
      %v4417 = vrot.slane %v4416, 2
      %v4418 = vadd.f32 %v4416, %v4417
      %v4419 = vrot.slane %v4418, 1
      %v4420 = vadd.f32 %v4418, %v4419
      %v4421 = vmul.f32 %v4342, %v4342
      %v4422 = vmul.f32 %v4343, %v4343
      %v4423 = vmul.f32 %v4344, %v4344
      %v4424 = vmul.f32 %v4345, %v4345
      %v4425 = vmul.f32 %v4346, %v4346
      %v4426 = vmul.f32 %v4347, %v4347
      %v4427 = vmul.f32 %v4348, %v4348
      %v4428 = vmul.f32 %v4349, %v4349
      %v4429 = vmul.f32 %v4350, %v4350
      %v4430 = vmul.f32 %v4351, %v4351
      %v4431 = vmul.f32 %v4352, %v4352
      %v4432 = vmul.f32 %v4353, %v4353
      %v4433 = vmul.f32 %v4354, %v4354
      %v4434 = vmul.f32 %v4355, %v4355
      %v4435 = vmul.f32 %v4356, %v4356
      %v4436 = vmul.f32 %v4357, %v4357
      %v4437 = vmul.f32 %v4358, %v4358
      %v4438 = vmul.f32 %v4359, %v4359
      %v4439 = vmul.f32 %v4360, %v4360
      %v4440 = vmul.f32 %v4361, %v4361
      %v4441 = vmul.f32 %v4362, %v4362
      %v4442 = vmul.f32 %v4363, %v4363
      %v4443 = vmul.f32 %v4364, %v4364
      %v4444 = vmul.f32 %v4365, %v4365
      %v4445 = vmul.f32 %v4366, %v4366
      %v4446 = vmul.f32 %v4367, %v4367
      %v4447 = vmul.f32 %v4368, %v4368
      %v4448 = vmul.f32 %v4369, %v4369
      %v4449 = vmul.f32 %v4370, %v4370
      %v4450 = vmul.f32 %v4371, %v4371
      %v4451 = vmul.f32 %v4372, %v4372
      %v4452 = vmul.f32 %v4373, %v4373
      %v4453 = vmul.f32 %v4374, %v4374
      %v4454 = vmul.f32 %v4375, %v4375
      %v4455 = vmul.f32 %v4376, %v4376
      %v4456 = vmul.f32 %v4377, %v4377
      %v4457 = vadd.f32 %v4421, %v4422
      %v4458 = vadd.f32 %v4457, %v4423
      %v4459 = vadd.f32 %v4458, %v4424
      %v4460 = vadd.f32 %v4459, %v4425
      %v4461 = vadd.f32 %v4460, %v4426
      %v4462 = vadd.f32 %v4461, %v4427
      %v4463 = vadd.f32 %v4462, %v4428
      %v4464 = vadd.f32 %v4463, %v4429
      %v4465 = vadd.f32 %v4464, %v4430
      %v4466 = vadd.f32 %v4465, %v4431
      %v4467 = vadd.f32 %v4466, %v4432
      %v4468 = vadd.f32 %v4467, %v4433
      %v4469 = vadd.f32 %v4468, %v4434
      %v4470 = vadd.f32 %v4469, %v4435
      %v4471 = vadd.f32 %v4470, %v4436
      %v4472 = vadd.f32 %v4471, %v4437
      %v4473 = vadd.f32 %v4472, %v4438
      %v4474 = vadd.f32 %v4473, %v4439
      %v4475 = vadd.f32 %v4474, %v4440
      %v4476 = vadd.f32 %v4475, %v4441
      %v4477 = vadd.f32 %v4476, %v4442
      %v4478 = vadd.f32 %v4477, %v4443
      %v4479 = vadd.f32 %v4478, %v4444
      %v4480 = vadd.f32 %v4479, %v4445
      %v4481 = vadd.f32 %v4480, %v4446
      %v4482 = vadd.f32 %v4481, %v4447
      %v4483 = vadd.f32 %v4482, %v4448
      %v4484 = vadd.f32 %v4483, %v4449
      %v4485 = vadd.f32 %v4484, %v4450
      %v4486 = vadd.f32 %v4485, %v4451
      %v4487 = vadd.f32 %v4486, %v4452
      %v4488 = vadd.f32 %v4487, %v4453
      %v4489 = vadd.f32 %v4488, %v4454
      %v4490 = vadd.f32 %v4489, %v4455
      %v4491 = vsel %vm4412, %v4456, 0.0
      %v4492 = vadd.f32 %v4490, %v4491
      %v4493 = vrot.slane %v4492, 4
      %v4494 = vadd.f32 %v4492, %v4493
      %v4495 = vrot.slane %v4494, 2
      %v4496 = vadd.f32 %v4494, %v4495
      %v4497 = vrot.slane %v4496, 1
      %v4498 = vadd.f32 %v4496, %v4497
      %vm4499 = vcmask 1040384
      %v4500 = vsel %vm4499, %v4420, %v4498
      %4501 = vst [vmem:[%s235] sm:$0x3] %v4500
      %p4502 = scmp.lt.s32.totalorder %s17, 1
      %s4503 = scalar_select %p4502, %s17, 1
      %s4504 = smul.addr %s4503, 36
      %s4505 = smul.addr %s4504, 4
      %s4506 = scalar_lea.vmem %s4, %s4505
      %p4507 = scmp.lt.s32.totalorder %s17, 1
      %s4508 = scalar_select %p4507, %s17, 1
      %s4509 = smul.addr %s4508, 2
      %s4510 = scalar_lea.vmem %s5, %s4509
      // Predicated region
      $region37: #{qconv_bn_relu.1} parent=35 // pred_check
        %p4511 = pneg %p124
      $region38: #{qconv_bn_relu.1} parent=35 // pred_check_branch
        %4513 = sbr.rel (%p4511) target = $region40
      $region39: #{qconv_bn_relu.1} parent=35 // pred_region
        _
      $region40: #{qconv_bn_relu.1} parent=35 // pred_fallthru
        _
      // Predicated region
      $region41: #{qconv_bn_relu.1} parent=35 // pred_check
        %p4514 = pneg %p150
      $region42: #{qconv_bn_relu.1} parent=35 // pred_check_branch
        %4516 = sbr.rel (%p4514) target = $region44
      $region43: #{qconv_bn_relu.1} parent=35 // pred_region
        _
      $region44: #{qconv_bn_relu.1} parent=35 // pred_fallthru
        _
    $region36: #{qconv_bn_relu.1} parent=5 // pred_fallthru
      _
    %p4517 = scmp.le.s32.totalorder 2, %s12
    // Predicated region
    $region45: #{qconv_bn_relu.1} parent=5 // pred_check
      %p4518 = pneg %p4517
    $region46: #{qconv_bn_relu.1} parent=5 // pred_check_branch
      %4520 = sbr.rel (%p4518) target = $region48
    $region47: #{qconv_bn_relu.1} parent=5 // pred_region
      %s4521 = ssub.s32 %s12, 2
      // Predicated region
      $region49: #{qconv_bn_relu.1} parent=47 // pred_check
        %p4522 = pneg %p130
      $region50: #{qconv_bn_relu.1} parent=47 // pred_check_branch
        %4524 = sbr.rel (%p4522) target = $region52
      $region51: #{qconv_bn_relu.1} parent=47 // pred_region
        %p4525 = scmp.lt.s32.totalorder %s18, 1
        %s4526 = scalar_select %p4525, %s18, 1
        %s4527 = smul.addr %s4526, 36
        %s4528 = smul.addr %s4527, 4
        %s4529 = scalar_lea.vmem %s4, %s4528
      $region52: #{qconv_bn_relu.1} parent=47 // pred_fallthru
        _
      // Predicated region
      $region53: #{qconv_bn_relu.1} parent=47 // pred_check
        %p4530 = pneg %p156
      $region54: #{qconv_bn_relu.1} parent=47 // pred_check_branch
        %4532 = sbr.rel (%p4530) target = $region56
      $region55: #{qconv_bn_relu.1} parent=47 // pred_region
        %p4533 = scmp.lt.s32.totalorder %s18, 1
        %s4534 = scalar_select %p4533, %s18, 1
        %s4535 = smul.addr %s4534, 2
        %s4536 = scalar_lea.vmem %s5, %s4535
      $region56: #{qconv_bn_relu.1} parent=47 // pred_fallthru
        _
    $region48: #{qconv_bn_relu.1} parent=5 // pred_fallthru
      _
  $region6: #{qconv_bn_relu.1} parent=0 // loop_footer
    %s16 = sadd.s32 1, %s12
  $region7: #{qconv_bn_relu.1} parent=0 // loop_footer_branch
    %11 = sbr.rel target = $region3
  $region8: #{qconv_bn_relu.1} parent=0 // loop_exit
    _

</llo_original>
